<compile_context>
chip_gen: v5e
topology: v5e:2x2
jax: 0.10.0
libtpu: 0.0.40
codegen_flags: <defaults>
</compile_context>

<pallas_src>
import numpy as np
import jax
import jax.numpy as jnp
from jax import lax
from jax.experimental import pallas as pl
from jax.experimental.pallas import tpu as pltpu

# ----------------------------- hyper-parameters ------------------------------
N_NODES   = 16          # nodes in the (single) CSL-like graph
HIDDEN    = 32          # hidden_dim
OUT_DIM   = 32          # out_dim (== hidden_dim, standard config)
N_HEADS   = 4           # n_heads  (head_dim = 8)
N_LAYERS  = 2           # L
LPE_DIM   = 8           # lpe_dim
LPE_HEADS = 2           # lpe_n_heads
LPE_LAYERS = 1          # lpe_layers (single TransformerEncoder layer)
LPE_FFN   = 32          # TODO(synk): nn.TransformerEncoderLayer default dim_feedforward=2048; shrunk for small synthetic shapes
N_EIG     = 8           # m = number of eigenvectors
N_CLASSES = 10          # CSL has 10 classes

EMB_DIM   = HIDDEN - LPE_DIM      # 24
LPE_HD    = LPE_DIM // LPE_HEADS  # 4
GT_HD     = HIDDEN // N_HEADS     # 8
N_TOK     = N_NODES * N_EIG       # 128 flattened eigen tokens
SLAB_W    = 128                   # lane width of both parameter slabs


def _round8(x):
    return (x + 7) // 8 * 8


# ------------------------- parameter slab layouts -----------------------------
# Weight slab: each matmul weight occupies rows [off, off+rows) (off multiple
# of 8) and columns [0, cols) of a single f32 [W_ROWS, 128] array.
W_SPECS = [
    ('lpe_A',   (2, LPE_DIM)),            # Linear_A: (eigvec, eigval) -> lpe_dim
    ('lpe_in',  (LPE_DIM, 3 * LPE_DIM)),  # MHA in-proj, cols = [q | k | v], head-major
    ('lpe_out', (LPE_DIM, LPE_DIM)),      # MHA out-proj
    ('lpe_f1',  (LPE_DIM, LPE_FFN)),      # encoder FFN
    ('lpe_f2',  (LPE_FFN, LPE_DIM)),
]
for _l in range(N_LAYERS):
    W_SPECS += [
        (f'gt{_l}_qkv', (HIDDEN, 3 * HIDDEN)),   # cols = [Q | K | V], head-major inside
        (f'gt{_l}_o',   (HIDDEN, HIDDEN)),
        (f'gt{_l}_f1',  (HIDDEN, 2 * HIDDEN)),
        (f'gt{_l}_f2',  (2 * HIDDEN, HIDDEN)),
    ]
W_SPECS += [
    ('mlp_0', (OUT_DIM, OUT_DIM // 2)),
    ('mlp_1', (OUT_DIM // 2, OUT_DIM // 4)),
    ('mlp_2', (OUT_DIM // 4, N_CLASSES)),
]

W_OFF = {}
_r = 0
for _name, _shape in W_SPECS:
    W_OFF[_name] = (_r, _shape)
    _r += _round8(_shape[0])
W_ROWS = _round8(_r)

# Bias/LN slab: one parameter vector per row, starting at lane 0.
B_SPECS = [
    ('emb',       EMB_DIM),       # nn.Embedding(1, hidden - lpe_dim) single row
    ('lpe_A_b',   LPE_DIM),
    ('lpe_in_b',  3 * LPE_DIM),
    ('lpe_out_b', LPE_DIM),
    ('lpe_ln1_g', LPE_DIM),
    ('lpe_ln1_b', LPE_DIM),
    ('lpe_f1_b',  LPE_FFN),
    ('lpe_f2_b',  LPE_DIM),
    ('lpe_ln2_g', LPE_DIM),
    ('lpe_ln2_b', LPE_DIM),
]
for _l in range(N_LAYERS):
    B_SPECS += [
        (f'gt{_l}_Ob',    HIDDEN),
        (f'gt{_l}_ln1_g', HIDDEN),
        (f'gt{_l}_ln1_b', HIDDEN),
        (f'gt{_l}_f1_b',  2 * HIDDEN),
        (f'gt{_l}_f2_b',  HIDDEN),
        (f'gt{_l}_ln2_g', HIDDEN),
        (f'gt{_l}_ln2_b', HIDDEN),
    ]
B_SPECS += [('mlp_b0', OUT_DIM // 2), ('mlp_b1', OUT_DIM // 4), ('mlp_b2', N_CLASSES)]
B_OFF = {name: (i, w) for i, (name, w) in enumerate(B_SPECS)}
B_ROWS = _round8(len(B_SPECS))


# --------------------------------- helpers -----------------------------------
def _layer_norm(x, g, b, eps=1e-5):
    mu = jnp.mean(x, axis=-1, keepdims=True)
    var = jnp.mean((x - mu) ** 2, axis=-1, keepdims=True)
    return (x - mu) * lax.rsqrt(var + eps) * g + b


# --------------------------- fused forward kernel ----------------------------
def fused_forward_kernel(adj_ref, eig_ref, w_ref, b_ref, out_ref):
    f32 = jnp.float32

    def W(name):                          # static [rows, cols] weight view
        r0, (rows, cols) = W_OFF[name][0], W_OFF[name][1]
        return w_ref[r0:r0 + rows, 0:cols]

    def B(name):                          # static [1, width] bias/LN row
        r, width = B_OFF[name]
        return b_ref[r:r + 1, 0:width]

    # ------------------ SpectralAttention (LPE positional encoding) ----------
    # Linear_A(cat([eigvec, eigval], -1)) over flattened (node, eig-token) axis.
    pe = jnp.dot(eig_ref[...], W('lpe_A'), preferred_element_type=f32) + B('lpe_A_b')  # [128, 8]

    # one nn.TransformerEncoderLayer (post-norm, relu, dropout = identity).
    # in-proj is ONE matmul; per-node attention is a block-batched [16, 8, 8]
    # computation (no dense 128x128 score matrix, no mask).
    qkv = jnp.dot(pe, W('lpe_in'), preferred_element_type=f32) + B('lpe_in_b')         # [128, 24]
    qkv = qkv.reshape(N_NODES, N_EIG, 3 * LPE_DIM)                                     # [16, 8, 24]
    scale = 1.0 / float(np.sqrt(LPE_HD))
    ctx_heads = []
    for h in range(LPE_HEADS):                                   # static 2-iter loop
        qh = qkv[..., h * LPE_HD:(h + 1) * LPE_HD]                               # [16, 8, 4]
        kh = qkv[..., LPE_DIM + h * LPE_HD:LPE_DIM + (h + 1) * LPE_HD]
        vh = qkv[..., 2 * LPE_DIM + h * LPE_HD:2 * LPE_DIM + (h + 1) * LPE_HD]
        s = jnp.einsum('nqd,nkd->nqk', qh, kh, preferred_element_type=f32) * scale    # [16, 8, 8]
        s = s - jnp.max(s, axis=-1, keepdims=True)
        p = jnp.exp(s)
        p = p * pl.reciprocal(jnp.sum(p, axis=-1, keepdims=True), approx=True)
        ctx_heads.append(jnp.einsum('nqk,nkd->nqd', p, vh, preferred_element_type=f32))
    ctx = jnp.concatenate(ctx_heads, axis=-1).reshape(N_TOK, LPE_DIM)                  # [128, 8]
    attn = jnp.dot(ctx, W('lpe_out'), preferred_element_type=f32) + B('lpe_out_b')

    x = _layer_norm(pe + attn, B('lpe_ln1_g'), B('lpe_ln1_b'))
    ff = jnp.maximum(jnp.dot(x, W('lpe_f1'), preferred_element_type=f32)
                     + B('lpe_f1_b'), 0.0)
    ff = jnp.dot(ff, W('lpe_f2'), preferred_element_type=f32) + B('lpe_f2_b')
    x = _layer_norm(x + ff, B('lpe_ln2_g'), B('lpe_ln2_b'))                            # [128, 8]

    # nansum over eigen tokens (no NaN padding here -> plain sum)
    pos_enc = jnp.sum(x.reshape(N_NODES, N_EIG, LPE_DIM), axis=1)                      # [16, 8]

    # embedding_h = nn.Embedding(1, hidden-lpe); CSL node features are all 0,
    # so the gather is exactly a broadcast of the single embedding row.
    h_emb = jnp.broadcast_to(B('emb'), (N_NODES, EMB_DIM))                             # [16, 24]
    hfeat = jnp.concatenate([h_emb, pos_enc], axis=1)                                  # [16, 32]
    # in_feat_dropout: identity (eval mode)

    # ------------------------ GraphTransformer layers -------------------------
    adj = adj_ref[...]                                   # [16, 16]  adj[dst, src]
    inv_sqrt_d = 1.0 / float(np.sqrt(GT_HD))
    for l in range(N_LAYERS):                            # static (unrolled) layer loop
        qkv = jnp.dot(hfeat, W(f'gt{l}_qkv'), preferred_element_type=f32)              # [16, 96]
        heads = []
        for hd in range(N_HEADS):                        # static 4-iter head loop
            qh = qkv[:, hd * GT_HD:(hd + 1) * GT_HD]                               # [16, 8]
            kh = qkv[:, HIDDEN + hd * GT_HD:HIDDEN + (hd + 1) * GT_HD]
            vh = qkv[:, 2 * HIDDEN + hd * GT_HD:2 * HIDDEN + (hd + 1) * GT_HD]
            s = jnp.einsum('qd,kd->qk', qh, kh, preferred_element_type=f32) * inv_sqrt_d
            s = jnp.exp(jnp.clip(s, -5.0, 5.0)) * adj    # edge-masked scaled exp (SAN)
            z = jnp.sum(s, axis=-1, keepdims=True)                                  # [16, 1]
            wV = jnp.dot(s, vh, preferred_element_type=f32)                         # [16, 8]
            heads.append(wV * pl.reciprocal(z + 1e-6, approx=True))
        cat = jnp.concatenate(heads, axis=-1)                                        # [16, 32]
        h_attn = jnp.dot(cat, W(f'gt{l}_o'), preferred_element_type=f32) + B(f'gt{l}_Ob')

        h1 = _layer_norm(hfeat + h_attn, B(f'gt{l}_ln1_g'), B(f'gt{l}_ln1_b'))       # res + LN1
        ff = jnp.maximum(jnp.dot(h1, W(f'gt{l}_f1'), preferred_element_type=f32)
                         + B(f'gt{l}_f1_b'), 0.0)
        ff = jnp.dot(ff, W(f'gt{l}_f2'), preferred_element_type=f32) + B(f'gt{l}_f2_b')
        hfeat = _layer_norm(h1 + ff, B(f'gt{l}_ln2_g'), B(f'gt{l}_ln2_b'))           # res + LN2

    # ------------------------ mean readout + MLPReadout -----------------------
    hg = jnp.mean(hfeat, axis=0, keepdims=True)          # dgl.mean_nodes (single graph)
    y = jnp.maximum(jnp.dot(hg, W('mlp_0'), preferred_element_type=f32) + B('mlp_b0'), 0.0)
    y = jnp.maximum(jnp.dot(y, W('mlp_1'), preferred_element_type=f32) + B('mlp_b1'), 0.0)
    out_ref[...] = jnp.dot(y, W('mlp_2'), preferred_element_type=f32) + B('mlp_b2')


# ------------------------------ parameter init --------------------------------
def init_params(key):
    keys = jax.random.split(key, len(W_SPECS) + 1)
    params_w = {}
    for kk, (name, (rows, cols)) in zip(keys[:-1], W_SPECS):
        params_w[name] = (jax.random.normal(kk, (rows, cols), jnp.float32)
                          / np.sqrt(float(rows)))
    params_b = {}
    for name, width in B_SPECS:
        if name.endswith('_g'):                    # LayerNorm gamma
            params_b[name] = jnp.ones((width,), jnp.float32)
        else:                                      # biases / LN beta
            params_b[name] = jnp.zeros((width,), jnp.float32)
    params_b['emb'] = jax.random.normal(keys[-1], (EMB_DIM,), jnp.float32)
    return params_w, params_b


# ----------------------- host-side parameter packing --------------------------
def pack_params(params_w, params_b):
    wslab = np.zeros((W_ROWS, SLAB_W), np.float32)
    for name, (rows, cols) in W_SPECS:
        r0 = W_OFF[name][0]
        wslab[r0:r0 + rows, 0:cols] = np.asarray(params_w[name])
    bslab = np.zeros((B_ROWS, SLAB_W), np.float32)
    for name, width in B_SPECS:
        r, _ = B_OFF[name]
        bslab[r, 0:width] = np.asarray(params_b[name])
    return jnp.asarray(wslab), jnp.asarray(bslab)


# --------------------------------- forward ------------------------------------
@jax.jit
def sa_graph_transformer_forward(adj, eig, wslab, bslab):
    return pl.pallas_call(
        fused_forward_kernel,
        out_shape=jax.ShapeDtypeStruct((1, N_CLASSES), jnp.float32),
        in_specs=[pl.BlockSpec(memory_space=pltpu.MemorySpace.VMEM)] * 4,
        out_specs=pl.BlockSpec(memory_space=pltpu.MemorySpace.VMEM),
    )(adj, eig, wslab, bslab)


# ----------------------------------- main --------------------------------------
if __name__ == "__main__":
    key = jax.random.PRNGKey(0)
    k_param, k_evec, k_eval = jax.random.split(key, 3)

    params_w, params_b = init_params(k_param)
    wslab, bslab = pack_params(params_w, params_b)

    # CSL-like graph: undirected cycle + skip-3 links (every node has degree 4).
    adj_np = np.zeros((N_NODES, N_NODES), dtype=np.float32)
    for i in range(N_NODES):
        for j in (i + 1, i + 3):
            a, b = i, j % N_NODES
            adj_np[a, b] = 1.0
            adj_np[b, a] = 1.0
    adj = jnp.asarray(adj_np)

    # CSL node features are all 0 -> embedding lookup == broadcast of row 0
    # (nn.Embedding(1, hidden-lpe)); the broadcast happens inside the kernel.
    node_ids = jnp.zeros((N_NODES,), dtype=jnp.int32)
    assert int(jnp.max(node_ids)) == 0

    eigvecs = jax.random.normal(k_evec, (N_NODES, N_EIG), jnp.float32)
    eigvals_vec = jax.random.normal(k_eval, (N_EIG,), jnp.float32)
    eigvals = jnp.broadcast_to(eigvals_vec, (N_NODES, N_EIG))     # eigvals repeated per node
    # single [N_TOK, 2] input: column 0 = eigvec, column 1 = eigval
    eig = jnp.stack([eigvecs.reshape(-1), eigvals.reshape(-1)], axis=1)

    out = sa_graph_transformer_forward(adj, eig, wslab, bslab)
    out = jax.block_until_ready(out)
    assert out.shape == (1, N_CLASSES) and bool(jnp.all(jnp.isfinite(out)))
    print("KERNEL_OK")
</pallas_src>

<mosaic_0001>
module attributes {stable_mosaic.version = 11 : i64} {
  func.func @fused_forward_kernel(%arg0: memref<16x16xf32, #tpu.memory_space<vmem>>, %arg1: memref<128x2xf32, #tpu.memory_space<vmem>>, %arg2: memref<440x128xf32, #tpu.memory_space<vmem>>, %arg3: memref<32x128xf32, #tpu.memory_space<vmem>>, %arg4: memref<1x10xf32, #tpu.memory_space<vmem>>) attributes {dimension_semantics = [], scalar_prefetch = 0 : i64, scratch_operands = 0 : i64, tpu.core_type = #tpu.core_type<tc>} {
    %c0 = arith.constant 0 : index
    %c0_0 = arith.constant 0 : index
    %0 = vector.load %arg1[%c0, %c0_0] : memref<128x2xf32, #tpu.memory_space<vmem>>, vector<128x2xf32>
    %c0_1 = arith.constant 0 : index
    %c0_2 = arith.constant 0 : index
    %1 = vector.load %arg2[%c0_1, %c0_2] : memref<440x128xf32, #tpu.memory_space<vmem>>, vector<2x8xf32>
    %cst = arith.constant dense<0.000000e+00> : vector<128x8xf32>
    %2 = tpu.matmul %0, %1, %cst {dimension_numbers = #tpu.dot_dimension_numbers<[1], [0], [0], [1], [0, 0, 1, 1], [], []>} : vector<128x2xf32>, vector<2x8xf32>, vector<128x8xf32> -> vector<128x8xf32>
    %c1 = arith.constant 1 : index
    %c0_3 = arith.constant 0 : index
    %3 = vector.load %arg3[%c1, %c0_3] : memref<32x128xf32, #tpu.memory_space<vmem>>, vector<1x8xf32>
    %4 = vector.broadcast %3 : vector<1x8xf32> to vector<128x8xf32>
    %5 = arith.addf %2, %4 : vector<128x8xf32>
    %c8 = arith.constant 8 : index
    %c0_4 = arith.constant 0 : index
    %6 = vector.load %arg2[%c8, %c0_4] : memref<440x128xf32, #tpu.memory_space<vmem>>, vector<8x24xf32>
    %cst_5 = arith.constant dense<0.000000e+00> : vector<128x24xf32>
    %7 = tpu.matmul %5, %6, %cst_5 {dimension_numbers = #tpu.dot_dimension_numbers<[1], [0], [0], [1], [0, 0, 1, 1], [], []>} : vector<128x8xf32>, vector<8x24xf32>, vector<128x24xf32> -> vector<128x24xf32>
    %c2 = arith.constant 2 : index
    %c0_6 = arith.constant 0 : index
    %8 = vector.load %arg3[%c2, %c0_6] : memref<32x128xf32, #tpu.memory_space<vmem>>, vector<1x24xf32>
    %9 = vector.broadcast %8 : vector<1x24xf32> to vector<128x24xf32>
    %10 = arith.addf %7, %9 : vector<128x24xf32>
    %11 = vector.shape_cast %10 : vector<128x24xf32> to vector<16x8x24xf32>
    %12 = vector.extract_strided_slice %11 {offsets = [0, 0, 0], sizes = [16, 8, 4], strides = [1, 1, 1]} : vector<16x8x24xf32> to vector<16x8x4xf32>
    %13 = vector.extract_strided_slice %11 {offsets = [0, 0, 8], sizes = [16, 8, 4], strides = [1, 1, 1]} : vector<16x8x24xf32> to vector<16x8x4xf32>
    %14 = vector.extract_strided_slice %11 {offsets = [0, 0, 16], sizes = [16, 8, 4], strides = [1, 1, 1]} : vector<16x8x24xf32> to vector<16x8x4xf32>
    "tpu.trace_start"() <{level = 10 : i32, message = "nqd,nkd->nqk"}> : () -> ()
    %cst_7 = arith.constant dense<0.000000e+00> : vector<16x8x8xf32>
    %15 = tpu.matmul %12, %13, %cst_7 {dimension_numbers = #tpu.dot_dimension_numbers<[2], [2], [1], [1], [0, 0, 0, 1, 1, 1], [0], [0]>} : vector<16x8x4xf32>, vector<16x8x4xf32>, vector<16x8x8xf32> -> vector<16x8x8xf32>
    "tpu.trace_stop"() : () -> ()
    %cst_8 = arith.constant 5.000000e-01 : f32
    %16 = vector.broadcast %cst_8 : f32 to vector<16x8x8xf32>
    %17 = arith.mulf %15, %16 : vector<16x8x8xf32>
    %cst_9 = arith.constant dense<0xFF800000> : vector<16x8xf32>
    %18 = vector.multi_reduction <maximumf>, %17, %cst_9 [2] : vector<16x8x8xf32> to vector<16x8xf32>
    %19 = vector.shape_cast %18 : vector<16x8xf32> to vector<16x8x1xf32>
    %20 = vector.broadcast %19 : vector<16x8x1xf32> to vector<16x8x8xf32>
    %21 = arith.subf %17, %20 : vector<16x8x8xf32>
    %22 = math.exp %21 : vector<16x8x8xf32>
    %cst_10 = arith.constant dense<0.000000e+00> : vector<16x8xf32>
    %23 = vector.multi_reduction <add>, %22, %cst_10 [2] : vector<16x8x8xf32> to vector<16x8xf32>
    %24 = vector.shape_cast %23 : vector<16x8xf32> to vector<16x8x1xf32>
    %25 = tpu.reciprocal %24 {approx = true} : vector<16x8x1xf32> -> vector<16x8x1xf32>
    %26 = vector.broadcast %25 : vector<16x8x1xf32> to vector<16x8x8xf32>
    %27 = arith.mulf %22, %26 : vector<16x8x8xf32>
    "tpu.trace_start"() <{level = 10 : i32, message = "nqk,nkd->nqd"}> : () -> ()
    %cst_11 = arith.constant dense<0.000000e+00> : vector<16x8x4xf32>
    %28 = tpu.matmul %27, %14, %cst_11 {dimension_numbers = #tpu.dot_dimension_numbers<[2], [1], [1], [2], [0, 0, 0, 1, 1, 2], [0], [0]>} : vector<16x8x8xf32>, vector<16x8x4xf32>, vector<16x8x4xf32> -> vector<16x8x4xf32>
    "tpu.trace_stop"() : () -> ()
    %29 = vector.extract_strided_slice %11 {offsets = [0, 0, 4], sizes = [16, 8, 4], strides = [1, 1, 1]} : vector<16x8x24xf32> to vector<16x8x4xf32>
    %30 = vector.extract_strided_slice %11 {offsets = [0, 0, 12], sizes = [16, 8, 4], strides = [1, 1, 1]} : vector<16x8x24xf32> to vector<16x8x4xf32>
    %31 = vector.extract_strided_slice %11 {offsets = [0, 0, 20], sizes = [16, 8, 4], strides = [1, 1, 1]} : vector<16x8x24xf32> to vector<16x8x4xf32>
    "tpu.trace_start"() <{level = 10 : i32, message = "nqd,nkd->nqk"}> : () -> ()
    %cst_12 = arith.constant dense<0.000000e+00> : vector<16x8x8xf32>
    %32 = tpu.matmul %29, %30, %cst_12 {dimension_numbers = #tpu.dot_dimension_numbers<[2], [2], [1], [1], [0, 0, 0, 1, 1, 1], [0], [0]>} : vector<16x8x4xf32>, vector<16x8x4xf32>, vector<16x8x8xf32> -> vector<16x8x8xf32>
    "tpu.trace_stop"() : () -> ()
    %cst_13 = arith.constant 5.000000e-01 : f32
    %33 = vector.broadcast %cst_13 : f32 to vector<16x8x8xf32>
    %34 = arith.mulf %32, %33 : vector<16x8x8xf32>
    %cst_14 = arith.constant dense<0xFF800000> : vector<16x8xf32>
    %35 = vector.multi_reduction <maximumf>, %34, %cst_14 [2] : vector<16x8x8xf32> to vector<16x8xf32>
    %36 = vector.shape_cast %35 : vector<16x8xf32> to vector<16x8x1xf32>
    %37 = vector.broadcast %36 : vector<16x8x1xf32> to vector<16x8x8xf32>
    %38 = arith.subf %34, %37 : vector<16x8x8xf32>
    %39 = math.exp %38 : vector<16x8x8xf32>
    %cst_15 = arith.constant dense<0.000000e+00> : vector<16x8xf32>
    %40 = vector.multi_reduction <add>, %39, %cst_15 [2] : vector<16x8x8xf32> to vector<16x8xf32>
    %41 = vector.shape_cast %40 : vector<16x8xf32> to vector<16x8x1xf32>
    %42 = tpu.reciprocal %41 {approx = true} : vector<16x8x1xf32> -> vector<16x8x1xf32>
    %43 = vector.broadcast %42 : vector<16x8x1xf32> to vector<16x8x8xf32>
    %44 = arith.mulf %39, %43 : vector<16x8x8xf32>
    "tpu.trace_start"() <{level = 10 : i32, message = "nqk,nkd->nqd"}> : () -> ()
    %cst_16 = arith.constant dense<0.000000e+00> : vector<16x8x4xf32>
    %45 = tpu.matmul %44, %31, %cst_16 {dimension_numbers = #tpu.dot_dimension_numbers<[2], [1], [1], [2], [0, 0, 0, 1, 1, 2], [0], [0]>} : vector<16x8x8xf32>, vector<16x8x4xf32>, vector<16x8x4xf32> -> vector<16x8x4xf32>
    "tpu.trace_stop"() : () -> ()
    %46 = tpu.concatenate %28, %45 in 2 : vector<16x8x4xf32>, vector<16x8x4xf32> -> vector<16x8x8xf32>
    %47 = vector.shape_cast %46 : vector<16x8x8xf32> to vector<128x8xf32>
    %c16 = arith.constant 16 : index
    %c0_17 = arith.constant 0 : index
    %48 = vector.load %arg2[%c16, %c0_17] : memref<440x128xf32, #tpu.memory_space<vmem>>, vector<8x8xf32>
    %cst_18 = arith.constant dense<0.000000e+00> : vector<128x8xf32>
    %49 = tpu.matmul %47, %48, %cst_18 {dimension_numbers = #tpu.dot_dimension_numbers<[1], [0], [0], [1], [0, 0, 1, 1], [], []>} : vector<128x8xf32>, vector<8x8xf32>, vector<128x8xf32> -> vector<128x8xf32>
    %c3 = arith.constant 3 : index
    %c0_19 = arith.constant 0 : index
    %50 = vector.load %arg3[%c3, %c0_19] : memref<32x128xf32, #tpu.memory_space<vmem>>, vector<1x8xf32>
    %51 = vector.broadcast %50 : vector<1x8xf32> to vector<128x8xf32>
    %52 = arith.addf %49, %51 : vector<128x8xf32>
    %53 = arith.addf %5, %52 : vector<128x8xf32>
    %c4 = arith.constant 4 : index
    %c0_20 = arith.constant 0 : index
    %54 = vector.load %arg3[%c4, %c0_20] : memref<32x128xf32, #tpu.memory_space<vmem>>, vector<1x8xf32>
    %c5 = arith.constant 5 : index
    %c0_21 = arith.constant 0 : index
    %55 = vector.load %arg3[%c5, %c0_21] : memref<32x128xf32, #tpu.memory_space<vmem>>, vector<1x8xf32>
    %cst_22 = arith.constant dense<0.000000e+00> : vector<128xf32>
    %56 = vector.multi_reduction <add>, %53, %cst_22 [1] : vector<128x8xf32> to vector<128xf32>
    %57 = vector.shape_cast %56 : vector<128xf32> to vector<128x1xf32>
    %cst_23 = arith.constant 8.000000e+00 : f32
    %58 = vector.broadcast %cst_23 : f32 to vector<128x1xf32>
    %59 = arith.divf %57, %58 : vector<128x1xf32>
    %60 = vector.broadcast %59 : vector<128x1xf32> to vector<128x8xf32>
    %61 = arith.subf %53, %60 : vector<128x8xf32>
    %62 = arith.mulf %61, %61 : vector<128x8xf32>
    %cst_24 = arith.constant dense<0.000000e+00> : vector<128xf32>
    %63 = vector.multi_reduction <add>, %62, %cst_24 [1] : vector<128x8xf32> to vector<128xf32>
    %64 = vector.shape_cast %63 : vector<128xf32> to vector<128x1xf32>
    %cst_25 = arith.constant 8.000000e+00 : f32
    %65 = vector.broadcast %cst_25 : f32 to vector<128x1xf32>
    %66 = arith.divf %64, %65 : vector<128x1xf32>
    %67 = vector.broadcast %59 : vector<128x1xf32> to vector<128x8xf32>
    %68 = arith.subf %53, %67 : vector<128x8xf32>
    %cst_26 = arith.constant 9.99999974E-6 : f32
    %69 = vector.broadcast %cst_26 : f32 to vector<128x1xf32>
    %70 = arith.addf %66, %69 : vector<128x1xf32>
    %71 = math.rsqrt %70 : vector<128x1xf32>
    %72 = vector.broadcast %71 : vector<128x1xf32> to vector<128x8xf32>
    %73 = arith.mulf %68, %72 : vector<128x8xf32>
    %74 = vector.broadcast %54 : vector<1x8xf32> to vector<128x8xf32>
    %75 = arith.mulf %73, %74 : vector<128x8xf32>
    %76 = vector.broadcast %55 : vector<1x8xf32> to vector<128x8xf32>
    %77 = arith.addf %75, %76 : vector<128x8xf32>
    %c24 = arith.constant 24 : index
    %c0_27 = arith.constant 0 : index
    %78 = vector.load %arg2[%c24, %c0_27] : memref<440x128xf32, #tpu.memory_space<vmem>>, vector<8x32xf32>
    %cst_28 = arith.constant dense<0.000000e+00> : vector<128x32xf32>
    %79 = tpu.matmul %77, %78, %cst_28 {dimension_numbers = #tpu.dot_dimension_numbers<[1], [0], [0], [1], [0, 0, 1, 1], [], []>} : vector<128x8xf32>, vector<8x32xf32>, vector<128x32xf32> -> vector<128x32xf32>
    %c6 = arith.constant 6 : index
    %c0_29 = arith.constant 0 : index
    %80 = vector.load %arg3[%c6, %c0_29] : memref<32x128xf32, #tpu.memory_space<vmem>>, vector<1x32xf32>
    %81 = vector.broadcast %80 : vector<1x32xf32> to vector<128x32xf32>
    %82 = arith.addf %79, %81 : vector<128x32xf32>
    %cst_30 = arith.constant 0.000000e+00 : f32
    %83 = vector.broadcast %cst_30 : f32 to vector<128x32xf32>
    %84 = arith.maximumf %82, %83 : vector<128x32xf32>
    %c32 = arith.constant 32 : index
    %c0_31 = arith.constant 0 : index
    %85 = vector.load %arg2[%c32, %c0_31] : memref<440x128xf32, #tpu.memory_space<vmem>>, vector<32x8xf32>
    %cst_32 = arith.constant dense<0.000000e+00> : vector<128x8xf32>
    %86 = tpu.matmul %84, %85, %cst_32 {dimension_numbers = #tpu.dot_dimension_numbers<[1], [0], [0], [1], [0, 0, 1, 1], [], []>} : vector<128x32xf32>, vector<32x8xf32>, vector<128x8xf32> -> vector<128x8xf32>
    %c7 = arith.constant 7 : index
    %c0_33 = arith.constant 0 : index
    %87 = vector.load %arg3[%c7, %c0_33] : memref<32x128xf32, #tpu.memory_space<vmem>>, vector<1x8xf32>
    %88 = vector.broadcast %87 : vector<1x8xf32> to vector<128x8xf32>
    %89 = arith.addf %86, %88 : vector<128x8xf32>
    %90 = arith.addf %77, %89 : vector<128x8xf32>
    %c8_34 = arith.constant 8 : index
    %c0_35 = arith.constant 0 : index
    %91 = vector.load %arg3[%c8_34, %c0_35] : memref<32x128xf32, #tpu.memory_space<vmem>>, vector<1x8xf32>
    %c9 = arith.constant 9 : index
    %c0_36 = arith.constant 0 : index
    %92 = vector.load %arg3[%c9, %c0_36] : memref<32x128xf32, #tpu.memory_space<vmem>>, vector<1x8xf32>
    %cst_37 = arith.constant dense<0.000000e+00> : vector<128xf32>
    %93 = vector.multi_reduction <add>, %90, %cst_37 [1] : vector<128x8xf32> to vector<128xf32>
    %94 = vector.shape_cast %93 : vector<128xf32> to vector<128x1xf32>
    %cst_38 = arith.constant 8.000000e+00 : f32
    %95 = vector.broadcast %cst_38 : f32 to vector<128x1xf32>
    %96 = arith.divf %94, %95 : vector<128x1xf32>
    %97 = vector.broadcast %96 : vector<128x1xf32> to vector<128x8xf32>
    %98 = arith.subf %90, %97 : vector<128x8xf32>
    %99 = arith.mulf %98, %98 : vector<128x8xf32>
    %cst_39 = arith.constant dense<0.000000e+00> : vector<128xf32>
    %100 = vector.multi_reduction <add>, %99, %cst_39 [1] : vector<128x8xf32> to vector<128xf32>
    %101 = vector.shape_cast %100 : vector<128xf32> to vector<128x1xf32>
    %cst_40 = arith.constant 8.000000e+00 : f32
    %102 = vector.broadcast %cst_40 : f32 to vector<128x1xf32>
    %103 = arith.divf %101, %102 : vector<128x1xf32>
    %104 = vector.broadcast %96 : vector<128x1xf32> to vector<128x8xf32>
    %105 = arith.subf %90, %104 : vector<128x8xf32>
    %cst_41 = arith.constant 9.99999974E-6 : f32
    %106 = vector.broadcast %cst_41 : f32 to vector<128x1xf32>
    %107 = arith.addf %103, %106 : vector<128x1xf32>
    %108 = math.rsqrt %107 : vector<128x1xf32>
    %109 = vector.broadcast %108 : vector<128x1xf32> to vector<128x8xf32>
    %110 = arith.mulf %105, %109 : vector<128x8xf32>
    %111 = vector.broadcast %91 : vector<1x8xf32> to vector<128x8xf32>
    %112 = arith.mulf %110, %111 : vector<128x8xf32>
    %113 = vector.broadcast %92 : vector<1x8xf32> to vector<128x8xf32>
    %114 = arith.addf %112, %113 : vector<128x8xf32>
    %115 = vector.shape_cast %114 : vector<128x8xf32> to vector<16x8x8xf32>
    %cst_42 = arith.constant dense<0.000000e+00> : vector<16x8xf32>
    %116 = vector.multi_reduction <add>, %115, %cst_42 [1] : vector<16x8x8xf32> to vector<16x8xf32>
    %c0_43 = arith.constant 0 : index
    %c0_44 = arith.constant 0 : index
    %117 = vector.load %arg3[%c0_43, %c0_44] : memref<32x128xf32, #tpu.memory_space<vmem>>, vector<1x24xf32>
    %118 = vector.shape_cast %117 : vector<1x24xf32> to vector<1x24xf32>
    %119 = vector.broadcast %118 : vector<1x24xf32> to vector<16x24xf32>
    %120 = tpu.concatenate %119, %116 in 1 : vector<16x24xf32>, vector<16x8xf32> -> vector<16x32xf32>
    %c0_45 = arith.constant 0 : index
    %c0_46 = arith.constant 0 : index
    %121 = vector.load %arg0[%c0_45, %c0_46] : memref<16x16xf32, #tpu.memory_space<vmem>>, vector<16x16xf32>
    %c64 = arith.constant 64 : index
    %c0_47 = arith.constant 0 : index
    %122 = vector.load %arg2[%c64, %c0_47] : memref<440x128xf32, #tpu.memory_space<vmem>>, vector<32x96xf32>
    %cst_48 = arith.constant dense<0.000000e+00> : vector<16x96xf32>
    %123 = tpu.matmul %120, %122, %cst_48 {dimension_numbers = #tpu.dot_dimension_numbers<[1], [0], [0], [1], [0, 0, 1, 1], [], []>} : vector<16x32xf32>, vector<32x96xf32>, vector<16x96xf32> -> vector<16x96xf32>
    %124 = vector.extract_strided_slice %123 {offsets = [0, 0], sizes = [16, 8], strides = [1, 1]} : vector<16x96xf32> to vector<16x8xf32>
    %125 = vector.extract_strided_slice %123 {offsets = [0, 32], sizes = [16, 8], strides = [1, 1]} : vector<16x96xf32> to vector<16x8xf32>
    %126 = vector.extract_strided_slice %123 {offsets = [0, 64], sizes = [16, 8], strides = [1, 1]} : vector<16x96xf32> to vector<16x8xf32>
    "tpu.trace_start"() <{level = 10 : i32, message = "qd,kd->qk"}> : () -> ()
    %cst_49 = arith.constant dense<0.000000e+00> : vector<16x16xf32>
    %127 = tpu.matmul %124, %125, %cst_49 {dimension_numbers = #tpu.dot_dimension_numbers<[1], [1], [0], [0], [0, 0, 1, 0], [], []>} : vector<16x8xf32>, vector<16x8xf32>, vector<16x16xf32> -> vector<16x16xf32>
    "tpu.trace_stop"() : () -> ()
    %cst_50 = arith.constant 0.353553385 : f32
    %128 = vector.broadcast %cst_50 : f32 to vector<16x16xf32>
    %129 = arith.mulf %127, %128 : vector<16x16xf32>
    %cst_51 = arith.constant -5.000000e+00 : f32
    %cst_52 = arith.constant 5.000000e+00 : f32
    %130 = vector.broadcast %cst_51 : f32 to vector<16x16xf32>
    %131 = arith.maximumf %130, %129 : vector<16x16xf32>
    %132 = vector.broadcast %cst_52 : f32 to vector<16x16xf32>
    %133 = arith.minimumf %132, %131 : vector<16x16xf32>
    %134 = math.exp %133 : vector<16x16xf32>
    %135 = arith.mulf %134, %121 : vector<16x16xf32>
    %cst_53 = arith.constant dense<0.000000e+00> : vector<16xf32>
    %136 = vector.multi_reduction <add>, %135, %cst_53 [1] : vector<16x16xf32> to vector<16xf32>
    %137 = vector.shape_cast %136 : vector<16xf32> to vector<16x1xf32>
    %cst_54 = arith.constant dense<0.000000e+00> : vector<16x8xf32>
    %138 = tpu.matmul %135, %126, %cst_54 {dimension_numbers = #tpu.dot_dimension_numbers<[1], [0], [0], [1], [0, 0, 1, 1], [], []>} : vector<16x16xf32>, vector<16x8xf32>, vector<16x8xf32> -> vector<16x8xf32>
    %cst_55 = arith.constant 9.99999997E-7 : f32
    %139 = vector.broadcast %cst_55 : f32 to vector<16x1xf32>
    %140 = arith.addf %137, %139 : vector<16x1xf32>
    %141 = tpu.reciprocal %140 {approx = true} : vector<16x1xf32> -> vector<16x1xf32>
    %142 = vector.broadcast %141 : vector<16x1xf32> to vector<16x8xf32>
    %143 = arith.mulf %138, %142 : vector<16x8xf32>
    %144 = vector.extract_strided_slice %123 {offsets = [0, 8], sizes = [16, 8], strides = [1, 1]} : vector<16x96xf32> to vector<16x8xf32>
    %145 = vector.extract_strided_slice %123 {offsets = [0, 40], sizes = [16, 8], strides = [1, 1]} : vector<16x96xf32> to vector<16x8xf32>
    %146 = vector.extract_strided_slice %123 {offsets = [0, 72], sizes = [16, 8], strides = [1, 1]} : vector<16x96xf32> to vector<16x8xf32>
    "tpu.trace_start"() <{level = 10 : i32, message = "qd,kd->qk"}> : () -> ()
    %cst_56 = arith.constant dense<0.000000e+00> : vector<16x16xf32>
    %147 = tpu.matmul %144, %145, %cst_56 {dimension_numbers = #tpu.dot_dimension_numbers<[1], [1], [0], [0], [0, 0, 1, 0], [], []>} : vector<16x8xf32>, vector<16x8xf32>, vector<16x16xf32> -> vector<16x16xf32>
    "tpu.trace_stop"() : () -> ()
    %cst_57 = arith.constant 0.353553385 : f32
    %148 = vector.broadcast %cst_57 : f32 to vector<16x16xf32>
    %149 = arith.mulf %147, %148 : vector<16x16xf32>
    %cst_58 = arith.constant -5.000000e+00 : f32
    %cst_59 = arith.constant 5.000000e+00 : f32
    %150 = vector.broadcast %cst_58 : f32 to vector<16x16xf32>
    %151 = arith.maximumf %150, %149 : vector<16x16xf32>
    %152 = vector.broadcast %cst_59 : f32 to vector<16x16xf32>
    %153 = arith.minimumf %152, %151 : vector<16x16xf32>
    %154 = math.exp %153 : vector<16x16xf32>
    %155 = arith.mulf %154, %121 : vector<16x16xf32>
    %cst_60 = arith.constant dense<0.000000e+00> : vector<16xf32>
    %156 = vector.multi_reduction <add>, %155, %cst_60 [1] : vector<16x16xf32> to vector<16xf32>
    %157 = vector.shape_cast %156 : vector<16xf32> to vector<16x1xf32>
    %cst_61 = arith.constant dense<0.000000e+00> : vector<16x8xf32>
    %158 = tpu.matmul %155, %146, %cst_61 {dimension_numbers = #tpu.dot_dimension_numbers<[1], [0], [0], [1], [0, 0, 1, 1], [], []>} : vector<16x16xf32>, vector<16x8xf32>, vector<16x8xf32> -> vector<16x8xf32>
    %cst_62 = arith.constant 9.99999997E-7 : f32
    %159 = vector.broadcast %cst_62 : f32 to vector<16x1xf32>
    %160 = arith.addf %157, %159 : vector<16x1xf32>
    %161 = tpu.reciprocal %160 {approx = true} : vector<16x1xf32> -> vector<16x1xf32>
    %162 = vector.broadcast %161 : vector<16x1xf32> to vector<16x8xf32>
    %163 = arith.mulf %158, %162 : vector<16x8xf32>
    %164 = vector.extract_strided_slice %123 {offsets = [0, 16], sizes = [16, 8], strides = [1, 1]} : vector<16x96xf32> to vector<16x8xf32>
    %165 = vector.extract_strided_slice %123 {offsets = [0, 48], sizes = [16, 8], strides = [1, 1]} : vector<16x96xf32> to vector<16x8xf32>
    %166 = vector.extract_strided_slice %123 {offsets = [0, 80], sizes = [16, 8], strides = [1, 1]} : vector<16x96xf32> to vector<16x8xf32>
    "tpu.trace_start"() <{level = 10 : i32, message = "qd,kd->qk"}> : () -> ()
    %cst_63 = arith.constant dense<0.000000e+00> : vector<16x16xf32>
    %167 = tpu.matmul %164, %165, %cst_63 {dimension_numbers = #tpu.dot_dimension_numbers<[1], [1], [0], [0], [0, 0, 1, 0], [], []>} : vector<16x8xf32>, vector<16x8xf32>, vector<16x16xf32> -> vector<16x16xf32>
    "tpu.trace_stop"() : () -> ()
    %cst_64 = arith.constant 0.353553385 : f32
    %168 = vector.broadcast %cst_64 : f32 to vector<16x16xf32>
    %169 = arith.mulf %167, %168 : vector<16x16xf32>
    %cst_65 = arith.constant -5.000000e+00 : f32
    %cst_66 = arith.constant 5.000000e+00 : f32
    %170 = vector.broadcast %cst_65 : f32 to vector<16x16xf32>
    %171 = arith.maximumf %170, %169 : vector<16x16xf32>
    %172 = vector.broadcast %cst_66 : f32 to vector<16x16xf32>
    %173 = arith.minimumf %172, %171 : vector<16x16xf32>
    %174 = math.exp %173 : vector<16x16xf32>
    %175 = arith.mulf %174, %121 : vector<16x16xf32>
    %cst_67 = arith.constant dense<0.000000e+00> : vector<16xf32>
    %176 = vector.multi_reduction <add>, %175, %cst_67 [1] : vector<16x16xf32> to vector<16xf32>
    %177 = vector.shape_cast %176 : vector<16xf32> to vector<16x1xf32>
    %cst_68 = arith.constant dense<0.000000e+00> : vector<16x8xf32>
    %178 = tpu.matmul %175, %166, %cst_68 {dimension_numbers = #tpu.dot_dimension_numbers<[1], [0], [0], [1], [0, 0, 1, 1], [], []>} : vector<16x16xf32>, vector<16x8xf32>, vector<16x8xf32> -> vector<16x8xf32>
    %cst_69 = arith.constant 9.99999997E-7 : f32
    %179 = vector.broadcast %cst_69 : f32 to vector<16x1xf32>
    %180 = arith.addf %177, %179 : vector<16x1xf32>
    %181 = tpu.reciprocal %180 {approx = true} : vector<16x1xf32> -> vector<16x1xf32>
    %182 = vector.broadcast %181 : vector<16x1xf32> to vector<16x8xf32>
    %183 = arith.mulf %178, %182 : vector<16x8xf32>
    %184 = vector.extract_strided_slice %123 {offsets = [0, 24], sizes = [16, 8], strides = [1, 1]} : vector<16x96xf32> to vector<16x8xf32>
    %185 = vector.extract_strided_slice %123 {offsets = [0, 56], sizes = [16, 8], strides = [1, 1]} : vector<16x96xf32> to vector<16x8xf32>
    %186 = vector.extract_strided_slice %123 {offsets = [0, 88], sizes = [16, 8], strides = [1, 1]} : vector<16x96xf32> to vector<16x8xf32>
    "tpu.trace_start"() <{level = 10 : i32, message = "qd,kd->qk"}> : () -> ()
    %cst_70 = arith.constant dense<0.000000e+00> : vector<16x16xf32>
    %187 = tpu.matmul %184, %185, %cst_70 {dimension_numbers = #tpu.dot_dimension_numbers<[1], [1], [0], [0], [0, 0, 1, 0], [], []>} : vector<16x8xf32>, vector<16x8xf32>, vector<16x16xf32> -> vector<16x16xf32>
    "tpu.trace_stop"() : () -> ()
    %cst_71 = arith.constant 0.353553385 : f32
    %188 = vector.broadcast %cst_71 : f32 to vector<16x16xf32>
    %189 = arith.mulf %187, %188 : vector<16x16xf32>
    %cst_72 = arith.constant -5.000000e+00 : f32
    %cst_73 = arith.constant 5.000000e+00 : f32
    %190 = vector.broadcast %cst_72 : f32 to vector<16x16xf32>
    %191 = arith.maximumf %190, %189 : vector<16x16xf32>
    %192 = vector.broadcast %cst_73 : f32 to vector<16x16xf32>
    %193 = arith.minimumf %192, %191 : vector<16x16xf32>
    %194 = math.exp %193 : vector<16x16xf32>
    %195 = arith.mulf %194, %121 : vector<16x16xf32>
    %cst_74 = arith.constant dense<0.000000e+00> : vector<16xf32>
    %196 = vector.multi_reduction <add>, %195, %cst_74 [1] : vector<16x16xf32> to vector<16xf32>
    %197 = vector.shape_cast %196 : vector<16xf32> to vector<16x1xf32>
    %cst_75 = arith.constant dense<0.000000e+00> : vector<16x8xf32>
    %198 = tpu.matmul %195, %186, %cst_75 {dimension_numbers = #tpu.dot_dimension_numbers<[1], [0], [0], [1], [0, 0, 1, 1], [], []>} : vector<16x16xf32>, vector<16x8xf32>, vector<16x8xf32> -> vector<16x8xf32>
    %cst_76 = arith.constant 9.99999997E-7 : f32
    %199 = vector.broadcast %cst_76 : f32 to vector<16x1xf32>
    %200 = arith.addf %197, %199 : vector<16x1xf32>
    %201 = tpu.reciprocal %200 {approx = true} : vector<16x1xf32> -> vector<16x1xf32>
    %202 = vector.broadcast %201 : vector<16x1xf32> to vector<16x8xf32>
    %203 = arith.mulf %198, %202 : vector<16x8xf32>
    %204 = tpu.concatenate %143, %163, %183, %203 in 1 : vector<16x8xf32>, vector<16x8xf32>, vector<16x8xf32>, vector<16x8xf32> -> vector<16x32xf32>
    %c96 = arith.constant 96 : index
    %c0_77 = arith.constant 0 : index
    %205 = vector.load %arg2[%c96, %c0_77] : memref<440x128xf32, #tpu.memory_space<vmem>>, vector<32x32xf32>
    %cst_78 = arith.constant dense<0.000000e+00> : vector<16x32xf32>
    %206 = tpu.matmul %204, %205, %cst_78 {dimension_numbers = #tpu.dot_dimension_numbers<[1], [0], [0], [1], [0, 0, 1, 1], [], []>} : vector<16x32xf32>, vector<32x32xf32>, vector<16x32xf32> -> vector<16x32xf32>
    %c10 = arith.constant 10 : index
    %c0_79 = arith.constant 0 : index
    %207 = vector.load %arg3[%c10, %c0_79] : memref<32x128xf32, #tpu.memory_space<vmem>>, vector<1x32xf32>
    %208 = vector.broadcast %207 : vector<1x32xf32> to vector<16x32xf32>
    %209 = arith.addf %206, %208 : vector<16x32xf32>
    %210 = arith.addf %120, %209 : vector<16x32xf32>
    %c11 = arith.constant 11 : index
    %c0_80 = arith.constant 0 : index
    %211 = vector.load %arg3[%c11, %c0_80] : memref<32x128xf32, #tpu.memory_space<vmem>>, vector<1x32xf32>
    %c12 = arith.constant 12 : index
    %c0_81 = arith.constant 0 : index
    %212 = vector.load %arg3[%c12, %c0_81] : memref<32x128xf32, #tpu.memory_space<vmem>>, vector<1x32xf32>
    %cst_82 = arith.constant dense<0.000000e+00> : vector<16xf32>
    %213 = vector.multi_reduction <add>, %210, %cst_82 [1] : vector<16x32xf32> to vector<16xf32>
    %214 = vector.shape_cast %213 : vector<16xf32> to vector<16x1xf32>
    %cst_83 = arith.constant 3.200000e+01 : f32
    %215 = vector.broadcast %cst_83 : f32 to vector<16x1xf32>
    %216 = arith.divf %214, %215 : vector<16x1xf32>
    %217 = vector.broadcast %216 : vector<16x1xf32> to vector<16x32xf32>
    %218 = arith.subf %210, %217 : vector<16x32xf32>
    %219 = arith.mulf %218, %218 : vector<16x32xf32>
    %cst_84 = arith.constant dense<0.000000e+00> : vector<16xf32>
    %220 = vector.multi_reduction <add>, %219, %cst_84 [1] : vector<16x32xf32> to vector<16xf32>
    %221 = vector.shape_cast %220 : vector<16xf32> to vector<16x1xf32>
    %cst_85 = arith.constant 3.200000e+01 : f32
    %222 = vector.broadcast %cst_85 : f32 to vector<16x1xf32>
    %223 = arith.divf %221, %222 : vector<16x1xf32>
    %224 = vector.broadcast %216 : vector<16x1xf32> to vector<16x32xf32>
    %225 = arith.subf %210, %224 : vector<16x32xf32>
    %cst_86 = arith.constant 9.99999974E-6 : f32
    %226 = vector.broadcast %cst_86 : f32 to vector<16x1xf32>
    %227 = arith.addf %223, %226 : vector<16x1xf32>
    %228 = math.rsqrt %227 : vector<16x1xf32>
    %229 = vector.broadcast %228 : vector<16x1xf32> to vector<16x32xf32>
    %230 = arith.mulf %225, %229 : vector<16x32xf32>
    %231 = vector.broadcast %211 : vector<1x32xf32> to vector<16x32xf32>
    %232 = arith.mulf %230, %231 : vector<16x32xf32>
    %233 = vector.broadcast %212 : vector<1x32xf32> to vector<16x32xf32>
    %234 = arith.addf %232, %233 : vector<16x32xf32>
    %c128 = arith.constant 128 : index
    %c0_87 = arith.constant 0 : index
    %235 = vector.load %arg2[%c128, %c0_87] : memref<440x128xf32, #tpu.memory_space<vmem>>, vector<32x64xf32>
    %cst_88 = arith.constant dense<0.000000e+00> : vector<16x64xf32>
    %236 = tpu.matmul %234, %235, %cst_88 {dimension_numbers = #tpu.dot_dimension_numbers<[1], [0], [0], [1], [0, 0, 1, 1], [], []>} : vector<16x32xf32>, vector<32x64xf32>, vector<16x64xf32> -> vector<16x64xf32>
    %c13 = arith.constant 13 : index
    %c0_89 = arith.constant 0 : index
    %237 = vector.load %arg3[%c13, %c0_89] : memref<32x128xf32, #tpu.memory_space<vmem>>, vector<1x64xf32>
    %238 = vector.broadcast %237 : vector<1x64xf32> to vector<16x64xf32>
    %239 = arith.addf %236, %238 : vector<16x64xf32>
    %cst_90 = arith.constant 0.000000e+00 : f32
    %240 = vector.broadcast %cst_90 : f32 to vector<16x64xf32>
    %241 = arith.maximumf %239, %240 : vector<16x64xf32>
    %c160 = arith.constant 160 : index
    %c0_91 = arith.constant 0 : index
    %242 = vector.load %arg2[%c160, %c0_91] : memref<440x128xf32, #tpu.memory_space<vmem>>, vector<64x32xf32>
    %cst_92 = arith.constant dense<0.000000e+00> : vector<16x32xf32>
    %243 = tpu.matmul %241, %242, %cst_92 {dimension_numbers = #tpu.dot_dimension_numbers<[1], [0], [0], [1], [0, 0, 1, 1], [], []>} : vector<16x64xf32>, vector<64x32xf32>, vector<16x32xf32> -> vector<16x32xf32>
    %c14 = arith.constant 14 : index
    %c0_93 = arith.constant 0 : index
    %244 = vector.load %arg3[%c14, %c0_93] : memref<32x128xf32, #tpu.memory_space<vmem>>, vector<1x32xf32>
    %245 = vector.broadcast %244 : vector<1x32xf32> to vector<16x32xf32>
    %246 = arith.addf %243, %245 : vector<16x32xf32>
    %247 = arith.addf %234, %246 : vector<16x32xf32>
    %c15 = arith.constant 15 : index
    %c0_94 = arith.constant 0 : index
    %248 = vector.load %arg3[%c15, %c0_94] : memref<32x128xf32, #tpu.memory_space<vmem>>, vector<1x32xf32>
    %c16_95 = arith.constant 16 : index
    %c0_96 = arith.constant 0 : index
    %249 = vector.load %arg3[%c16_95, %c0_96] : memref<32x128xf32, #tpu.memory_space<vmem>>, vector<1x32xf32>
    %cst_97 = arith.constant dense<0.000000e+00> : vector<16xf32>
    %250 = vector.multi_reduction <add>, %247, %cst_97 [1] : vector<16x32xf32> to vector<16xf32>
    %251 = vector.shape_cast %250 : vector<16xf32> to vector<16x1xf32>
    %cst_98 = arith.constant 3.200000e+01 : f32
    %252 = vector.broadcast %cst_98 : f32 to vector<16x1xf32>
    %253 = arith.divf %251, %252 : vector<16x1xf32>
    %254 = vector.broadcast %253 : vector<16x1xf32> to vector<16x32xf32>
    %255 = arith.subf %247, %254 : vector<16x32xf32>
    %256 = arith.mulf %255, %255 : vector<16x32xf32>
    %cst_99 = arith.constant dense<0.000000e+00> : vector<16xf32>
    %257 = vector.multi_reduction <add>, %256, %cst_99 [1] : vector<16x32xf32> to vector<16xf32>
    %258 = vector.shape_cast %257 : vector<16xf32> to vector<16x1xf32>
    %cst_100 = arith.constant 3.200000e+01 : f32
    %259 = vector.broadcast %cst_100 : f32 to vector<16x1xf32>
    %260 = arith.divf %258, %259 : vector<16x1xf32>
    %261 = vector.broadcast %253 : vector<16x1xf32> to vector<16x32xf32>
    %262 = arith.subf %247, %261 : vector<16x32xf32>
    %cst_101 = arith.constant 9.99999974E-6 : f32
    %263 = vector.broadcast %cst_101 : f32 to vector<16x1xf32>
    %264 = arith.addf %260, %263 : vector<16x1xf32>
    %265 = math.rsqrt %264 : vector<16x1xf32>
    %266 = vector.broadcast %265 : vector<16x1xf32> to vector<16x32xf32>
    %267 = arith.mulf %262, %266 : vector<16x32xf32>
    %268 = vector.broadcast %248 : vector<1x32xf32> to vector<16x32xf32>
    %269 = arith.mulf %267, %268 : vector<16x32xf32>
    %270 = vector.broadcast %249 : vector<1x32xf32> to vector<16x32xf32>
    %271 = arith.addf %269, %270 : vector<16x32xf32>
    %c224 = arith.constant 224 : index
    %c0_102 = arith.constant 0 : index
    %272 = vector.load %arg2[%c224, %c0_102] : memref<440x128xf32, #tpu.memory_space<vmem>>, vector<32x96xf32>
    %cst_103 = arith.constant dense<0.000000e+00> : vector<16x96xf32>
    %273 = tpu.matmul %271, %272, %cst_103 {dimension_numbers = #tpu.dot_dimension_numbers<[1], [0], [0], [1], [0, 0, 1, 1], [], []>} : vector<16x32xf32>, vector<32x96xf32>, vector<16x96xf32> -> vector<16x96xf32>
    %274 = vector.extract_strided_slice %273 {offsets = [0, 0], sizes = [16, 8], strides = [1, 1]} : vector<16x96xf32> to vector<16x8xf32>
    %275 = vector.extract_strided_slice %273 {offsets = [0, 32], sizes = [16, 8], strides = [1, 1]} : vector<16x96xf32> to vector<16x8xf32>
    %276 = vector.extract_strided_slice %273 {offsets = [0, 64], sizes = [16, 8], strides = [1, 1]} : vector<16x96xf32> to vector<16x8xf32>
    "tpu.trace_start"() <{level = 10 : i32, message = "qd,kd->qk"}> : () -> ()
    %cst_104 = arith.constant dense<0.000000e+00> : vector<16x16xf32>
    %277 = tpu.matmul %274, %275, %cst_104 {dimension_numbers = #tpu.dot_dimension_numbers<[1], [1], [0], [0], [0, 0, 1, 0], [], []>} : vector<16x8xf32>, vector<16x8xf32>, vector<16x16xf32> -> vector<16x16xf32>
    "tpu.trace_stop"() : () -> ()
    %cst_105 = arith.constant 0.353553385 : f32
    %278 = vector.broadcast %cst_105 : f32 to vector<16x16xf32>
    %279 = arith.mulf %277, %278 : vector<16x16xf32>
    %cst_106 = arith.constant -5.000000e+00 : f32
    %cst_107 = arith.constant 5.000000e+00 : f32
    %280 = vector.broadcast %cst_106 : f32 to vector<16x16xf32>
    %281 = arith.maximumf %280, %279 : vector<16x16xf32>
    %282 = vector.broadcast %cst_107 : f32 to vector<16x16xf32>
    %283 = arith.minimumf %282, %281 : vector<16x16xf32>
    %284 = math.exp %283 : vector<16x16xf32>
    %285 = arith.mulf %284, %121 : vector<16x16xf32>
    %cst_108 = arith.constant dense<0.000000e+00> : vector<16xf32>
    %286 = vector.multi_reduction <add>, %285, %cst_108 [1] : vector<16x16xf32> to vector<16xf32>
    %287 = vector.shape_cast %286 : vector<16xf32> to vector<16x1xf32>
    %cst_109 = arith.constant dense<0.000000e+00> : vector<16x8xf32>
    %288 = tpu.matmul %285, %276, %cst_109 {dimension_numbers = #tpu.dot_dimension_numbers<[1], [0], [0], [1], [0, 0, 1, 1], [], []>} : vector<16x16xf32>, vector<16x8xf32>, vector<16x8xf32> -> vector<16x8xf32>
    %cst_110 = arith.constant 9.99999997E-7 : f32
    %289 = vector.broadcast %cst_110 : f32 to vector<16x1xf32>
    %290 = arith.addf %287, %289 : vector<16x1xf32>
    %291 = tpu.reciprocal %290 {approx = true} : vector<16x1xf32> -> vector<16x1xf32>
    %292 = vector.broadcast %291 : vector<16x1xf32> to vector<16x8xf32>
    %293 = arith.mulf %288, %292 : vector<16x8xf32>
    %294 = vector.extract_strided_slice %273 {offsets = [0, 8], sizes = [16, 8], strides = [1, 1]} : vector<16x96xf32> to vector<16x8xf32>
    %295 = vector.extract_strided_slice %273 {offsets = [0, 40], sizes = [16, 8], strides = [1, 1]} : vector<16x96xf32> to vector<16x8xf32>
    %296 = vector.extract_strided_slice %273 {offsets = [0, 72], sizes = [16, 8], strides = [1, 1]} : vector<16x96xf32> to vector<16x8xf32>
    "tpu.trace_start"() <{level = 10 : i32, message = "qd,kd->qk"}> : () -> ()
    %cst_111 = arith.constant dense<0.000000e+00> : vector<16x16xf32>
    %297 = tpu.matmul %294, %295, %cst_111 {dimension_numbers = #tpu.dot_dimension_numbers<[1], [1], [0], [0], [0, 0, 1, 0], [], []>} : vector<16x8xf32>, vector<16x8xf32>, vector<16x16xf32> -> vector<16x16xf32>
    "tpu.trace_stop"() : () -> ()
    %cst_112 = arith.constant 0.353553385 : f32
    %298 = vector.broadcast %cst_112 : f32 to vector<16x16xf32>
    %299 = arith.mulf %297, %298 : vector<16x16xf32>
    %cst_113 = arith.constant -5.000000e+00 : f32
    %cst_114 = arith.constant 5.000000e+00 : f32
    %300 = vector.broadcast %cst_113 : f32 to vector<16x16xf32>
    %301 = arith.maximumf %300, %299 : vector<16x16xf32>
    %302 = vector.broadcast %cst_114 : f32 to vector<16x16xf32>
    %303 = arith.minimumf %302, %301 : vector<16x16xf32>
    %304 = math.exp %303 : vector<16x16xf32>
    %305 = arith.mulf %304, %121 : vector<16x16xf32>
    %cst_115 = arith.constant dense<0.000000e+00> : vector<16xf32>
    %306 = vector.multi_reduction <add>, %305, %cst_115 [1] : vector<16x16xf32> to vector<16xf32>
    %307 = vector.shape_cast %306 : vector<16xf32> to vector<16x1xf32>
    %cst_116 = arith.constant dense<0.000000e+00> : vector<16x8xf32>
    %308 = tpu.matmul %305, %296, %cst_116 {dimension_numbers = #tpu.dot_dimension_numbers<[1], [0], [0], [1], [0, 0, 1, 1], [], []>} : vector<16x16xf32>, vector<16x8xf32>, vector<16x8xf32> -> vector<16x8xf32>
    %cst_117 = arith.constant 9.99999997E-7 : f32
    %309 = vector.broadcast %cst_117 : f32 to vector<16x1xf32>
    %310 = arith.addf %307, %309 : vector<16x1xf32>
    %311 = tpu.reciprocal %310 {approx = true} : vector<16x1xf32> -> vector<16x1xf32>
    %312 = vector.broadcast %311 : vector<16x1xf32> to vector<16x8xf32>
    %313 = arith.mulf %308, %312 : vector<16x8xf32>
    %314 = vector.extract_strided_slice %273 {offsets = [0, 16], sizes = [16, 8], strides = [1, 1]} : vector<16x96xf32> to vector<16x8xf32>
    %315 = vector.extract_strided_slice %273 {offsets = [0, 48], sizes = [16, 8], strides = [1, 1]} : vector<16x96xf32> to vector<16x8xf32>
    %316 = vector.extract_strided_slice %273 {offsets = [0, 80], sizes = [16, 8], strides = [1, 1]} : vector<16x96xf32> to vector<16x8xf32>
    "tpu.trace_start"() <{level = 10 : i32, message = "qd,kd->qk"}> : () -> ()
    %cst_118 = arith.constant dense<0.000000e+00> : vector<16x16xf32>
    %317 = tpu.matmul %314, %315, %cst_118 {dimension_numbers = #tpu.dot_dimension_numbers<[1], [1], [0], [0], [0, 0, 1, 0], [], []>} : vector<16x8xf32>, vector<16x8xf32>, vector<16x16xf32> -> vector<16x16xf32>
    "tpu.trace_stop"() : () -> ()
    %cst_119 = arith.constant 0.353553385 : f32
    %318 = vector.broadcast %cst_119 : f32 to vector<16x16xf32>
    %319 = arith.mulf %317, %318 : vector<16x16xf32>
    %cst_120 = arith.constant -5.000000e+00 : f32
    %cst_121 = arith.constant 5.000000e+00 : f32
    %320 = vector.broadcast %cst_120 : f32 to vector<16x16xf32>
    %321 = arith.maximumf %320, %319 : vector<16x16xf32>
    %322 = vector.broadcast %cst_121 : f32 to vector<16x16xf32>
    %323 = arith.minimumf %322, %321 : vector<16x16xf32>
    %324 = math.exp %323 : vector<16x16xf32>
    %325 = arith.mulf %324, %121 : vector<16x16xf32>
    %cst_122 = arith.constant dense<0.000000e+00> : vector<16xf32>
    %326 = vector.multi_reduction <add>, %325, %cst_122 [1] : vector<16x16xf32> to vector<16xf32>
    %327 = vector.shape_cast %326 : vector<16xf32> to vector<16x1xf32>
    %cst_123 = arith.constant dense<0.000000e+00> : vector<16x8xf32>
    %328 = tpu.matmul %325, %316, %cst_123 {dimension_numbers = #tpu.dot_dimension_numbers<[1], [0], [0], [1], [0, 0, 1, 1], [], []>} : vector<16x16xf32>, vector<16x8xf32>, vector<16x8xf32> -> vector<16x8xf32>
    %cst_124 = arith.constant 9.99999997E-7 : f32
    %329 = vector.broadcast %cst_124 : f32 to vector<16x1xf32>
    %330 = arith.addf %327, %329 : vector<16x1xf32>
    %331 = tpu.reciprocal %330 {approx = true} : vector<16x1xf32> -> vector<16x1xf32>
    %332 = vector.broadcast %331 : vector<16x1xf32> to vector<16x8xf32>
    %333 = arith.mulf %328, %332 : vector<16x8xf32>
    %334 = vector.extract_strided_slice %273 {offsets = [0, 24], sizes = [16, 8], strides = [1, 1]} : vector<16x96xf32> to vector<16x8xf32>
    %335 = vector.extract_strided_slice %273 {offsets = [0, 56], sizes = [16, 8], strides = [1, 1]} : vector<16x96xf32> to vector<16x8xf32>
    %336 = vector.extract_strided_slice %273 {offsets = [0, 88], sizes = [16, 8], strides = [1, 1]} : vector<16x96xf32> to vector<16x8xf32>
    "tpu.trace_start"() <{level = 10 : i32, message = "qd,kd->qk"}> : () -> ()
    %cst_125 = arith.constant dense<0.000000e+00> : vector<16x16xf32>
    %337 = tpu.matmul %334, %335, %cst_125 {dimension_numbers = #tpu.dot_dimension_numbers<[1], [1], [0], [0], [0, 0, 1, 0], [], []>} : vector<16x8xf32>, vector<16x8xf32>, vector<16x16xf32> -> vector<16x16xf32>
    "tpu.trace_stop"() : () -> ()
    %cst_126 = arith.constant 0.353553385 : f32
    %338 = vector.broadcast %cst_126 : f32 to vector<16x16xf32>
    %339 = arith.mulf %337, %338 : vector<16x16xf32>
    %cst_127 = arith.constant -5.000000e+00 : f32
    %cst_128 = arith.constant 5.000000e+00 : f32
    %340 = vector.broadcast %cst_127 : f32 to vector<16x16xf32>
    %341 = arith.maximumf %340, %339 : vector<16x16xf32>
    %342 = vector.broadcast %cst_128 : f32 to vector<16x16xf32>
    %343 = arith.minimumf %342, %341 : vector<16x16xf32>
    %344 = math.exp %343 : vector<16x16xf32>
    %345 = arith.mulf %344, %121 : vector<16x16xf32>
    %cst_129 = arith.constant dense<0.000000e+00> : vector<16xf32>
    %346 = vector.multi_reduction <add>, %345, %cst_129 [1] : vector<16x16xf32> to vector<16xf32>
    %347 = vector.shape_cast %346 : vector<16xf32> to vector<16x1xf32>
    %cst_130 = arith.constant dense<0.000000e+00> : vector<16x8xf32>
    %348 = tpu.matmul %345, %336, %cst_130 {dimension_numbers = #tpu.dot_dimension_numbers<[1], [0], [0], [1], [0, 0, 1, 1], [], []>} : vector<16x16xf32>, vector<16x8xf32>, vector<16x8xf32> -> vector<16x8xf32>
    %cst_131 = arith.constant 9.99999997E-7 : f32
    %349 = vector.broadcast %cst_131 : f32 to vector<16x1xf32>
    %350 = arith.addf %347, %349 : vector<16x1xf32>
    %351 = tpu.reciprocal %350 {approx = true} : vector<16x1xf32> -> vector<16x1xf32>
    %352 = vector.broadcast %351 : vector<16x1xf32> to vector<16x8xf32>
    %353 = arith.mulf %348, %352 : vector<16x8xf32>
    %354 = tpu.concatenate %293, %313, %333, %353 in 1 : vector<16x8xf32>, vector<16x8xf32>, vector<16x8xf32>, vector<16x8xf32> -> vector<16x32xf32>
    %c256 = arith.constant 256 : index
    %c0_132 = arith.constant 0 : index
    %355 = vector.load %arg2[%c256, %c0_132] : memref<440x128xf32, #tpu.memory_space<vmem>>, vector<32x32xf32>
    %cst_133 = arith.constant dense<0.000000e+00> : vector<16x32xf32>
    %356 = tpu.matmul %354, %355, %cst_133 {dimension_numbers = #tpu.dot_dimension_numbers<[1], [0], [0], [1], [0, 0, 1, 1], [], []>} : vector<16x32xf32>, vector<32x32xf32>, vector<16x32xf32> -> vector<16x32xf32>
    %c17 = arith.constant 17 : index
    %c0_134 = arith.constant 0 : index
    %357 = vector.load %arg3[%c17, %c0_134] : memref<32x128xf32, #tpu.memory_space<vmem>>, vector<1x32xf32>
    %358 = vector.broadcast %357 : vector<1x32xf32> to vector<16x32xf32>
    %359 = arith.addf %356, %358 : vector<16x32xf32>
    %360 = arith.addf %271, %359 : vector<16x32xf32>
    %c18 = arith.constant 18 : index
    %c0_135 = arith.constant 0 : index
    %361 = vector.load %arg3[%c18, %c0_135] : memref<32x128xf32, #tpu.memory_space<vmem>>, vector<1x32xf32>
    %c19 = arith.constant 19 : index
    %c0_136 = arith.constant 0 : index
    %362 = vector.load %arg3[%c19, %c0_136] : memref<32x128xf32, #tpu.memory_space<vmem>>, vector<1x32xf32>
    %cst_137 = arith.constant dense<0.000000e+00> : vector<16xf32>
    %363 = vector.multi_reduction <add>, %360, %cst_137 [1] : vector<16x32xf32> to vector<16xf32>
    %364 = vector.shape_cast %363 : vector<16xf32> to vector<16x1xf32>
    %cst_138 = arith.constant 3.200000e+01 : f32
    %365 = vector.broadcast %cst_138 : f32 to vector<16x1xf32>
    %366 = arith.divf %364, %365 : vector<16x1xf32>
    %367 = vector.broadcast %366 : vector<16x1xf32> to vector<16x32xf32>
    %368 = arith.subf %360, %367 : vector<16x32xf32>
    %369 = arith.mulf %368, %368 : vector<16x32xf32>
    %cst_139 = arith.constant dense<0.000000e+00> : vector<16xf32>
    %370 = vector.multi_reduction <add>, %369, %cst_139 [1] : vector<16x32xf32> to vector<16xf32>
    %371 = vector.shape_cast %370 : vector<16xf32> to vector<16x1xf32>
    %cst_140 = arith.constant 3.200000e+01 : f32
    %372 = vector.broadcast %cst_140 : f32 to vector<16x1xf32>
    %373 = arith.divf %371, %372 : vector<16x1xf32>
    %374 = vector.broadcast %366 : vector<16x1xf32> to vector<16x32xf32>
    %375 = arith.subf %360, %374 : vector<16x32xf32>
    %cst_141 = arith.constant 9.99999974E-6 : f32
    %376 = vector.broadcast %cst_141 : f32 to vector<16x1xf32>
    %377 = arith.addf %373, %376 : vector<16x1xf32>
    %378 = math.rsqrt %377 : vector<16x1xf32>
    %379 = vector.broadcast %378 : vector<16x1xf32> to vector<16x32xf32>
    %380 = arith.mulf %375, %379 : vector<16x32xf32>
    %381 = vector.broadcast %361 : vector<1x32xf32> to vector<16x32xf32>
    %382 = arith.mulf %380, %381 : vector<16x32xf32>
    %383 = vector.broadcast %362 : vector<1x32xf32> to vector<16x32xf32>
    %384 = arith.addf %382, %383 : vector<16x32xf32>
    %c288 = arith.constant 288 : index
    %c0_142 = arith.constant 0 : index
    %385 = vector.load %arg2[%c288, %c0_142] : memref<440x128xf32, #tpu.memory_space<vmem>>, vector<32x64xf32>
    %cst_143 = arith.constant dense<0.000000e+00> : vector<16x64xf32>
    %386 = tpu.matmul %384, %385, %cst_143 {dimension_numbers = #tpu.dot_dimension_numbers<[1], [0], [0], [1], [0, 0, 1, 1], [], []>} : vector<16x32xf32>, vector<32x64xf32>, vector<16x64xf32> -> vector<16x64xf32>
    %c20 = arith.constant 20 : index
    %c0_144 = arith.constant 0 : index
    %387 = vector.load %arg3[%c20, %c0_144] : memref<32x128xf32, #tpu.memory_space<vmem>>, vector<1x64xf32>
    %388 = vector.broadcast %387 : vector<1x64xf32> to vector<16x64xf32>
    %389 = arith.addf %386, %388 : vector<16x64xf32>
    %cst_145 = arith.constant 0.000000e+00 : f32
    %390 = vector.broadcast %cst_145 : f32 to vector<16x64xf32>
    %391 = arith.maximumf %389, %390 : vector<16x64xf32>
    %c320 = arith.constant 320 : index
    %c0_146 = arith.constant 0 : index
    %392 = vector.load %arg2[%c320, %c0_146] : memref<440x128xf32, #tpu.memory_space<vmem>>, vector<64x32xf32>
    %cst_147 = arith.constant dense<0.000000e+00> : vector<16x32xf32>
    %393 = tpu.matmul %391, %392, %cst_147 {dimension_numbers = #tpu.dot_dimension_numbers<[1], [0], [0], [1], [0, 0, 1, 1], [], []>} : vector<16x64xf32>, vector<64x32xf32>, vector<16x32xf32> -> vector<16x32xf32>
    %c21 = arith.constant 21 : index
    %c0_148 = arith.constant 0 : index
    %394 = vector.load %arg3[%c21, %c0_148] : memref<32x128xf32, #tpu.memory_space<vmem>>, vector<1x32xf32>
    %395 = vector.broadcast %394 : vector<1x32xf32> to vector<16x32xf32>
    %396 = arith.addf %393, %395 : vector<16x32xf32>
    %397 = arith.addf %384, %396 : vector<16x32xf32>
    %c22 = arith.constant 22 : index
    %c0_149 = arith.constant 0 : index
    %398 = vector.load %arg3[%c22, %c0_149] : memref<32x128xf32, #tpu.memory_space<vmem>>, vector<1x32xf32>
    %c23 = arith.constant 23 : index
    %c0_150 = arith.constant 0 : index
    %399 = vector.load %arg3[%c23, %c0_150] : memref<32x128xf32, #tpu.memory_space<vmem>>, vector<1x32xf32>
    %cst_151 = arith.constant dense<0.000000e+00> : vector<16xf32>
    %400 = vector.multi_reduction <add>, %397, %cst_151 [1] : vector<16x32xf32> to vector<16xf32>
    %401 = vector.shape_cast %400 : vector<16xf32> to vector<16x1xf32>
    %cst_152 = arith.constant 3.200000e+01 : f32
    %402 = vector.broadcast %cst_152 : f32 to vector<16x1xf32>
    %403 = arith.divf %401, %402 : vector<16x1xf32>
    %404 = vector.broadcast %403 : vector<16x1xf32> to vector<16x32xf32>
    %405 = arith.subf %397, %404 : vector<16x32xf32>
    %406 = arith.mulf %405, %405 : vector<16x32xf32>
    %cst_153 = arith.constant dense<0.000000e+00> : vector<16xf32>
    %407 = vector.multi_reduction <add>, %406, %cst_153 [1] : vector<16x32xf32> to vector<16xf32>
    %408 = vector.shape_cast %407 : vector<16xf32> to vector<16x1xf32>
    %cst_154 = arith.constant 3.200000e+01 : f32
    %409 = vector.broadcast %cst_154 : f32 to vector<16x1xf32>
    %410 = arith.divf %408, %409 : vector<16x1xf32>
    %411 = vector.broadcast %403 : vector<16x1xf32> to vector<16x32xf32>
    %412 = arith.subf %397, %411 : vector<16x32xf32>
    %cst_155 = arith.constant 9.99999974E-6 : f32
    %413 = vector.broadcast %cst_155 : f32 to vector<16x1xf32>
    %414 = arith.addf %410, %413 : vector<16x1xf32>
    %415 = math.rsqrt %414 : vector<16x1xf32>
    %416 = vector.broadcast %415 : vector<16x1xf32> to vector<16x32xf32>
    %417 = arith.mulf %412, %416 : vector<16x32xf32>
    %418 = vector.broadcast %398 : vector<1x32xf32> to vector<16x32xf32>
    %419 = arith.mulf %417, %418 : vector<16x32xf32>
    %420 = vector.broadcast %399 : vector<1x32xf32> to vector<16x32xf32>
    %421 = arith.addf %419, %420 : vector<16x32xf32>
    %cst_156 = arith.constant dense<0.000000e+00> : vector<32xf32>
    %422 = vector.multi_reduction <add>, %421, %cst_156 [0] : vector<16x32xf32> to vector<32xf32>
    %423 = vector.shape_cast %422 : vector<32xf32> to vector<1x32xf32>
    %cst_157 = arith.constant 1.600000e+01 : f32
    %424 = vector.broadcast %cst_157 : f32 to vector<1x32xf32>
    %425 = arith.divf %423, %424 : vector<1x32xf32>
    %c384 = arith.constant 384 : index
    %c0_158 = arith.constant 0 : index
    %426 = vector.load %arg2[%c384, %c0_158] : memref<440x128xf32, #tpu.memory_space<vmem>>, vector<32x16xf32>
    %cst_159 = arith.constant dense<0.000000e+00> : vector<1x16xf32>
    %427 = tpu.matmul %425, %426, %cst_159 {dimension_numbers = #tpu.dot_dimension_numbers<[1], [0], [0], [1], [0, 0, 1, 1], [], []>} : vector<1x32xf32>, vector<32x16xf32>, vector<1x16xf32> -> vector<1x16xf32>
    %c24_160 = arith.constant 24 : index
    %c0_161 = arith.constant 0 : index
    %428 = vector.load %arg3[%c24_160, %c0_161] : memref<32x128xf32, #tpu.memory_space<vmem>>, vector<1x16xf32>
    %429 = arith.addf %427, %428 : vector<1x16xf32>
    %cst_162 = arith.constant 0.000000e+00 : f32
    %430 = vector.broadcast %cst_162 : f32 to vector<1x16xf32>
    %431 = arith.maximumf %429, %430 : vector<1x16xf32>
    %c416 = arith.constant 416 : index
    %c0_163 = arith.constant 0 : index
    %432 = vector.load %arg2[%c416, %c0_163] : memref<440x128xf32, #tpu.memory_space<vmem>>, vector<16x8xf32>
    %cst_164 = arith.constant dense<0.000000e+00> : vector<1x8xf32>
    %433 = tpu.matmul %431, %432, %cst_164 {dimension_numbers = #tpu.dot_dimension_numbers<[1], [0], [0], [1], [0, 0, 1, 1], [], []>} : vector<1x16xf32>, vector<16x8xf32>, vector<1x8xf32> -> vector<1x8xf32>
    %c25 = arith.constant 25 : index
    %c0_165 = arith.constant 0 : index
    %434 = vector.load %arg3[%c25, %c0_165] : memref<32x128xf32, #tpu.memory_space<vmem>>, vector<1x8xf32>
    %435 = arith.addf %433, %434 : vector<1x8xf32>
    %cst_166 = arith.constant 0.000000e+00 : f32
    %436 = vector.broadcast %cst_166 : f32 to vector<1x8xf32>
    %437 = arith.maximumf %435, %436 : vector<1x8xf32>
    %c432 = arith.constant 432 : index
    %c0_167 = arith.constant 0 : index
    %438 = vector.load %arg2[%c432, %c0_167] : memref<440x128xf32, #tpu.memory_space<vmem>>, vector<8x10xf32>
    %cst_168 = arith.constant dense<0.000000e+00> : vector<1x10xf32>
    %439 = tpu.matmul %437, %438, %cst_168 {dimension_numbers = #tpu.dot_dimension_numbers<[1], [0], [0], [1], [0, 0, 1, 1], [], []>} : vector<1x8xf32>, vector<8x10xf32>, vector<1x10xf32> -> vector<1x10xf32>
    %c26 = arith.constant 26 : index
    %c0_169 = arith.constant 0 : index
    %440 = vector.load %arg3[%c26, %c0_169] : memref<32x128xf32, #tpu.memory_space<vmem>>, vector<1x10xf32>
    %441 = arith.addf %439, %440 : vector<1x10xf32>
    %c0_170 = arith.constant 0 : index
    %c0_171 = arith.constant 0 : index
    %442 = vector.load %arg4[%c0_170, %c0_171] : memref<1x10xf32, #tpu.memory_space<vmem>>, vector<1x10xf32>
    tpu.vector_store %arg4[%c0_170, %c0_171], %441 {strides = array<i32>} : memref<1x10xf32, #tpu.memory_space<vmem>>, vector<1x10xf32>,
    return
  }
}

</mosaic_0001>

<llo_original>
// kernel: sa_graph_transformer_forward.1
$region0: #{sa_graph_transformer_forward.1}
  #allocation0 [shape = 'u32[]', space=smem, size = 0x4, offset = 0x4, fixed_abs, tag = 'smem constant byte address 0x4 - core index']
  #allocation1 [shape = 'u32[72,128]{1,0:T(1,128)}', space=vmem, size = 0x9000, scoped, tag = 'internal scratch']
  %s0 = inlined_call_operand.vmem [shape: f32[16,16], index: 0, kind: input, shape index: {}]
  %s1 = inlined_call_operand.vmem [shape: f32[128,2], index: 1, kind: input, shape index: {}]
  %s2 = inlined_call_operand.hbm [shape: f32[440,128], index: 2, kind: input, shape index: {}]
  %s3 = inlined_call_operand.vmem [shape: f32[32,128], index: 3, kind: input, shape index: {}]
  %s4 = inlined_call_operand.hbm [shape: f32[1,10], index: 4, kind: output, shape index: {}]
  %s5 = sld [smem:[#allocation0]]
  $region30: #{sa_graph_transformer_forward.1} parent=0
    _
  %s7 = ssub.s32 1, %s5
  %s8 = scalar_select 0, %s7, %s5
  $region1: #{sa_graph_transformer_forward.1} parent=0
    #allocation2 [shape = 'u8[225280]{0}', space=vmem, size = 0x37000, scoped, tag = 'input window, operand 2, single buffered']
    #allocation3 [shape = 's32[1]{0}', space=sflag, size = 0x4, scoped, tag = 'scoped memory for sa_graph_transformer_forward.1']
    #allocation4 [shape = 's32[1]{0}', space=sflag, size = 0x4, scoped, tag = 'scoped memory for sa_graph_transformer_forward.1']
    #allocation5 [shape = 'u8[512]{0}', space=vmem, size = 0x400, scoped, tag = 'output window, operand 0, single buffered']
    %9 = vsyncpa [#allocation3], 0
    %10 = vsyncpa [#allocation4], 0
    // Predicated region
    $region2: #{sa_graph_transformer_forward.1} parent=1 // pred_check
      _
    $region3: #{sa_graph_transformer_forward.1} parent=1 // pred_check_branch
      %12 = sbr.rel (0) target = $region5
    $region4: #{sa_graph_transformer_forward.1} parent=1 // pred_region
      _
    $region5: #{sa_graph_transformer_forward.1} parent=1 // pred_fallthru
      _
    // Predicated region
    $region6: #{sa_graph_transformer_forward.1} parent=1 // pred_check
      _
    $region7: #{sa_graph_transformer_forward.1} parent=1 // pred_check_branch
      %14 = sbr.rel (0) target = $region9
    $region8: #{sa_graph_transformer_forward.1} parent=1 // pred_region
      _
    $region9: #{sa_graph_transformer_forward.1} parent=1 // pred_fallthru
      _
    // Predicated region
    $region10: #{sa_graph_transformer_forward.1} parent=1 // pred_check
      _
    $region11: #{sa_graph_transformer_forward.1} parent=1 // pred_check_branch
      %16 = sbr.rel (0) target = $region13
    $region12: #{sa_graph_transformer_forward.1} parent=1 // pred_region
      %18 = vsyncadd [#allocation3], 0
      %s19 = sshll.u32 %s2, 4
      %s20 = int_to_ptr.hbm [resolvable:$true] %s19
      %s21 = sshll.u32 [#allocation2], 4
      %s22 = int_to_ptr.vmem [resolvable:$true] %s21
      %27 = dma.hbm_to_vmem [thread:$0]  %s20, 7040, %s22, [#allocation3], 128, 128, 8
    $region13: #{sa_graph_transformer_forward.1} parent=1 // pred_fallthru
      _
    // Predicated region
    $region14: #{sa_graph_transformer_forward.1} parent=1 // pred_check
      _
    $region15: #{sa_graph_transformer_forward.1} parent=1 // pred_check_branch
      %29 = sbr.rel (0) target = $region17
    $region16: #{sa_graph_transformer_forward.1} parent=1 // pred_region
      _
    $region17: #{sa_graph_transformer_forward.1} parent=1 // pred_fallthru
      _
    // Predicated region
    $region18: #{sa_graph_transformer_forward.1} parent=1 // pred_check
      _
    $region19: #{sa_graph_transformer_forward.1} parent=1 // pred_check_branch
      %31 = sbr.rel (0) target = $region21
    $region20: #{sa_graph_transformer_forward.1} parent=1 // pred_region
      %33 = dma.done [#allocation3], 7040
    $region21: #{sa_graph_transformer_forward.1} parent=1 // pred_fallthru
      _
    %v34 = vld [vmem:[%s1] sm:$0xff]
    %v35 = vld [vmem:[%s1 + $0x8] sm:$0xff]
    %v36 = vld [vmem:[%s1 + $0x10] sm:$0xff]
    %v37 = vld [vmem:[%s1 + $0x18] sm:$0xff]
    %v38 = vld [vmem:[%s1 + $0x20] sm:$0xff]
    %v39 = vld [vmem:[%s1 + $0x28] sm:$0xff]
    %v40 = vld [vmem:[%s1 + $0x30] sm:$0xff]
    %v41 = vld [vmem:[%s1 + $0x38] sm:$0xff]
    %v42 = vld [vmem:[%s1 + $0x40] sm:$0xff]
    %v43 = vld [vmem:[%s1 + $0x48] sm:$0xff]
    %v44 = vld [vmem:[%s1 + $0x50] sm:$0xff]
    %v45 = vld [vmem:[%s1 + $0x58] sm:$0xff]
    %v46 = vld [vmem:[%s1 + $0x60] sm:$0xff]
    %v47 = vld [vmem:[%s1 + $0x68] sm:$0xff]
    %v48 = vld [vmem:[%s1 + $0x70] sm:$0xff]
    %v49 = vld [vmem:[%s1 + $0x78] sm:$0xff]
    %v50 = vld [vmem:[#allocation2] sm:$0x3]
    %v51 = vld [vmem:[%s3 + $0x1] sm:$0x1]
    %v52 = vperm.slane %v51, 0
    %vm53 = vcmask 15360
    %v55 = vsel %vm53, %v34, 0
    %v58 = vsel %vm53, %v35, 0
    %v61 = vsel %vm53, %v36, 0
    %v64 = vsel %vm53, %v37, 0
    %v67 = vsel %vm53, %v38, 0
    %v70 = vsel %vm53, %v39, 0
    %v73 = vsel %vm53, %v40, 0
    %v76 = vsel %vm53, %v41, 0
    %v79 = vsel %vm53, %v42, 0
    %v82 = vsel %vm53, %v43, 0
    %v85 = vsel %vm53, %v44, 0
    %v88 = vsel %vm53, %v45, 0
    %v91 = vsel %vm53, %v46, 0
    %v94 = vsel %vm53, %v47, 0
    %v97 = vsel %vm53, %v48, 0
    %v100 = vsel %vm53, %v49, 0
    %vm102 = vcmask 1041408
    %v104 = vsel %vm102, %v50, 0
    %106 = vmatpush.msra.mxu0 0.0
    %107 = vmatpush.msra.mxu0 0.0
    %108 = vmatpush.msra.mxu0 0.0
    %109 = vmatpush.msra.mxu0 0.0
    %110 = vmatpush.msra.mxu0 0.0
    %111 = vmatpush.msra.mxu0 0.0
    %112 = vmatpush.msra.mxu0 0.0
    %113 = vmatpush.msra.mxu0 0.0
    %114 = vmatpush.msra.mxu0 0.0
    %115 = vmatpush.msra.mxu0 0.0
    %116 = vmatpush.msra.mxu0 0.0
    %117 = vmatpush.msra.mxu0 0.0
    %118 = vmatpush.msra.mxu0 0.0
    %119 = vmatpush.msra.mxu0 0.0
    %120 = vmatpush.msra.mxu0 0.0
    %121 = vmatpush.msra.mxu0 %v104
    %122 = vmatmul.f32.gmra.mxu0 %v55
    %v123 = vpop.f32.mrf.mxu0
    %v124 = vadd.f32 %v52, %v123
    %125 = vmatmul.f32.gmra.mxu0 %v58
    %v126 = vpop.f32.mrf.mxu0
    %v127 = vadd.f32 %v52, %v126
    %128 = vmatmul.f32.gmra.mxu0 %v61
    %v129 = vpop.f32.mrf.mxu0
    %v130 = vadd.f32 %v52, %v129
    %131 = vmatmul.f32.gmra.mxu0 %v64
    %v132 = vpop.f32.mrf.mxu0
    %v133 = vadd.f32 %v52, %v132
    %134 = vmatmul.f32.gmra.mxu0 %v67
    %v135 = vpop.f32.mrf.mxu0
    %v136 = vadd.f32 %v52, %v135
    %137 = vmatmul.f32.gmra.mxu0 %v70
    %v138 = vpop.f32.mrf.mxu0
    %v139 = vadd.f32 %v52, %v138
    %140 = vmatmul.f32.gmra.mxu0 %v73
    %v141 = vpop.f32.mrf.mxu0
    %v142 = vadd.f32 %v52, %v141
    %143 = vmatmul.f32.gmra.mxu0 %v76
    %v144 = vpop.f32.mrf.mxu0
    %v145 = vadd.f32 %v52, %v144
    %146 = vmatmul.f32.gmra.mxu0 %v79
    %v147 = vpop.f32.mrf.mxu0
    %v148 = vadd.f32 %v52, %v147
    %149 = vmatmul.f32.gmra.mxu0 %v82
    %v150 = vpop.f32.mrf.mxu0
    %v151 = vadd.f32 %v52, %v150
    %152 = vmatmul.f32.gmra.mxu0 %v85
    %v153 = vpop.f32.mrf.mxu0
    %v154 = vadd.f32 %v52, %v153
    %155 = vmatmul.f32.gmra.mxu0 %v88
    %v156 = vpop.f32.mrf.mxu0
    %v157 = vadd.f32 %v52, %v156
    %158 = vmatmul.f32.gmra.mxu0 %v91
    %v159 = vpop.f32.mrf.mxu0
    %v160 = vadd.f32 %v52, %v159
    %161 = vmatmul.f32.gmra.mxu0 %v94
    %v162 = vpop.f32.mrf.mxu0
    %v163 = vadd.f32 %v52, %v162
    %164 = vmatmul.f32.gmra.mxu0 %v97
    %v165 = vpop.f32.mrf.mxu0
    %v166 = vadd.f32 %v52, %v165
    %167 = vmatmul.f32.gmra.mxu0 %v100
    %v168 = vpop.f32.mrf.mxu0
    %v169 = vadd.f32 %v52, %v168
    %170 = vdwg.mxu0
    %v171 = vld [vmem:[#allocation2 + $0x8] sm:$0xff]
    %v172 = vld [vmem:[%s3 + $0x2] sm:$0x1]
    %v173 = vperm.slane %v172, 0
    %vm174 = vcmask 64512
    %v176 = vsel %vm174, %v124, 0
    %v179 = vsel %vm174, %v127, 0
    %v182 = vsel %vm174, %v130, 0
    %v185 = vsel %vm174, %v133, 0
    %v188 = vsel %vm174, %v136, 0
    %v191 = vsel %vm174, %v139, 0
    %v194 = vsel %vm174, %v142, 0
    %v197 = vsel %vm174, %v145, 0
    %v200 = vsel %vm174, %v148, 0
    %v203 = vsel %vm174, %v151, 0
    %v206 = vsel %vm174, %v154, 0
    %v209 = vsel %vm174, %v157, 0
    %v212 = vsel %vm174, %v160, 0
    %v215 = vsel %vm174, %v163, 0
    %v218 = vsel %vm174, %v166, 0
    %v221 = vsel %vm174, %v169, 0
    %223 = vmatpush.msra.mxu0 0.0
    %224 = vmatpush.msra.mxu0 0.0
    %225 = vmatpush.msra.mxu0 0.0
    %226 = vmatpush.msra.mxu0 0.0
    %227 = vmatpush.msra.mxu0 0.0
    %228 = vmatpush.msra.mxu0 0.0
    %229 = vmatpush.msra.mxu0 0.0
    %230 = vmatpush.msra.mxu0 0.0
    %231 = vmatpush.msra.mxu0 0.0
    %232 = vmatpush.msra.mxu0 0.0
    %233 = vmatpush.msra.mxu0 0.0
    %234 = vmatpush.msra.mxu0 0.0
    %235 = vmatpush.msra.mxu0 0.0
    %236 = vmatpush.msra.mxu0 0.0
    %237 = vmatpush.msra.mxu0 0.0
    %238 = vmatpush.msra.mxu0 %v171
    %239 = vmatmul.f32.gmra.mxu0 %v176
    %v240 = vpop.f32.mrf.mxu0
    %v241 = vadd.f32 %v173, %v240
    %242 = vmatmul.f32.gmra.mxu0 %v179
    %v243 = vpop.f32.mrf.mxu0
    %v244 = vadd.f32 %v173, %v243
    %245 = vmatmul.f32.gmra.mxu0 %v182
    %v246 = vpop.f32.mrf.mxu0
    %v247 = vadd.f32 %v173, %v246
    %248 = vmatmul.f32.gmra.mxu0 %v185
    %v249 = vpop.f32.mrf.mxu0
    %v250 = vadd.f32 %v173, %v249
    %251 = vmatmul.f32.gmra.mxu0 %v188
    %v252 = vpop.f32.mrf.mxu0
    %v253 = vadd.f32 %v173, %v252
    %254 = vmatmul.f32.gmra.mxu0 %v191
    %v255 = vpop.f32.mrf.mxu0
    %v256 = vadd.f32 %v173, %v255
    %257 = vmatmul.f32.gmra.mxu0 %v194
    %v258 = vpop.f32.mrf.mxu0
    %v259 = vadd.f32 %v173, %v258
    %260 = vmatmul.f32.gmra.mxu0 %v197
    %v261 = vpop.f32.mrf.mxu0
    %v262 = vadd.f32 %v173, %v261
    %263 = vmatmul.f32.gmra.mxu0 %v200
    %v264 = vpop.f32.mrf.mxu0
    %v265 = vadd.f32 %v173, %v264
    %266 = vmatmul.f32.gmra.mxu0 %v203
    %v267 = vpop.f32.mrf.mxu0
    %v268 = vadd.f32 %v173, %v267
    %269 = vmatmul.f32.gmra.mxu0 %v206
    %v270 = vpop.f32.mrf.mxu0
    %v271 = vadd.f32 %v173, %v270
    %272 = vmatmul.f32.gmra.mxu0 %v209
    %v273 = vpop.f32.mrf.mxu0
    %v274 = vadd.f32 %v173, %v273
    %275 = vmatmul.f32.gmra.mxu0 %v212
    %v276 = vpop.f32.mrf.mxu0
    %v277 = vadd.f32 %v173, %v276
    %278 = vmatmul.f32.gmra.mxu0 %v215
    %v279 = vpop.f32.mrf.mxu0
    %v280 = vadd.f32 %v173, %v279
    %281 = vmatmul.f32.gmra.mxu0 %v218
    %v282 = vpop.f32.mrf.mxu0
    %v283 = vadd.f32 %v173, %v282
    %284 = vmatmul.f32.gmra.mxu0 %v221
    %v285 = vpop.f32.mrf.mxu0
    %v286 = vadd.f32 %v173, %v285
    %287 = vdwg.mxu0
    %289 = vrot.lane.b32.xlu0 %v241, 120
    %v290 = vpop.permute.xlu0 %289
    %vm291 = vcmask 31744
    %v292 = vsel %vm291, %v241, 0
    %v294 = vsel %vm291, %v290, 0
    %296 = vmatpush.xpose.msra.mxu0 0.0
    %297 = vmatpush.xpose.msra.mxu0 0.0
    %298 = vmatpush.xpose.msra.mxu0 0.0
    %299 = vmatpush.xpose.msra.mxu0 0.0
    %300 = vmatpush.xpose.msra.mxu0 0.0
    %301 = vmatpush.xpose.msra.mxu0 0.0
    %302 = vmatpush.xpose.msra.mxu0 0.0
    %303 = vmatpush.xpose.msra.mxu0 0.0
    %304 = vmatpush.xpose.msra.mxu0 0.0
    %305 = vmatpush.xpose.msra.mxu0 0.0
    %306 = vmatpush.xpose.msra.mxu0 0.0
    %307 = vmatpush.xpose.msra.mxu0 0.0
    %308 = vmatpush.xpose.msra.mxu0 0.0
    %309 = vmatpush.xpose.msra.mxu0 0.0
    %310 = vmatpush.xpose.msra.mxu0 0.0
    %311 = vmatpush.xpose.msra.mxu0 %v294
    %312 = vmatmul.f32.gmra.mxu0 %v292
    %v313 = vpop.f32.mrf.mxu0
    %v314 = vadd.f32 0.0, %v313
    %315 = vdwg.mxu0
    %317 = vrot.lane.b32.xlu0 %v244, 120
    %v318 = vpop.permute.xlu0 %317
    %v319 = vsel %vm291, %v244, 0
    %v321 = vsel %vm291, %v318, 0
    %323 = vmatpush.xpose.msra.mxu0 0.0
    %324 = vmatpush.xpose.msra.mxu0 0.0
    %325 = vmatpush.xpose.msra.mxu0 0.0
    %326 = vmatpush.xpose.msra.mxu0 0.0
    %327 = vmatpush.xpose.msra.mxu0 0.0
    %328 = vmatpush.xpose.msra.mxu0 0.0
    %329 = vmatpush.xpose.msra.mxu0 0.0
    %330 = vmatpush.xpose.msra.mxu0 0.0
    %331 = vmatpush.xpose.msra.mxu0 0.0
    %332 = vmatpush.xpose.msra.mxu0 0.0
    %333 = vmatpush.xpose.msra.mxu0 0.0
    %334 = vmatpush.xpose.msra.mxu0 0.0
    %335 = vmatpush.xpose.msra.mxu0 0.0
    %336 = vmatpush.xpose.msra.mxu0 0.0
    %337 = vmatpush.xpose.msra.mxu0 0.0
    %338 = vmatpush.xpose.msra.mxu0 %v321
    %339 = vmatmul.f32.gmra.mxu0 %v319
    %v340 = vpop.f32.mrf.mxu0
    %v341 = vadd.f32 0.0, %v340
    %342 = vdwg.mxu0
    %344 = vrot.lane.b32.xlu0 %v247, 120
    %v345 = vpop.permute.xlu0 %344
    %v346 = vsel %vm291, %v247, 0
    %v348 = vsel %vm291, %v345, 0
    %350 = vmatpush.xpose.msra.mxu0 0.0
    %351 = vmatpush.xpose.msra.mxu0 0.0
    %352 = vmatpush.xpose.msra.mxu0 0.0
    %353 = vmatpush.xpose.msra.mxu0 0.0
    %354 = vmatpush.xpose.msra.mxu0 0.0
    %355 = vmatpush.xpose.msra.mxu0 0.0
    %356 = vmatpush.xpose.msra.mxu0 0.0
    %357 = vmatpush.xpose.msra.mxu0 0.0
    %358 = vmatpush.xpose.msra.mxu0 0.0
    %359 = vmatpush.xpose.msra.mxu0 0.0
    %360 = vmatpush.xpose.msra.mxu0 0.0
    %361 = vmatpush.xpose.msra.mxu0 0.0
    %362 = vmatpush.xpose.msra.mxu0 0.0
    %363 = vmatpush.xpose.msra.mxu0 0.0
    %364 = vmatpush.xpose.msra.mxu0 0.0
    %365 = vmatpush.xpose.msra.mxu0 %v348
    %366 = vmatmul.f32.gmra.mxu0 %v346
    %v367 = vpop.f32.mrf.mxu0
    %v368 = vadd.f32 0.0, %v367
    %369 = vdwg.mxu0
    %371 = vrot.lane.b32.xlu0 %v250, 120
    %v372 = vpop.permute.xlu0 %371
    %v373 = vsel %vm291, %v250, 0
    %v375 = vsel %vm291, %v372, 0
    %377 = vmatpush.xpose.msra.mxu0 0.0
    %378 = vmatpush.xpose.msra.mxu0 0.0
    %379 = vmatpush.xpose.msra.mxu0 0.0
    %380 = vmatpush.xpose.msra.mxu0 0.0
    %381 = vmatpush.xpose.msra.mxu0 0.0
    %382 = vmatpush.xpose.msra.mxu0 0.0
    %383 = vmatpush.xpose.msra.mxu0 0.0
    %384 = vmatpush.xpose.msra.mxu0 0.0
    %385 = vmatpush.xpose.msra.mxu0 0.0
    %386 = vmatpush.xpose.msra.mxu0 0.0
    %387 = vmatpush.xpose.msra.mxu0 0.0
    %388 = vmatpush.xpose.msra.mxu0 0.0
    %389 = vmatpush.xpose.msra.mxu0 0.0
    %390 = vmatpush.xpose.msra.mxu0 0.0
    %391 = vmatpush.xpose.msra.mxu0 0.0
    %392 = vmatpush.xpose.msra.mxu0 %v375
    %393 = vmatmul.f32.gmra.mxu0 %v373
    %v394 = vpop.f32.mrf.mxu0
    %v395 = vadd.f32 0.0, %v394
    %396 = vdwg.mxu0
    %398 = vrot.lane.b32.xlu0 %v253, 120
    %v399 = vpop.permute.xlu0 %398
    %v400 = vsel %vm291, %v253, 0
    %v402 = vsel %vm291, %v399, 0
    %404 = vmatpush.xpose.msra.mxu0 0.0
    %405 = vmatpush.xpose.msra.mxu0 0.0
    %406 = vmatpush.xpose.msra.mxu0 0.0
    %407 = vmatpush.xpose.msra.mxu0 0.0
    %408 = vmatpush.xpose.msra.mxu0 0.0
    %409 = vmatpush.xpose.msra.mxu0 0.0
    %410 = vmatpush.xpose.msra.mxu0 0.0
    %411 = vmatpush.xpose.msra.mxu0 0.0
    %412 = vmatpush.xpose.msra.mxu0 0.0
    %413 = vmatpush.xpose.msra.mxu0 0.0
    %414 = vmatpush.xpose.msra.mxu0 0.0
    %415 = vmatpush.xpose.msra.mxu0 0.0
    %416 = vmatpush.xpose.msra.mxu0 0.0
    %417 = vmatpush.xpose.msra.mxu0 0.0
    %418 = vmatpush.xpose.msra.mxu0 0.0
    %419 = vmatpush.xpose.msra.mxu0 %v402
    %420 = vmatmul.f32.gmra.mxu0 %v400
    %v421 = vpop.f32.mrf.mxu0
    %v422 = vadd.f32 0.0, %v421
    %423 = vdwg.mxu0
    %425 = vrot.lane.b32.xlu0 %v256, 120
    %v426 = vpop.permute.xlu0 %425
    %v427 = vsel %vm291, %v256, 0
    %v429 = vsel %vm291, %v426, 0
    %431 = vmatpush.xpose.msra.mxu0 0.0
    %432 = vmatpush.xpose.msra.mxu0 0.0
    %433 = vmatpush.xpose.msra.mxu0 0.0
    %434 = vmatpush.xpose.msra.mxu0 0.0
    %435 = vmatpush.xpose.msra.mxu0 0.0
    %436 = vmatpush.xpose.msra.mxu0 0.0
    %437 = vmatpush.xpose.msra.mxu0 0.0
    %438 = vmatpush.xpose.msra.mxu0 0.0
    %439 = vmatpush.xpose.msra.mxu0 0.0
    %440 = vmatpush.xpose.msra.mxu0 0.0
    %441 = vmatpush.xpose.msra.mxu0 0.0
    %442 = vmatpush.xpose.msra.mxu0 0.0
    %443 = vmatpush.xpose.msra.mxu0 0.0
    %444 = vmatpush.xpose.msra.mxu0 0.0
    %445 = vmatpush.xpose.msra.mxu0 0.0
    %446 = vmatpush.xpose.msra.mxu0 %v429
    %447 = vmatmul.f32.gmra.mxu0 %v427
    %v448 = vpop.f32.mrf.mxu0
    %v449 = vadd.f32 0.0, %v448
    %450 = vdwg.mxu0
    %452 = vrot.lane.b32.xlu0 %v259, 120
    %v453 = vpop.permute.xlu0 %452
    %v454 = vsel %vm291, %v259, 0
    %v456 = vsel %vm291, %v453, 0
    %458 = vmatpush.xpose.msra.mxu0 0.0
    %459 = vmatpush.xpose.msra.mxu0 0.0
    %460 = vmatpush.xpose.msra.mxu0 0.0
    %461 = vmatpush.xpose.msra.mxu0 0.0
    %462 = vmatpush.xpose.msra.mxu0 0.0
    %463 = vmatpush.xpose.msra.mxu0 0.0
    %464 = vmatpush.xpose.msra.mxu0 0.0
    %465 = vmatpush.xpose.msra.mxu0 0.0
    %466 = vmatpush.xpose.msra.mxu0 0.0
    %467 = vmatpush.xpose.msra.mxu0 0.0
    %468 = vmatpush.xpose.msra.mxu0 0.0
    %469 = vmatpush.xpose.msra.mxu0 0.0
    %470 = vmatpush.xpose.msra.mxu0 0.0
    %471 = vmatpush.xpose.msra.mxu0 0.0
    %472 = vmatpush.xpose.msra.mxu0 0.0
    %473 = vmatpush.xpose.msra.mxu0 %v456
    %474 = vmatmul.f32.gmra.mxu0 %v454
    %v475 = vpop.f32.mrf.mxu0
    %v476 = vadd.f32 0.0, %v475
    %477 = vdwg.mxu0
    %479 = vrot.lane.b32.xlu0 %v262, 120
    %v480 = vpop.permute.xlu0 %479
    %v481 = vsel %vm291, %v262, 0
    %v483 = vsel %vm291, %v480, 0
    %485 = vmatpush.xpose.msra.mxu0 0.0
    %486 = vmatpush.xpose.msra.mxu0 0.0
    %487 = vmatpush.xpose.msra.mxu0 0.0
    %488 = vmatpush.xpose.msra.mxu0 0.0
    %489 = vmatpush.xpose.msra.mxu0 0.0
    %490 = vmatpush.xpose.msra.mxu0 0.0
    %491 = vmatpush.xpose.msra.mxu0 0.0
    %492 = vmatpush.xpose.msra.mxu0 0.0
    %493 = vmatpush.xpose.msra.mxu0 0.0
    %494 = vmatpush.xpose.msra.mxu0 0.0
    %495 = vmatpush.xpose.msra.mxu0 0.0
    %496 = vmatpush.xpose.msra.mxu0 0.0
    %497 = vmatpush.xpose.msra.mxu0 0.0
    %498 = vmatpush.xpose.msra.mxu0 0.0
    %499 = vmatpush.xpose.msra.mxu0 0.0
    %500 = vmatpush.xpose.msra.mxu0 %v483
    %501 = vmatmul.f32.gmra.mxu0 %v481
    %v502 = vpop.f32.mrf.mxu0
    %v503 = vadd.f32 0.0, %v502
    %504 = vdwg.mxu0
    %506 = vrot.lane.b32.xlu0 %v265, 120
    %v507 = vpop.permute.xlu0 %506
    %v508 = vsel %vm291, %v265, 0
    %v510 = vsel %vm291, %v507, 0
    %512 = vmatpush.xpose.msra.mxu0 0.0
    %513 = vmatpush.xpose.msra.mxu0 0.0
    %514 = vmatpush.xpose.msra.mxu0 0.0
    %515 = vmatpush.xpose.msra.mxu0 0.0
    %516 = vmatpush.xpose.msra.mxu0 0.0
    %517 = vmatpush.xpose.msra.mxu0 0.0
    %518 = vmatpush.xpose.msra.mxu0 0.0
    %519 = vmatpush.xpose.msra.mxu0 0.0
    %520 = vmatpush.xpose.msra.mxu0 0.0
    %521 = vmatpush.xpose.msra.mxu0 0.0
    %522 = vmatpush.xpose.msra.mxu0 0.0
    %523 = vmatpush.xpose.msra.mxu0 0.0
    %524 = vmatpush.xpose.msra.mxu0 0.0
    %525 = vmatpush.xpose.msra.mxu0 0.0
    %526 = vmatpush.xpose.msra.mxu0 0.0
    %527 = vmatpush.xpose.msra.mxu0 %v510
    %528 = vmatmul.f32.gmra.mxu0 %v508
    %v529 = vpop.f32.mrf.mxu0
    %v530 = vadd.f32 0.0, %v529
    %531 = vdwg.mxu0
    %533 = vrot.lane.b32.xlu0 %v268, 120
    %v534 = vpop.permute.xlu0 %533
    %v535 = vsel %vm291, %v268, 0
    %v537 = vsel %vm291, %v534, 0
    %539 = vmatpush.xpose.msra.mxu0 0.0
    %540 = vmatpush.xpose.msra.mxu0 0.0
    %541 = vmatpush.xpose.msra.mxu0 0.0
    %542 = vmatpush.xpose.msra.mxu0 0.0
    %543 = vmatpush.xpose.msra.mxu0 0.0
    %544 = vmatpush.xpose.msra.mxu0 0.0
    %545 = vmatpush.xpose.msra.mxu0 0.0
    %546 = vmatpush.xpose.msra.mxu0 0.0
    %547 = vmatpush.xpose.msra.mxu0 0.0
    %548 = vmatpush.xpose.msra.mxu0 0.0
    %549 = vmatpush.xpose.msra.mxu0 0.0
    %550 = vmatpush.xpose.msra.mxu0 0.0
    %551 = vmatpush.xpose.msra.mxu0 0.0
    %552 = vmatpush.xpose.msra.mxu0 0.0
    %553 = vmatpush.xpose.msra.mxu0 0.0
    %554 = vmatpush.xpose.msra.mxu0 %v537
    %555 = vmatmul.f32.gmra.mxu0 %v535
    %v556 = vpop.f32.mrf.mxu0
    %v557 = vadd.f32 0.0, %v556
    %558 = vdwg.mxu0
    %560 = vrot.lane.b32.xlu0 %v271, 120
    %v561 = vpop.permute.xlu0 %560
    %v562 = vsel %vm291, %v271, 0
    %v564 = vsel %vm291, %v561, 0
    %566 = vmatpush.xpose.msra.mxu0 0.0
    %567 = vmatpush.xpose.msra.mxu0 0.0
    %568 = vmatpush.xpose.msra.mxu0 0.0
    %569 = vmatpush.xpose.msra.mxu0 0.0
    %570 = vmatpush.xpose.msra.mxu0 0.0
    %571 = vmatpush.xpose.msra.mxu0 0.0
    %572 = vmatpush.xpose.msra.mxu0 0.0
    %573 = vmatpush.xpose.msra.mxu0 0.0
    %574 = vmatpush.xpose.msra.mxu0 0.0
    %575 = vmatpush.xpose.msra.mxu0 0.0
    %576 = vmatpush.xpose.msra.mxu0 0.0
    %577 = vmatpush.xpose.msra.mxu0 0.0
    %578 = vmatpush.xpose.msra.mxu0 0.0
    %579 = vmatpush.xpose.msra.mxu0 0.0
    %580 = vmatpush.xpose.msra.mxu0 0.0
    %581 = vmatpush.xpose.msra.mxu0 %v564
    %582 = vmatmul.f32.gmra.mxu0 %v562
    %v583 = vpop.f32.mrf.mxu0
    %v584 = vadd.f32 0.0, %v583
    %585 = vdwg.mxu0
    %587 = vrot.lane.b32.xlu0 %v274, 120
    %v588 = vpop.permute.xlu0 %587
    %v589 = vsel %vm291, %v274, 0
    %v591 = vsel %vm291, %v588, 0
    %593 = vmatpush.xpose.msra.mxu0 0.0
    %594 = vmatpush.xpose.msra.mxu0 0.0
    %595 = vmatpush.xpose.msra.mxu0 0.0
    %596 = vmatpush.xpose.msra.mxu0 0.0
    %597 = vmatpush.xpose.msra.mxu0 0.0
    %598 = vmatpush.xpose.msra.mxu0 0.0
    %599 = vmatpush.xpose.msra.mxu0 0.0
    %600 = vmatpush.xpose.msra.mxu0 0.0
    %601 = vmatpush.xpose.msra.mxu0 0.0
    %602 = vmatpush.xpose.msra.mxu0 0.0
    %603 = vmatpush.xpose.msra.mxu0 0.0
    %604 = vmatpush.xpose.msra.mxu0 0.0
    %605 = vmatpush.xpose.msra.mxu0 0.0
    %606 = vmatpush.xpose.msra.mxu0 0.0
    %607 = vmatpush.xpose.msra.mxu0 0.0
    %608 = vmatpush.xpose.msra.mxu0 %v591
    %609 = vmatmul.f32.gmra.mxu0 %v589
    %v610 = vpop.f32.mrf.mxu0
    %v611 = vadd.f32 0.0, %v610
    %612 = vdwg.mxu0
    %614 = vrot.lane.b32.xlu0 %v277, 120
    %v615 = vpop.permute.xlu0 %614
    %v616 = vsel %vm291, %v277, 0
    %v618 = vsel %vm291, %v615, 0
    %620 = vmatpush.xpose.msra.mxu0 0.0
    %621 = vmatpush.xpose.msra.mxu0 0.0
    %622 = vmatpush.xpose.msra.mxu0 0.0
    %623 = vmatpush.xpose.msra.mxu0 0.0
    %624 = vmatpush.xpose.msra.mxu0 0.0
    %625 = vmatpush.xpose.msra.mxu0 0.0
    %626 = vmatpush.xpose.msra.mxu0 0.0
    %627 = vmatpush.xpose.msra.mxu0 0.0
    %628 = vmatpush.xpose.msra.mxu0 0.0
    %629 = vmatpush.xpose.msra.mxu0 0.0
    %630 = vmatpush.xpose.msra.mxu0 0.0
    %631 = vmatpush.xpose.msra.mxu0 0.0
    %632 = vmatpush.xpose.msra.mxu0 0.0
    %633 = vmatpush.xpose.msra.mxu0 0.0
    %634 = vmatpush.xpose.msra.mxu0 0.0
    %635 = vmatpush.xpose.msra.mxu0 %v618
    %636 = vmatmul.f32.gmra.mxu0 %v616
    %v637 = vpop.f32.mrf.mxu0
    %v638 = vadd.f32 0.0, %v637
    %639 = vdwg.mxu0
    %641 = vrot.lane.b32.xlu0 %v280, 120
    %v642 = vpop.permute.xlu0 %641
    %v643 = vsel %vm291, %v280, 0
    %v645 = vsel %vm291, %v642, 0
    %647 = vmatpush.xpose.msra.mxu0 0.0
    %648 = vmatpush.xpose.msra.mxu0 0.0
    %649 = vmatpush.xpose.msra.mxu0 0.0
    %650 = vmatpush.xpose.msra.mxu0 0.0
    %651 = vmatpush.xpose.msra.mxu0 0.0
    %652 = vmatpush.xpose.msra.mxu0 0.0
    %653 = vmatpush.xpose.msra.mxu0 0.0
    %654 = vmatpush.xpose.msra.mxu0 0.0
    %655 = vmatpush.xpose.msra.mxu0 0.0
    %656 = vmatpush.xpose.msra.mxu0 0.0
    %657 = vmatpush.xpose.msra.mxu0 0.0
    %658 = vmatpush.xpose.msra.mxu0 0.0
    %659 = vmatpush.xpose.msra.mxu0 0.0
    %660 = vmatpush.xpose.msra.mxu0 0.0
    %661 = vmatpush.xpose.msra.mxu0 0.0
    %662 = vmatpush.xpose.msra.mxu0 %v645
    %663 = vmatmul.f32.gmra.mxu0 %v643
    %v664 = vpop.f32.mrf.mxu0
    %v665 = vadd.f32 0.0, %v664
    %666 = vdwg.mxu0
    %668 = vrot.lane.b32.xlu0 %v283, 120
    %v669 = vpop.permute.xlu0 %668
    %v670 = vsel %vm291, %v283, 0
    %v672 = vsel %vm291, %v669, 0
    %674 = vmatpush.xpose.msra.mxu0 0.0
    %675 = vmatpush.xpose.msra.mxu0 0.0
    %676 = vmatpush.xpose.msra.mxu0 0.0
    %677 = vmatpush.xpose.msra.mxu0 0.0
    %678 = vmatpush.xpose.msra.mxu0 0.0
    %679 = vmatpush.xpose.msra.mxu0 0.0
    %680 = vmatpush.xpose.msra.mxu0 0.0
    %681 = vmatpush.xpose.msra.mxu0 0.0
    %682 = vmatpush.xpose.msra.mxu0 0.0
    %683 = vmatpush.xpose.msra.mxu0 0.0
    %684 = vmatpush.xpose.msra.mxu0 0.0
    %685 = vmatpush.xpose.msra.mxu0 0.0
    %686 = vmatpush.xpose.msra.mxu0 0.0
    %687 = vmatpush.xpose.msra.mxu0 0.0
    %688 = vmatpush.xpose.msra.mxu0 0.0
    %689 = vmatpush.xpose.msra.mxu0 %v672
    %690 = vmatmul.f32.gmra.mxu0 %v670
    %v691 = vpop.f32.mrf.mxu0
    %v692 = vadd.f32 0.0, %v691
    %693 = vdwg.mxu0
    %695 = vrot.lane.b32.xlu0 %v286, 120
    %v696 = vpop.permute.xlu0 %695
    %v697 = vsel %vm291, %v286, 0
    %v699 = vsel %vm291, %v696, 0
    %701 = vmatpush.xpose.msra.mxu0 0.0
    %702 = vmatpush.xpose.msra.mxu0 0.0
    %703 = vmatpush.xpose.msra.mxu0 0.0
    %704 = vmatpush.xpose.msra.mxu0 0.0
    %705 = vmatpush.xpose.msra.mxu0 0.0
    %706 = vmatpush.xpose.msra.mxu0 0.0
    %707 = vmatpush.xpose.msra.mxu0 0.0
    %708 = vmatpush.xpose.msra.mxu0 0.0
    %709 = vmatpush.xpose.msra.mxu0 0.0
    %710 = vmatpush.xpose.msra.mxu0 0.0
    %711 = vmatpush.xpose.msra.mxu0 0.0
    %712 = vmatpush.xpose.msra.mxu0 0.0
    %713 = vmatpush.xpose.msra.mxu0 0.0
    %714 = vmatpush.xpose.msra.mxu0 0.0
    %715 = vmatpush.xpose.msra.mxu0 0.0
    %716 = vmatpush.xpose.msra.mxu0 %v699
    %717 = vmatmul.f32.gmra.mxu0 %v697
    %v718 = vpop.f32.mrf.mxu0
    %v719 = vadd.f32 0.0, %v718
    %720 = vdwg.mxu0
    %v721 = vmul.f32 %v314, 0.5
    %v722 = vmul.f32 %v341, 0.5
    %v723 = vmul.f32 %v368, 0.5
    %v724 = vmul.f32 %v395, 0.5
    %v725 = vmul.f32 %v422, 0.5
    %v726 = vmul.f32 %v449, 0.5
    %v727 = vmul.f32 %v476, 0.5
    %v728 = vmul.f32 %v503, 0.5
    %v729 = vmul.f32 %v530, 0.5
    %v730 = vmul.f32 %v557, 0.5
    %v731 = vmul.f32 %v584, 0.5
    %v732 = vmul.f32 %v611, 0.5
    %v733 = vmul.f32 %v638, 0.5
    %v734 = vmul.f32 %v665, 0.5
    %v735 = vmul.f32 %v692, 0.5
    %v736 = vmul.f32 %v719, 0.5
    %v737 = vsel %vm174, %v721, -inf
    %738 = vmax.xlane.f32.xlu0 %v737
    %v739 = vpop.xlane.xlu0 %738
    %v740 = vsel %vm174, %v722, -inf
    %741 = vmax.xlane.f32.xlu0 %v740
    %v742 = vpop.xlane.xlu0 %741
    %v743 = vsel %vm174, %v723, -inf
    %744 = vmax.xlane.f32.xlu0 %v743
    %v745 = vpop.xlane.xlu0 %744
    %v746 = vsel %vm174, %v724, -inf
    %747 = vmax.xlane.f32.xlu0 %v746
    %v748 = vpop.xlane.xlu0 %747
    %v749 = vsel %vm174, %v725, -inf
    %750 = vmax.xlane.f32.xlu0 %v749
    %v751 = vpop.xlane.xlu0 %750
    %v752 = vsel %vm174, %v726, -inf
    %753 = vmax.xlane.f32.xlu0 %v752
    %v754 = vpop.xlane.xlu0 %753
    %v755 = vsel %vm174, %v727, -inf
    %756 = vmax.xlane.f32.xlu0 %v755
    %v757 = vpop.xlane.xlu0 %756
    %v758 = vsel %vm174, %v728, -inf
    %759 = vmax.xlane.f32.xlu0 %v758
    %v760 = vpop.xlane.xlu0 %759
    %v761 = vsel %vm174, %v729, -inf
    %762 = vmax.xlane.f32.xlu0 %v761
    %v763 = vpop.xlane.xlu0 %762
    %v764 = vsel %vm174, %v730, -inf
    %765 = vmax.xlane.f32.xlu0 %v764
    %v766 = vpop.xlane.xlu0 %765
    %v767 = vsel %vm174, %v731, -inf
    %768 = vmax.xlane.f32.xlu0 %v767
    %v769 = vpop.xlane.xlu0 %768
    %v770 = vsel %vm174, %v732, -inf
    %771 = vmax.xlane.f32.xlu0 %v770
    %v772 = vpop.xlane.xlu0 %771
    %v773 = vsel %vm174, %v733, -inf
    %774 = vmax.xlane.f32.xlu0 %v773
    %v775 = vpop.xlane.xlu0 %774
    %v776 = vsel %vm174, %v734, -inf
    %777 = vmax.xlane.f32.xlu0 %v776
    %v778 = vpop.xlane.xlu0 %777
    %v779 = vsel %vm174, %v735, -inf
    %780 = vmax.xlane.f32.xlu0 %v779
    %v781 = vpop.xlane.xlu0 %780
    %v782 = vsel %vm174, %v736, -inf
    %783 = vmax.xlane.f32.xlu0 %v782
    %v784 = vpop.xlane.xlu0 %783
    %v785 = vsub.f32 %v721, %v739
    %v786 = vsub.f32 %v722, %v742
    %v787 = vsub.f32 %v723, %v745
    %v788 = vsub.f32 %v724, %v748
    %v789 = vsub.f32 %v725, %v751
    %v790 = vsub.f32 %v726, %v754
    %v791 = vsub.f32 %v727, %v757
    %v792 = vsub.f32 %v728, %v760
    %v793 = vsub.f32 %v729, %v763
    %v794 = vsub.f32 %v730, %v766
    %v795 = vsub.f32 %v731, %v769
    %v796 = vsub.f32 %v732, %v772
    %v797 = vsub.f32 %v733, %v775
    %v798 = vsub.f32 %v734, %v778
    %v799 = vsub.f32 %v735, %v781
    %v800 = vsub.f32 %v736, %v784
    %v801 = vmul.f32 %v785, 1.442695
    %v802 = vpow.pop %v801
    %v803 = vmul.f32 %v786, 1.442695
    %v804 = vpow.pop %v803
    %v805 = vmul.f32 %v787, 1.442695
    %v806 = vpow.pop %v805
    %v807 = vmul.f32 %v788, 1.442695
    %v808 = vpow.pop %v807
    %v809 = vmul.f32 %v789, 1.442695
    %v810 = vpow.pop %v809
    %v811 = vmul.f32 %v790, 1.442695
    %v812 = vpow.pop %v811
    %v813 = vmul.f32 %v791, 1.442695
    %v814 = vpow.pop %v813
    %v815 = vmul.f32 %v792, 1.442695
    %v816 = vpow.pop %v815
    %v817 = vmul.f32 %v793, 1.442695
    %v818 = vpow.pop %v817
    %v819 = vmul.f32 %v794, 1.442695
    %v820 = vpow.pop %v819
    %v821 = vmul.f32 %v795, 1.442695
    %v822 = vpow.pop %v821
    %v823 = vmul.f32 %v796, 1.442695
    %v824 = vpow.pop %v823
    %v825 = vmul.f32 %v797, 1.442695
    %v826 = vpow.pop %v825
    %v827 = vmul.f32 %v798, 1.442695
    %v828 = vpow.pop %v827
    %v829 = vmul.f32 %v799, 1.442695
    %v830 = vpow.pop %v829
    %v831 = vmul.f32 %v800, 1.442695
    %v832 = vpow.pop %v831
    %v833 = vsel %vm174, %v802, 0.0
    %834 = vadd.xlane.f32.xlu0 %v833
    %v835 = vpop.xlane.xlu0 %834
    %v836 = vsel %vm174, %v804, 0.0
    %837 = vadd.xlane.f32.xlu0 %v836
    %v838 = vpop.xlane.xlu0 %837
    %v839 = vsel %vm174, %v806, 0.0
    %840 = vadd.xlane.f32.xlu0 %v839
    %v841 = vpop.xlane.xlu0 %840
    %v842 = vsel %vm174, %v808, 0.0
    %843 = vadd.xlane.f32.xlu0 %v842
    %v844 = vpop.xlane.xlu0 %843
    %v845 = vsel %vm174, %v810, 0.0
    %846 = vadd.xlane.f32.xlu0 %v845
    %v847 = vpop.xlane.xlu0 %846
    %v848 = vsel %vm174, %v812, 0.0
    %849 = vadd.xlane.f32.xlu0 %v848
    %v850 = vpop.xlane.xlu0 %849
    %v851 = vsel %vm174, %v814, 0.0
    %852 = vadd.xlane.f32.xlu0 %v851
    %v853 = vpop.xlane.xlu0 %852
    %v854 = vsel %vm174, %v816, 0.0
    %855 = vadd.xlane.f32.xlu0 %v854
    %v856 = vpop.xlane.xlu0 %855
    %v857 = vsel %vm174, %v818, 0.0
    %858 = vadd.xlane.f32.xlu0 %v857
    %v859 = vpop.xlane.xlu0 %858
    %v860 = vsel %vm174, %v820, 0.0
    %861 = vadd.xlane.f32.xlu0 %v860
    %v862 = vpop.xlane.xlu0 %861
    %v863 = vsel %vm174, %v822, 0.0
    %864 = vadd.xlane.f32.xlu0 %v863
    %v865 = vpop.xlane.xlu0 %864
    %v866 = vsel %vm174, %v824, 0.0
    %867 = vadd.xlane.f32.xlu0 %v866
    %v868 = vpop.xlane.xlu0 %867
    %v869 = vsel %vm174, %v826, 0.0
    %870 = vadd.xlane.f32.xlu0 %v869
    %v871 = vpop.xlane.xlu0 %870
    %v872 = vsel %vm174, %v828, 0.0
    %873 = vadd.xlane.f32.xlu0 %v872
    %v874 = vpop.xlane.xlu0 %873
    %v875 = vsel %vm174, %v830, 0.0
    %876 = vadd.xlane.f32.xlu0 %v875
    %v877 = vpop.xlane.xlu0 %876
    %v878 = vsel %vm174, %v832, 0.0
    %879 = vadd.xlane.f32.xlu0 %v878
    %v880 = vpop.xlane.xlu0 %879
    %v881 = vrcp.pop %v835
    %v882 = vrcp.pop %v838
    %v883 = vrcp.pop %v841
    %v884 = vrcp.pop %v844
    %v885 = vrcp.pop %v847
    %v886 = vrcp.pop %v850
    %v887 = vrcp.pop %v853
    %v888 = vrcp.pop %v856
    %v889 = vrcp.pop %v859
    %v890 = vrcp.pop %v862
    %v891 = vrcp.pop %v865
    %v892 = vrcp.pop %v868
    %v893 = vrcp.pop %v871
    %v894 = vrcp.pop %v874
    %v895 = vrcp.pop %v877
    %v896 = vrcp.pop %v880
    %v897 = vmul.f32 %v802, %v881
    %v898 = vmul.f32 %v804, %v882
    %v899 = vmul.f32 %v806, %v883
    %v900 = vmul.f32 %v808, %v884
    %v901 = vmul.f32 %v810, %v885
    %v902 = vmul.f32 %v812, %v886
    %v903 = vmul.f32 %v814, %v887
    %v904 = vmul.f32 %v816, %v888
    %v905 = vmul.f32 %v818, %v889
    %v906 = vmul.f32 %v820, %v890
    %v907 = vmul.f32 %v822, %v891
    %v908 = vmul.f32 %v824, %v892
    %v909 = vmul.f32 %v826, %v893
    %v910 = vmul.f32 %v828, %v894
    %v911 = vmul.f32 %v830, %v895
    %v912 = vmul.f32 %v832, %v896
    %913 = vrot.lane.b32.xlu0 %v241, 112
    %v914 = vpop.permute.xlu0 %913
    %v917 = vsel %vm174, %v897, 0
    %919 = vmatpush.msra.mxu0 0.0
    %920 = vmatpush.msra.mxu0 0.0
    %921 = vmatpush.msra.mxu0 0.0
    %922 = vmatpush.msra.mxu0 0.0
    %923 = vmatpush.msra.mxu0 0.0
    %924 = vmatpush.msra.mxu0 0.0
    %925 = vmatpush.msra.mxu0 0.0
    %926 = vmatpush.msra.mxu0 0.0
    %927 = vmatpush.msra.mxu0 0.0
    %928 = vmatpush.msra.mxu0 0.0
    %929 = vmatpush.msra.mxu0 0.0
    %930 = vmatpush.msra.mxu0 0.0
    %931 = vmatpush.msra.mxu0 0.0
    %932 = vmatpush.msra.mxu0 0.0
    %933 = vmatpush.msra.mxu0 0.0
    %934 = vmatpush.msra.mxu0 %v914
    %935 = vmatmul.f32.gmra.mxu0 %v917
    %v936 = vpop.f32.mrf.mxu0
    %v937 = vadd.f32 0.0, %v936
    %938 = vdwg.mxu0
    %939 = vrot.lane.b32.xlu0 %v244, 112
    %v940 = vpop.permute.xlu0 %939
    %v943 = vsel %vm174, %v898, 0
    %945 = vmatpush.msra.mxu0 0.0
    %946 = vmatpush.msra.mxu0 0.0
    %947 = vmatpush.msra.mxu0 0.0
    %948 = vmatpush.msra.mxu0 0.0
    %949 = vmatpush.msra.mxu0 0.0
    %950 = vmatpush.msra.mxu0 0.0
    %951 = vmatpush.msra.mxu0 0.0
    %952 = vmatpush.msra.mxu0 0.0
    %953 = vmatpush.msra.mxu0 0.0
    %954 = vmatpush.msra.mxu0 0.0
    %955 = vmatpush.msra.mxu0 0.0
    %956 = vmatpush.msra.mxu0 0.0
    %957 = vmatpush.msra.mxu0 0.0
    %958 = vmatpush.msra.mxu0 0.0
    %959 = vmatpush.msra.mxu0 0.0
    %960 = vmatpush.msra.mxu0 %v940
    %961 = vmatmul.f32.gmra.mxu0 %v943
    %v962 = vpop.f32.mrf.mxu0
    %v963 = vadd.f32 0.0, %v962
    %964 = vdwg.mxu0
    %965 = vrot.lane.b32.xlu0 %v247, 112
    %v966 = vpop.permute.xlu0 %965
    %v969 = vsel %vm174, %v899, 0
    %971 = vmatpush.msra.mxu0 0.0
    %972 = vmatpush.msra.mxu0 0.0
    %973 = vmatpush.msra.mxu0 0.0
    %974 = vmatpush.msra.mxu0 0.0
    %975 = vmatpush.msra.mxu0 0.0
    %976 = vmatpush.msra.mxu0 0.0
    %977 = vmatpush.msra.mxu0 0.0
    %978 = vmatpush.msra.mxu0 0.0
    %979 = vmatpush.msra.mxu0 0.0
    %980 = vmatpush.msra.mxu0 0.0
    %981 = vmatpush.msra.mxu0 0.0
    %982 = vmatpush.msra.mxu0 0.0
    %983 = vmatpush.msra.mxu0 0.0
    %984 = vmatpush.msra.mxu0 0.0
    %985 = vmatpush.msra.mxu0 0.0
    %986 = vmatpush.msra.mxu0 %v966
    %987 = vmatmul.f32.gmra.mxu0 %v969
    %v988 = vpop.f32.mrf.mxu0
    %v989 = vadd.f32 0.0, %v988
    %990 = vdwg.mxu0
    %991 = vrot.lane.b32.xlu0 %v250, 112
    %v992 = vpop.permute.xlu0 %991
    %v995 = vsel %vm174, %v900, 0
    %997 = vmatpush.msra.mxu0 0.0
    %998 = vmatpush.msra.mxu0 0.0
    %999 = vmatpush.msra.mxu0 0.0
    %1000 = vmatpush.msra.mxu0 0.0
    %1001 = vmatpush.msra.mxu0 0.0
    %1002 = vmatpush.msra.mxu0 0.0
    %1003 = vmatpush.msra.mxu0 0.0
    %1004 = vmatpush.msra.mxu0 0.0
    %1005 = vmatpush.msra.mxu0 0.0
    %1006 = vmatpush.msra.mxu0 0.0
    %1007 = vmatpush.msra.mxu0 0.0
    %1008 = vmatpush.msra.mxu0 0.0
    %1009 = vmatpush.msra.mxu0 0.0
    %1010 = vmatpush.msra.mxu0 0.0
    %1011 = vmatpush.msra.mxu0 0.0
    %1012 = vmatpush.msra.mxu0 %v992
    %1013 = vmatmul.f32.gmra.mxu0 %v995
    %v1014 = vpop.f32.mrf.mxu0
    %v1015 = vadd.f32 0.0, %v1014
    %1016 = vdwg.mxu0
    %1017 = vrot.lane.b32.xlu0 %v253, 112
    %v1018 = vpop.permute.xlu0 %1017
    %v1021 = vsel %vm174, %v901, 0
    %1023 = vmatpush.msra.mxu0 0.0
    %1024 = vmatpush.msra.mxu0 0.0
    %1025 = vmatpush.msra.mxu0 0.0
    %1026 = vmatpush.msra.mxu0 0.0
    %1027 = vmatpush.msra.mxu0 0.0
    %1028 = vmatpush.msra.mxu0 0.0
    %1029 = vmatpush.msra.mxu0 0.0
    %1030 = vmatpush.msra.mxu0 0.0
    %1031 = vmatpush.msra.mxu0 0.0
    %1032 = vmatpush.msra.mxu0 0.0
    %1033 = vmatpush.msra.mxu0 0.0
    %1034 = vmatpush.msra.mxu0 0.0
    %1035 = vmatpush.msra.mxu0 0.0
    %1036 = vmatpush.msra.mxu0 0.0
    %1037 = vmatpush.msra.mxu0 0.0
    %1038 = vmatpush.msra.mxu0 %v1018
    %1039 = vmatmul.f32.gmra.mxu0 %v1021
    %v1040 = vpop.f32.mrf.mxu0
    %v1041 = vadd.f32 0.0, %v1040
    %1042 = vdwg.mxu0
    %1043 = vrot.lane.b32.xlu0 %v256, 112
    %v1044 = vpop.permute.xlu0 %1043
    %v1047 = vsel %vm174, %v902, 0
    %1049 = vmatpush.msra.mxu0 0.0
    %1050 = vmatpush.msra.mxu0 0.0
    %1051 = vmatpush.msra.mxu0 0.0
    %1052 = vmatpush.msra.mxu0 0.0
    %1053 = vmatpush.msra.mxu0 0.0
    %1054 = vmatpush.msra.mxu0 0.0
    %1055 = vmatpush.msra.mxu0 0.0
    %1056 = vmatpush.msra.mxu0 0.0
    %1057 = vmatpush.msra.mxu0 0.0
    %1058 = vmatpush.msra.mxu0 0.0
    %1059 = vmatpush.msra.mxu0 0.0
    %1060 = vmatpush.msra.mxu0 0.0
    %1061 = vmatpush.msra.mxu0 0.0
    %1062 = vmatpush.msra.mxu0 0.0
    %1063 = vmatpush.msra.mxu0 0.0
    %1064 = vmatpush.msra.mxu0 %v1044
    %1065 = vmatmul.f32.gmra.mxu0 %v1047
    %v1066 = vpop.f32.mrf.mxu0
    %v1067 = vadd.f32 0.0, %v1066
    %1068 = vdwg.mxu0
    %1069 = vrot.lane.b32.xlu0 %v259, 112
    %v1070 = vpop.permute.xlu0 %1069
    %v1073 = vsel %vm174, %v903, 0
    %1075 = vmatpush.msra.mxu0 0.0
    %1076 = vmatpush.msra.mxu0 0.0
    %1077 = vmatpush.msra.mxu0 0.0
    %1078 = vmatpush.msra.mxu0 0.0
    %1079 = vmatpush.msra.mxu0 0.0
    %1080 = vmatpush.msra.mxu0 0.0
    %1081 = vmatpush.msra.mxu0 0.0
    %1082 = vmatpush.msra.mxu0 0.0
    %1083 = vmatpush.msra.mxu0 0.0
    %1084 = vmatpush.msra.mxu0 0.0
    %1085 = vmatpush.msra.mxu0 0.0
    %1086 = vmatpush.msra.mxu0 0.0
    %1087 = vmatpush.msra.mxu0 0.0
    %1088 = vmatpush.msra.mxu0 0.0
    %1089 = vmatpush.msra.mxu0 0.0
    %1090 = vmatpush.msra.mxu0 %v1070
    %1091 = vmatmul.f32.gmra.mxu0 %v1073
    %v1092 = vpop.f32.mrf.mxu0
    %v1093 = vadd.f32 0.0, %v1092
    %1094 = vdwg.mxu0
    %1095 = vrot.lane.b32.xlu0 %v262, 112
    %v1096 = vpop.permute.xlu0 %1095
    %v1099 = vsel %vm174, %v904, 0
    %1101 = vmatpush.msra.mxu0 0.0
    %1102 = vmatpush.msra.mxu0 0.0
    %1103 = vmatpush.msra.mxu0 0.0
    %1104 = vmatpush.msra.mxu0 0.0
    %1105 = vmatpush.msra.mxu0 0.0
    %1106 = vmatpush.msra.mxu0 0.0
    %1107 = vmatpush.msra.mxu0 0.0
    %1108 = vmatpush.msra.mxu0 0.0
    %1109 = vmatpush.msra.mxu0 0.0
    %1110 = vmatpush.msra.mxu0 0.0
    %1111 = vmatpush.msra.mxu0 0.0
    %1112 = vmatpush.msra.mxu0 0.0
    %1113 = vmatpush.msra.mxu0 0.0
    %1114 = vmatpush.msra.mxu0 0.0
    %1115 = vmatpush.msra.mxu0 0.0
    %1116 = vmatpush.msra.mxu0 %v1096
    %1117 = vmatmul.f32.gmra.mxu0 %v1099
    %v1118 = vpop.f32.mrf.mxu0
    %v1119 = vadd.f32 0.0, %v1118
    %1120 = vdwg.mxu0
    %1121 = vrot.lane.b32.xlu0 %v265, 112
    %v1122 = vpop.permute.xlu0 %1121
    %v1125 = vsel %vm174, %v905, 0
    %1127 = vmatpush.msra.mxu0 0.0
    %1128 = vmatpush.msra.mxu0 0.0
    %1129 = vmatpush.msra.mxu0 0.0
    %1130 = vmatpush.msra.mxu0 0.0
    %1131 = vmatpush.msra.mxu0 0.0
    %1132 = vmatpush.msra.mxu0 0.0
    %1133 = vmatpush.msra.mxu0 0.0
    %1134 = vmatpush.msra.mxu0 0.0
    %1135 = vmatpush.msra.mxu0 0.0
    %1136 = vmatpush.msra.mxu0 0.0
    %1137 = vmatpush.msra.mxu0 0.0
    %1138 = vmatpush.msra.mxu0 0.0
    %1139 = vmatpush.msra.mxu0 0.0
    %1140 = vmatpush.msra.mxu0 0.0
    %1141 = vmatpush.msra.mxu0 0.0
    %1142 = vmatpush.msra.mxu0 %v1122
    %1143 = vmatmul.f32.gmra.mxu0 %v1125
    %v1144 = vpop.f32.mrf.mxu0
    %v1145 = vadd.f32 0.0, %v1144
    %1146 = vdwg.mxu0
    %1147 = vrot.lane.b32.xlu0 %v268, 112
    %v1148 = vpop.permute.xlu0 %1147
    %v1151 = vsel %vm174, %v906, 0
    %1153 = vmatpush.msra.mxu0 0.0
    %1154 = vmatpush.msra.mxu0 0.0
    %1155 = vmatpush.msra.mxu0 0.0
    %1156 = vmatpush.msra.mxu0 0.0
    %1157 = vmatpush.msra.mxu0 0.0
    %1158 = vmatpush.msra.mxu0 0.0
    %1159 = vmatpush.msra.mxu0 0.0
    %1160 = vmatpush.msra.mxu0 0.0
    %1161 = vmatpush.msra.mxu0 0.0
    %1162 = vmatpush.msra.mxu0 0.0
    %1163 = vmatpush.msra.mxu0 0.0
    %1164 = vmatpush.msra.mxu0 0.0
    %1165 = vmatpush.msra.mxu0 0.0
    %1166 = vmatpush.msra.mxu0 0.0
    %1167 = vmatpush.msra.mxu0 0.0
    %1168 = vmatpush.msra.mxu0 %v1148
    %1169 = vmatmul.f32.gmra.mxu0 %v1151
    %v1170 = vpop.f32.mrf.mxu0
    %v1171 = vadd.f32 0.0, %v1170
    %1172 = vdwg.mxu0
    %1173 = vrot.lane.b32.xlu0 %v271, 112
    %v1174 = vpop.permute.xlu0 %1173
    %v1177 = vsel %vm174, %v907, 0
    %1179 = vmatpush.msra.mxu0 0.0
    %1180 = vmatpush.msra.mxu0 0.0
    %1181 = vmatpush.msra.mxu0 0.0
    %1182 = vmatpush.msra.mxu0 0.0
    %1183 = vmatpush.msra.mxu0 0.0
    %1184 = vmatpush.msra.mxu0 0.0
    %1185 = vmatpush.msra.mxu0 0.0
    %1186 = vmatpush.msra.mxu0 0.0
    %1187 = vmatpush.msra.mxu0 0.0
    %1188 = vmatpush.msra.mxu0 0.0
    %1189 = vmatpush.msra.mxu0 0.0
    %1190 = vmatpush.msra.mxu0 0.0
    %1191 = vmatpush.msra.mxu0 0.0
    %1192 = vmatpush.msra.mxu0 0.0
    %1193 = vmatpush.msra.mxu0 0.0
    %1194 = vmatpush.msra.mxu0 %v1174
    %1195 = vmatmul.f32.gmra.mxu0 %v1177
    %v1196 = vpop.f32.mrf.mxu0
    %v1197 = vadd.f32 0.0, %v1196
    %1198 = vdwg.mxu0
    %1199 = vrot.lane.b32.xlu0 %v274, 112
    %v1200 = vpop.permute.xlu0 %1199
    %v1203 = vsel %vm174, %v908, 0
    %1205 = vmatpush.msra.mxu0 0.0
    %1206 = vmatpush.msra.mxu0 0.0
    %1207 = vmatpush.msra.mxu0 0.0
    %1208 = vmatpush.msra.mxu0 0.0
    %1209 = vmatpush.msra.mxu0 0.0
    %1210 = vmatpush.msra.mxu0 0.0
    %1211 = vmatpush.msra.mxu0 0.0
    %1212 = vmatpush.msra.mxu0 0.0
    %1213 = vmatpush.msra.mxu0 0.0
    %1214 = vmatpush.msra.mxu0 0.0
    %1215 = vmatpush.msra.mxu0 0.0
    %1216 = vmatpush.msra.mxu0 0.0
    %1217 = vmatpush.msra.mxu0 0.0
    %1218 = vmatpush.msra.mxu0 0.0
    %1219 = vmatpush.msra.mxu0 0.0
    %1220 = vmatpush.msra.mxu0 %v1200
    %1221 = vmatmul.f32.gmra.mxu0 %v1203
    %v1222 = vpop.f32.mrf.mxu0
    %v1223 = vadd.f32 0.0, %v1222
    %1224 = vdwg.mxu0
    %1225 = vrot.lane.b32.xlu0 %v277, 112
    %v1226 = vpop.permute.xlu0 %1225
    %v1229 = vsel %vm174, %v909, 0
    %1231 = vmatpush.msra.mxu0 0.0
    %1232 = vmatpush.msra.mxu0 0.0
    %1233 = vmatpush.msra.mxu0 0.0
    %1234 = vmatpush.msra.mxu0 0.0
    %1235 = vmatpush.msra.mxu0 0.0
    %1236 = vmatpush.msra.mxu0 0.0
    %1237 = vmatpush.msra.mxu0 0.0
    %1238 = vmatpush.msra.mxu0 0.0
    %1239 = vmatpush.msra.mxu0 0.0
    %1240 = vmatpush.msra.mxu0 0.0
    %1241 = vmatpush.msra.mxu0 0.0
    %1242 = vmatpush.msra.mxu0 0.0
    %1243 = vmatpush.msra.mxu0 0.0
    %1244 = vmatpush.msra.mxu0 0.0
    %1245 = vmatpush.msra.mxu0 0.0
    %1246 = vmatpush.msra.mxu0 %v1226
    %1247 = vmatmul.f32.gmra.mxu0 %v1229
    %v1248 = vpop.f32.mrf.mxu0
    %v1249 = vadd.f32 0.0, %v1248
    %1250 = vdwg.mxu0
    %1251 = vrot.lane.b32.xlu0 %v280, 112
    %v1252 = vpop.permute.xlu0 %1251
    %v1255 = vsel %vm174, %v910, 0
    %1257 = vmatpush.msra.mxu0 0.0
    %1258 = vmatpush.msra.mxu0 0.0
    %1259 = vmatpush.msra.mxu0 0.0
    %1260 = vmatpush.msra.mxu0 0.0
    %1261 = vmatpush.msra.mxu0 0.0
    %1262 = vmatpush.msra.mxu0 0.0
    %1263 = vmatpush.msra.mxu0 0.0
    %1264 = vmatpush.msra.mxu0 0.0
    %1265 = vmatpush.msra.mxu0 0.0
    %1266 = vmatpush.msra.mxu0 0.0
    %1267 = vmatpush.msra.mxu0 0.0
    %1268 = vmatpush.msra.mxu0 0.0
    %1269 = vmatpush.msra.mxu0 0.0
    %1270 = vmatpush.msra.mxu0 0.0
    %1271 = vmatpush.msra.mxu0 0.0
    %1272 = vmatpush.msra.mxu0 %v1252
    %1273 = vmatmul.f32.gmra.mxu0 %v1255
    %v1274 = vpop.f32.mrf.mxu0
    %v1275 = vadd.f32 0.0, %v1274
    %1276 = vdwg.mxu0
    %1277 = vrot.lane.b32.xlu0 %v283, 112
    %v1278 = vpop.permute.xlu0 %1277
    %v1281 = vsel %vm174, %v911, 0
    %1283 = vmatpush.msra.mxu0 0.0
    %1284 = vmatpush.msra.mxu0 0.0
    %1285 = vmatpush.msra.mxu0 0.0
    %1286 = vmatpush.msra.mxu0 0.0
    %1287 = vmatpush.msra.mxu0 0.0
    %1288 = vmatpush.msra.mxu0 0.0
    %1289 = vmatpush.msra.mxu0 0.0
    %1290 = vmatpush.msra.mxu0 0.0
    %1291 = vmatpush.msra.mxu0 0.0
    %1292 = vmatpush.msra.mxu0 0.0
    %1293 = vmatpush.msra.mxu0 0.0
    %1294 = vmatpush.msra.mxu0 0.0
    %1295 = vmatpush.msra.mxu0 0.0
    %1296 = vmatpush.msra.mxu0 0.0
    %1297 = vmatpush.msra.mxu0 0.0
    %1298 = vmatpush.msra.mxu0 %v1278
    %1299 = vmatmul.f32.gmra.mxu0 %v1281
    %v1300 = vpop.f32.mrf.mxu0
    %v1301 = vadd.f32 0.0, %v1300
    %1302 = vdwg.mxu0
    %1303 = vrot.lane.b32.xlu0 %v286, 112
    %v1304 = vpop.permute.xlu0 %1303
    %v1307 = vsel %vm174, %v912, 0
    %1309 = vmatpush.msra.mxu0 0.0
    %1310 = vmatpush.msra.mxu0 0.0
    %1311 = vmatpush.msra.mxu0 0.0
    %1312 = vmatpush.msra.mxu0 0.0
    %1313 = vmatpush.msra.mxu0 0.0
    %1314 = vmatpush.msra.mxu0 0.0
    %1315 = vmatpush.msra.mxu0 0.0
    %1316 = vmatpush.msra.mxu0 0.0
    %1317 = vmatpush.msra.mxu0 0.0
    %1318 = vmatpush.msra.mxu0 0.0
    %1319 = vmatpush.msra.mxu0 0.0
    %1320 = vmatpush.msra.mxu0 0.0
    %1321 = vmatpush.msra.mxu0 0.0
    %1322 = vmatpush.msra.mxu0 0.0
    %1323 = vmatpush.msra.mxu0 0.0
    %1324 = vmatpush.msra.mxu0 %v1304
    %1325 = vmatmul.f32.gmra.mxu0 %v1307
    %v1326 = vpop.f32.mrf.mxu0
    %v1327 = vadd.f32 0.0, %v1326
    %1328 = vdwg.mxu0
    %1329 = vrot.lane.b32.xlu0 %v241, 124
    %v1330 = vpop.permute.xlu0 %1329
    %1331 = vrot.lane.b32.xlu0 %v241, 116
    %v1332 = vpop.permute.xlu0 %1331
    %v1333 = vsel %vm291, %v1330, 0
    %v1335 = vsel %vm291, %v1332, 0
    %1337 = vmatpush.xpose.msra.mxu0 0.0
    %1338 = vmatpush.xpose.msra.mxu0 0.0
    %1339 = vmatpush.xpose.msra.mxu0 0.0
    %1340 = vmatpush.xpose.msra.mxu0 0.0
    %1341 = vmatpush.xpose.msra.mxu0 0.0
    %1342 = vmatpush.xpose.msra.mxu0 0.0
    %1343 = vmatpush.xpose.msra.mxu0 0.0
    %1344 = vmatpush.xpose.msra.mxu0 0.0
    %1345 = vmatpush.xpose.msra.mxu0 0.0
    %1346 = vmatpush.xpose.msra.mxu0 0.0
    %1347 = vmatpush.xpose.msra.mxu0 0.0
    %1348 = vmatpush.xpose.msra.mxu0 0.0
    %1349 = vmatpush.xpose.msra.mxu0 0.0
    %1350 = vmatpush.xpose.msra.mxu0 0.0
    %1351 = vmatpush.xpose.msra.mxu0 0.0
    %1352 = vmatpush.xpose.msra.mxu0 %v1335
    %1353 = vmatmul.f32.gmra.mxu0 %v1333
    %v1354 = vpop.f32.mrf.mxu0
    %v1355 = vadd.f32 0.0, %v1354
    %1356 = vdwg.mxu0
    %1357 = vrot.lane.b32.xlu0 %v244, 124
    %v1358 = vpop.permute.xlu0 %1357
    %1359 = vrot.lane.b32.xlu0 %v244, 116
    %v1360 = vpop.permute.xlu0 %1359
    %v1361 = vsel %vm291, %v1358, 0
    %v1363 = vsel %vm291, %v1360, 0
    %1365 = vmatpush.xpose.msra.mxu0 0.0
    %1366 = vmatpush.xpose.msra.mxu0 0.0
    %1367 = vmatpush.xpose.msra.mxu0 0.0
    %1368 = vmatpush.xpose.msra.mxu0 0.0
    %1369 = vmatpush.xpose.msra.mxu0 0.0
    %1370 = vmatpush.xpose.msra.mxu0 0.0
    %1371 = vmatpush.xpose.msra.mxu0 0.0
    %1372 = vmatpush.xpose.msra.mxu0 0.0
    %1373 = vmatpush.xpose.msra.mxu0 0.0
    %1374 = vmatpush.xpose.msra.mxu0 0.0
    %1375 = vmatpush.xpose.msra.mxu0 0.0
    %1376 = vmatpush.xpose.msra.mxu0 0.0
    %1377 = vmatpush.xpose.msra.mxu0 0.0
    %1378 = vmatpush.xpose.msra.mxu0 0.0
    %1379 = vmatpush.xpose.msra.mxu0 0.0
    %1380 = vmatpush.xpose.msra.mxu0 %v1363
    %1381 = vmatmul.f32.gmra.mxu0 %v1361
    %v1382 = vpop.f32.mrf.mxu0
    %v1383 = vadd.f32 0.0, %v1382
    %1384 = vdwg.mxu0
    %1385 = vrot.lane.b32.xlu0 %v247, 124
    %v1386 = vpop.permute.xlu0 %1385
    %1387 = vrot.lane.b32.xlu0 %v247, 116
    %v1388 = vpop.permute.xlu0 %1387
    %v1389 = vsel %vm291, %v1386, 0
    %v1391 = vsel %vm291, %v1388, 0
    %1393 = vmatpush.xpose.msra.mxu0 0.0
    %1394 = vmatpush.xpose.msra.mxu0 0.0
    %1395 = vmatpush.xpose.msra.mxu0 0.0
    %1396 = vmatpush.xpose.msra.mxu0 0.0
    %1397 = vmatpush.xpose.msra.mxu0 0.0
    %1398 = vmatpush.xpose.msra.mxu0 0.0
    %1399 = vmatpush.xpose.msra.mxu0 0.0
    %1400 = vmatpush.xpose.msra.mxu0 0.0
    %1401 = vmatpush.xpose.msra.mxu0 0.0
    %1402 = vmatpush.xpose.msra.mxu0 0.0
    %1403 = vmatpush.xpose.msra.mxu0 0.0
    %1404 = vmatpush.xpose.msra.mxu0 0.0
    %1405 = vmatpush.xpose.msra.mxu0 0.0
    %1406 = vmatpush.xpose.msra.mxu0 0.0
    %1407 = vmatpush.xpose.msra.mxu0 0.0
    %1408 = vmatpush.xpose.msra.mxu0 %v1391
    %1409 = vmatmul.f32.gmra.mxu0 %v1389
    %v1410 = vpop.f32.mrf.mxu0
    %v1411 = vadd.f32 0.0, %v1410
    %1412 = vdwg.mxu0
    %1413 = vrot.lane.b32.xlu0 %v250, 124
    %v1414 = vpop.permute.xlu0 %1413
    %1415 = vrot.lane.b32.xlu0 %v250, 116
    %v1416 = vpop.permute.xlu0 %1415
    %v1417 = vsel %vm291, %v1414, 0
    %v1419 = vsel %vm291, %v1416, 0
    %1421 = vmatpush.xpose.msra.mxu0 0.0
    %1422 = vmatpush.xpose.msra.mxu0 0.0
    %1423 = vmatpush.xpose.msra.mxu0 0.0
    %1424 = vmatpush.xpose.msra.mxu0 0.0
    %1425 = vmatpush.xpose.msra.mxu0 0.0
    %1426 = vmatpush.xpose.msra.mxu0 0.0
    %1427 = vmatpush.xpose.msra.mxu0 0.0
    %1428 = vmatpush.xpose.msra.mxu0 0.0
    %1429 = vmatpush.xpose.msra.mxu0 0.0
    %1430 = vmatpush.xpose.msra.mxu0 0.0
    %1431 = vmatpush.xpose.msra.mxu0 0.0
    %1432 = vmatpush.xpose.msra.mxu0 0.0
    %1433 = vmatpush.xpose.msra.mxu0 0.0
    %1434 = vmatpush.xpose.msra.mxu0 0.0
    %1435 = vmatpush.xpose.msra.mxu0 0.0
    %1436 = vmatpush.xpose.msra.mxu0 %v1419
    %1437 = vmatmul.f32.gmra.mxu0 %v1417
    %v1438 = vpop.f32.mrf.mxu0
    %v1439 = vadd.f32 0.0, %v1438
    %1440 = vdwg.mxu0
    %1441 = vrot.lane.b32.xlu0 %v253, 124
    %v1442 = vpop.permute.xlu0 %1441
    %1443 = vrot.lane.b32.xlu0 %v253, 116
    %v1444 = vpop.permute.xlu0 %1443
    %v1445 = vsel %vm291, %v1442, 0
    %v1447 = vsel %vm291, %v1444, 0
    %1449 = vmatpush.xpose.msra.mxu0 0.0
    %1450 = vmatpush.xpose.msra.mxu0 0.0
    %1451 = vmatpush.xpose.msra.mxu0 0.0
    %1452 = vmatpush.xpose.msra.mxu0 0.0
    %1453 = vmatpush.xpose.msra.mxu0 0.0
    %1454 = vmatpush.xpose.msra.mxu0 0.0
    %1455 = vmatpush.xpose.msra.mxu0 0.0
    %1456 = vmatpush.xpose.msra.mxu0 0.0
    %1457 = vmatpush.xpose.msra.mxu0 0.0
    %1458 = vmatpush.xpose.msra.mxu0 0.0
    %1459 = vmatpush.xpose.msra.mxu0 0.0
    %1460 = vmatpush.xpose.msra.mxu0 0.0
    %1461 = vmatpush.xpose.msra.mxu0 0.0
    %1462 = vmatpush.xpose.msra.mxu0 0.0
    %1463 = vmatpush.xpose.msra.mxu0 0.0
    %1464 = vmatpush.xpose.msra.mxu0 %v1447
    %1465 = vmatmul.f32.gmra.mxu0 %v1445
    %v1466 = vpop.f32.mrf.mxu0
    %v1467 = vadd.f32 0.0, %v1466
    %1468 = vdwg.mxu0
    %1469 = vrot.lane.b32.xlu0 %v256, 124
    %v1470 = vpop.permute.xlu0 %1469
    %1471 = vrot.lane.b32.xlu0 %v256, 116
    %v1472 = vpop.permute.xlu0 %1471
    %v1473 = vsel %vm291, %v1470, 0
    %v1475 = vsel %vm291, %v1472, 0
    %1477 = vmatpush.xpose.msra.mxu0 0.0
    %1478 = vmatpush.xpose.msra.mxu0 0.0
    %1479 = vmatpush.xpose.msra.mxu0 0.0
    %1480 = vmatpush.xpose.msra.mxu0 0.0
    %1481 = vmatpush.xpose.msra.mxu0 0.0
    %1482 = vmatpush.xpose.msra.mxu0 0.0
    %1483 = vmatpush.xpose.msra.mxu0 0.0
    %1484 = vmatpush.xpose.msra.mxu0 0.0
    %1485 = vmatpush.xpose.msra.mxu0 0.0
    %1486 = vmatpush.xpose.msra.mxu0 0.0
    %1487 = vmatpush.xpose.msra.mxu0 0.0
    %1488 = vmatpush.xpose.msra.mxu0 0.0
    %1489 = vmatpush.xpose.msra.mxu0 0.0
    %1490 = vmatpush.xpose.msra.mxu0 0.0
    %1491 = vmatpush.xpose.msra.mxu0 0.0
    %1492 = vmatpush.xpose.msra.mxu0 %v1475
    %1493 = vmatmul.f32.gmra.mxu0 %v1473
    %v1494 = vpop.f32.mrf.mxu0
    %v1495 = vadd.f32 0.0, %v1494
    %1496 = vdwg.mxu0
    %1497 = vrot.lane.b32.xlu0 %v259, 124
    %v1498 = vpop.permute.xlu0 %1497
    %1499 = vrot.lane.b32.xlu0 %v259, 116
    %v1500 = vpop.permute.xlu0 %1499
    %v1501 = vsel %vm291, %v1498, 0
    %v1503 = vsel %vm291, %v1500, 0
    %1505 = vmatpush.xpose.msra.mxu0 0.0
    %1506 = vmatpush.xpose.msra.mxu0 0.0
    %1507 = vmatpush.xpose.msra.mxu0 0.0
    %1508 = vmatpush.xpose.msra.mxu0 0.0
    %1509 = vmatpush.xpose.msra.mxu0 0.0
    %1510 = vmatpush.xpose.msra.mxu0 0.0
    %1511 = vmatpush.xpose.msra.mxu0 0.0
    %1512 = vmatpush.xpose.msra.mxu0 0.0
    %1513 = vmatpush.xpose.msra.mxu0 0.0
    %1514 = vmatpush.xpose.msra.mxu0 0.0
    %1515 = vmatpush.xpose.msra.mxu0 0.0
    %1516 = vmatpush.xpose.msra.mxu0 0.0
    %1517 = vmatpush.xpose.msra.mxu0 0.0
    %1518 = vmatpush.xpose.msra.mxu0 0.0
    %1519 = vmatpush.xpose.msra.mxu0 0.0
    %1520 = vmatpush.xpose.msra.mxu0 %v1503
    %1521 = vmatmul.f32.gmra.mxu0 %v1501
    %v1522 = vpop.f32.mrf.mxu0
    %v1523 = vadd.f32 0.0, %v1522
    %1524 = vdwg.mxu0
    %1525 = vrot.lane.b32.xlu0 %v262, 124
    %v1526 = vpop.permute.xlu0 %1525
    %1527 = vrot.lane.b32.xlu0 %v262, 116
    %v1528 = vpop.permute.xlu0 %1527
    %v1529 = vsel %vm291, %v1526, 0
    %v1531 = vsel %vm291, %v1528, 0
    %1533 = vmatpush.xpose.msra.mxu0 0.0
    %1534 = vmatpush.xpose.msra.mxu0 0.0
    %1535 = vmatpush.xpose.msra.mxu0 0.0
    %1536 = vmatpush.xpose.msra.mxu0 0.0
    %1537 = vmatpush.xpose.msra.mxu0 0.0
    %1538 = vmatpush.xpose.msra.mxu0 0.0
    %1539 = vmatpush.xpose.msra.mxu0 0.0
    %1540 = vmatpush.xpose.msra.mxu0 0.0
    %1541 = vmatpush.xpose.msra.mxu0 0.0
    %1542 = vmatpush.xpose.msra.mxu0 0.0
    %1543 = vmatpush.xpose.msra.mxu0 0.0
    %1544 = vmatpush.xpose.msra.mxu0 0.0
    %1545 = vmatpush.xpose.msra.mxu0 0.0
    %1546 = vmatpush.xpose.msra.mxu0 0.0
    %1547 = vmatpush.xpose.msra.mxu0 0.0
    %1548 = vmatpush.xpose.msra.mxu0 %v1531
    %1549 = vmatmul.f32.gmra.mxu0 %v1529
    %v1550 = vpop.f32.mrf.mxu0
    %v1551 = vadd.f32 0.0, %v1550
    %1552 = vdwg.mxu0
    %1553 = vrot.lane.b32.xlu0 %v265, 124
    %v1554 = vpop.permute.xlu0 %1553
    %1555 = vrot.lane.b32.xlu0 %v265, 116
    %v1556 = vpop.permute.xlu0 %1555
    %v1557 = vsel %vm291, %v1554, 0
    %v1559 = vsel %vm291, %v1556, 0
    %1561 = vmatpush.xpose.msra.mxu0 0.0
    %1562 = vmatpush.xpose.msra.mxu0 0.0
    %1563 = vmatpush.xpose.msra.mxu0 0.0
    %1564 = vmatpush.xpose.msra.mxu0 0.0
    %1565 = vmatpush.xpose.msra.mxu0 0.0
    %1566 = vmatpush.xpose.msra.mxu0 0.0
    %1567 = vmatpush.xpose.msra.mxu0 0.0
    %1568 = vmatpush.xpose.msra.mxu0 0.0
    %1569 = vmatpush.xpose.msra.mxu0 0.0
    %1570 = vmatpush.xpose.msra.mxu0 0.0
    %1571 = vmatpush.xpose.msra.mxu0 0.0
    %1572 = vmatpush.xpose.msra.mxu0 0.0
    %1573 = vmatpush.xpose.msra.mxu0 0.0
    %1574 = vmatpush.xpose.msra.mxu0 0.0
    %1575 = vmatpush.xpose.msra.mxu0 0.0
    %1576 = vmatpush.xpose.msra.mxu0 %v1559
    %1577 = vmatmul.f32.gmra.mxu0 %v1557
    %v1578 = vpop.f32.mrf.mxu0
    %v1579 = vadd.f32 0.0, %v1578
    %1580 = vdwg.mxu0
    %1581 = vrot.lane.b32.xlu0 %v268, 124
    %v1582 = vpop.permute.xlu0 %1581
    %1583 = vrot.lane.b32.xlu0 %v268, 116
    %v1584 = vpop.permute.xlu0 %1583
    %v1585 = vsel %vm291, %v1582, 0
    %v1587 = vsel %vm291, %v1584, 0
    %1589 = vmatpush.xpose.msra.mxu0 0.0
    %1590 = vmatpush.xpose.msra.mxu0 0.0
    %1591 = vmatpush.xpose.msra.mxu0 0.0
    %1592 = vmatpush.xpose.msra.mxu0 0.0
    %1593 = vmatpush.xpose.msra.mxu0 0.0
    %1594 = vmatpush.xpose.msra.mxu0 0.0
    %1595 = vmatpush.xpose.msra.mxu0 0.0
    %1596 = vmatpush.xpose.msra.mxu0 0.0
    %1597 = vmatpush.xpose.msra.mxu0 0.0
    %1598 = vmatpush.xpose.msra.mxu0 0.0
    %1599 = vmatpush.xpose.msra.mxu0 0.0
    %1600 = vmatpush.xpose.msra.mxu0 0.0
    %1601 = vmatpush.xpose.msra.mxu0 0.0
    %1602 = vmatpush.xpose.msra.mxu0 0.0
    %1603 = vmatpush.xpose.msra.mxu0 0.0
    %1604 = vmatpush.xpose.msra.mxu0 %v1587
    %1605 = vmatmul.f32.gmra.mxu0 %v1585
    %v1606 = vpop.f32.mrf.mxu0
    %v1607 = vadd.f32 0.0, %v1606
    %1608 = vdwg.mxu0
    %1609 = vrot.lane.b32.xlu0 %v271, 124
    %v1610 = vpop.permute.xlu0 %1609
    %1611 = vrot.lane.b32.xlu0 %v271, 116
    %v1612 = vpop.permute.xlu0 %1611
    %v1613 = vsel %vm291, %v1610, 0
    %v1615 = vsel %vm291, %v1612, 0
    %1617 = vmatpush.xpose.msra.mxu0 0.0
    %1618 = vmatpush.xpose.msra.mxu0 0.0
    %1619 = vmatpush.xpose.msra.mxu0 0.0
    %1620 = vmatpush.xpose.msra.mxu0 0.0
    %1621 = vmatpush.xpose.msra.mxu0 0.0
    %1622 = vmatpush.xpose.msra.mxu0 0.0
    %1623 = vmatpush.xpose.msra.mxu0 0.0
    %1624 = vmatpush.xpose.msra.mxu0 0.0
    %1625 = vmatpush.xpose.msra.mxu0 0.0
    %1626 = vmatpush.xpose.msra.mxu0 0.0
    %1627 = vmatpush.xpose.msra.mxu0 0.0
    %1628 = vmatpush.xpose.msra.mxu0 0.0
    %1629 = vmatpush.xpose.msra.mxu0 0.0
    %1630 = vmatpush.xpose.msra.mxu0 0.0
    %1631 = vmatpush.xpose.msra.mxu0 0.0
    %1632 = vmatpush.xpose.msra.mxu0 %v1615
    %1633 = vmatmul.f32.gmra.mxu0 %v1613
    %v1634 = vpop.f32.mrf.mxu0
    %v1635 = vadd.f32 0.0, %v1634
    %1636 = vdwg.mxu0
    %1637 = vrot.lane.b32.xlu0 %v274, 124
    %v1638 = vpop.permute.xlu0 %1637
    %1639 = vrot.lane.b32.xlu0 %v274, 116
    %v1640 = vpop.permute.xlu0 %1639
    %v1641 = vsel %vm291, %v1638, 0
    %v1643 = vsel %vm291, %v1640, 0
    %1645 = vmatpush.xpose.msra.mxu0 0.0
    %1646 = vmatpush.xpose.msra.mxu0 0.0
    %1647 = vmatpush.xpose.msra.mxu0 0.0
    %1648 = vmatpush.xpose.msra.mxu0 0.0
    %1649 = vmatpush.xpose.msra.mxu0 0.0
    %1650 = vmatpush.xpose.msra.mxu0 0.0
    %1651 = vmatpush.xpose.msra.mxu0 0.0
    %1652 = vmatpush.xpose.msra.mxu0 0.0
    %1653 = vmatpush.xpose.msra.mxu0 0.0
    %1654 = vmatpush.xpose.msra.mxu0 0.0
    %1655 = vmatpush.xpose.msra.mxu0 0.0
    %1656 = vmatpush.xpose.msra.mxu0 0.0
    %1657 = vmatpush.xpose.msra.mxu0 0.0
    %1658 = vmatpush.xpose.msra.mxu0 0.0
    %1659 = vmatpush.xpose.msra.mxu0 0.0
    %1660 = vmatpush.xpose.msra.mxu0 %v1643
    %1661 = vmatmul.f32.gmra.mxu0 %v1641
    %v1662 = vpop.f32.mrf.mxu0
    %v1663 = vadd.f32 0.0, %v1662
    %1664 = vdwg.mxu0
    %1665 = vrot.lane.b32.xlu0 %v277, 124
    %v1666 = vpop.permute.xlu0 %1665
    %1667 = vrot.lane.b32.xlu0 %v277, 116
    %v1668 = vpop.permute.xlu0 %1667
    %v1669 = vsel %vm291, %v1666, 0
    %v1671 = vsel %vm291, %v1668, 0
    %1673 = vmatpush.xpose.msra.mxu0 0.0
    %1674 = vmatpush.xpose.msra.mxu0 0.0
    %1675 = vmatpush.xpose.msra.mxu0 0.0
    %1676 = vmatpush.xpose.msra.mxu0 0.0
    %1677 = vmatpush.xpose.msra.mxu0 0.0
    %1678 = vmatpush.xpose.msra.mxu0 0.0
    %1679 = vmatpush.xpose.msra.mxu0 0.0
    %1680 = vmatpush.xpose.msra.mxu0 0.0
    %1681 = vmatpush.xpose.msra.mxu0 0.0
    %1682 = vmatpush.xpose.msra.mxu0 0.0
    %1683 = vmatpush.xpose.msra.mxu0 0.0
    %1684 = vmatpush.xpose.msra.mxu0 0.0
    %1685 = vmatpush.xpose.msra.mxu0 0.0
    %1686 = vmatpush.xpose.msra.mxu0 0.0
    %1687 = vmatpush.xpose.msra.mxu0 0.0
    %1688 = vmatpush.xpose.msra.mxu0 %v1671
    %1689 = vmatmul.f32.gmra.mxu0 %v1669
    %v1690 = vpop.f32.mrf.mxu0
    %v1691 = vadd.f32 0.0, %v1690
    %1692 = vdwg.mxu0
    %1693 = vrot.lane.b32.xlu0 %v280, 124
    %v1694 = vpop.permute.xlu0 %1693
    %1695 = vrot.lane.b32.xlu0 %v280, 116
    %v1696 = vpop.permute.xlu0 %1695
    %v1697 = vsel %vm291, %v1694, 0
    %v1699 = vsel %vm291, %v1696, 0
    %1701 = vmatpush.xpose.msra.mxu0 0.0
    %1702 = vmatpush.xpose.msra.mxu0 0.0
    %1703 = vmatpush.xpose.msra.mxu0 0.0
    %1704 = vmatpush.xpose.msra.mxu0 0.0
    %1705 = vmatpush.xpose.msra.mxu0 0.0
    %1706 = vmatpush.xpose.msra.mxu0 0.0
    %1707 = vmatpush.xpose.msra.mxu0 0.0
    %1708 = vmatpush.xpose.msra.mxu0 0.0
    %1709 = vmatpush.xpose.msra.mxu0 0.0
    %1710 = vmatpush.xpose.msra.mxu0 0.0
    %1711 = vmatpush.xpose.msra.mxu0 0.0
    %1712 = vmatpush.xpose.msra.mxu0 0.0
    %1713 = vmatpush.xpose.msra.mxu0 0.0
    %1714 = vmatpush.xpose.msra.mxu0 0.0
    %1715 = vmatpush.xpose.msra.mxu0 0.0
    %1716 = vmatpush.xpose.msra.mxu0 %v1699
    %1717 = vmatmul.f32.gmra.mxu0 %v1697
    %v1718 = vpop.f32.mrf.mxu0
    %v1719 = vadd.f32 0.0, %v1718
    %1720 = vdwg.mxu0
    %1721 = vrot.lane.b32.xlu0 %v283, 124
    %v1722 = vpop.permute.xlu0 %1721
    %1723 = vrot.lane.b32.xlu0 %v283, 116
    %v1724 = vpop.permute.xlu0 %1723
    %v1725 = vsel %vm291, %v1722, 0
    %v1727 = vsel %vm291, %v1724, 0
    %1729 = vmatpush.xpose.msra.mxu0 0.0
    %1730 = vmatpush.xpose.msra.mxu0 0.0
    %1731 = vmatpush.xpose.msra.mxu0 0.0
    %1732 = vmatpush.xpose.msra.mxu0 0.0
    %1733 = vmatpush.xpose.msra.mxu0 0.0
    %1734 = vmatpush.xpose.msra.mxu0 0.0
    %1735 = vmatpush.xpose.msra.mxu0 0.0
    %1736 = vmatpush.xpose.msra.mxu0 0.0
    %1737 = vmatpush.xpose.msra.mxu0 0.0
    %1738 = vmatpush.xpose.msra.mxu0 0.0
    %1739 = vmatpush.xpose.msra.mxu0 0.0
    %1740 = vmatpush.xpose.msra.mxu0 0.0
    %1741 = vmatpush.xpose.msra.mxu0 0.0
    %1742 = vmatpush.xpose.msra.mxu0 0.0
    %1743 = vmatpush.xpose.msra.mxu0 0.0
    %1744 = vmatpush.xpose.msra.mxu0 %v1727
    %1745 = vmatmul.f32.gmra.mxu0 %v1725
    %v1746 = vpop.f32.mrf.mxu0
    %v1747 = vadd.f32 0.0, %v1746
    %1748 = vdwg.mxu0
    %1749 = vrot.lane.b32.xlu0 %v286, 124
    %v1750 = vpop.permute.xlu0 %1749
    %1751 = vrot.lane.b32.xlu0 %v286, 116
    %v1752 = vpop.permute.xlu0 %1751
    %v1753 = vsel %vm291, %v1750, 0
    %v1755 = vsel %vm291, %v1752, 0
    %1757 = vmatpush.xpose.msra.mxu0 0.0
    %1758 = vmatpush.xpose.msra.mxu0 0.0
    %1759 = vmatpush.xpose.msra.mxu0 0.0
    %1760 = vmatpush.xpose.msra.mxu0 0.0
    %1761 = vmatpush.xpose.msra.mxu0 0.0
    %1762 = vmatpush.xpose.msra.mxu0 0.0
    %1763 = vmatpush.xpose.msra.mxu0 0.0
    %1764 = vmatpush.xpose.msra.mxu0 0.0
    %1765 = vmatpush.xpose.msra.mxu0 0.0
    %1766 = vmatpush.xpose.msra.mxu0 0.0
    %1767 = vmatpush.xpose.msra.mxu0 0.0
    %1768 = vmatpush.xpose.msra.mxu0 0.0
    %1769 = vmatpush.xpose.msra.mxu0 0.0
    %1770 = vmatpush.xpose.msra.mxu0 0.0
    %1771 = vmatpush.xpose.msra.mxu0 0.0
    %1772 = vmatpush.xpose.msra.mxu0 %v1755
    %1773 = vmatmul.f32.gmra.mxu0 %v1753
    %v1774 = vpop.f32.mrf.mxu0
    %v1775 = vadd.f32 0.0, %v1774
    %1776 = vdwg.mxu0
    %v1777 = vmul.f32 %v1355, 0.5
    %v1778 = vmul.f32 %v1383, 0.5
    %v1779 = vmul.f32 %v1411, 0.5
    %v1780 = vmul.f32 %v1439, 0.5
    %v1781 = vmul.f32 %v1467, 0.5
    %v1782 = vmul.f32 %v1495, 0.5
    %v1783 = vmul.f32 %v1523, 0.5
    %v1784 = vmul.f32 %v1551, 0.5
    %v1785 = vmul.f32 %v1579, 0.5
    %v1786 = vmul.f32 %v1607, 0.5
    %v1787 = vmul.f32 %v1635, 0.5
    %v1788 = vmul.f32 %v1663, 0.5
    %v1789 = vmul.f32 %v1691, 0.5
    %v1790 = vmul.f32 %v1719, 0.5
    %v1791 = vmul.f32 %v1747, 0.5
    %v1792 = vmul.f32 %v1775, 0.5
    %v1793 = vsel %vm174, %v1777, -inf
    %1794 = vmax.xlane.f32.xlu0 %v1793
    %v1795 = vpop.xlane.xlu0 %1794
    %v1796 = vsel %vm174, %v1778, -inf
    %1797 = vmax.xlane.f32.xlu0 %v1796
    %v1798 = vpop.xlane.xlu0 %1797
    %v1799 = vsel %vm174, %v1779, -inf
    %1800 = vmax.xlane.f32.xlu0 %v1799
    %v1801 = vpop.xlane.xlu0 %1800
    %v1802 = vsel %vm174, %v1780, -inf
    %1803 = vmax.xlane.f32.xlu0 %v1802
    %v1804 = vpop.xlane.xlu0 %1803
    %v1805 = vsel %vm174, %v1781, -inf
    %1806 = vmax.xlane.f32.xlu0 %v1805
    %v1807 = vpop.xlane.xlu0 %1806
    %v1808 = vsel %vm174, %v1782, -inf
    %1809 = vmax.xlane.f32.xlu0 %v1808
    %v1810 = vpop.xlane.xlu0 %1809
    %v1811 = vsel %vm174, %v1783, -inf
    %1812 = vmax.xlane.f32.xlu0 %v1811
    %v1813 = vpop.xlane.xlu0 %1812
    %v1814 = vsel %vm174, %v1784, -inf
    %1815 = vmax.xlane.f32.xlu0 %v1814
    %v1816 = vpop.xlane.xlu0 %1815
    %v1817 = vsel %vm174, %v1785, -inf
    %1818 = vmax.xlane.f32.xlu0 %v1817
    %v1819 = vpop.xlane.xlu0 %1818
    %v1820 = vsel %vm174, %v1786, -inf
    %1821 = vmax.xlane.f32.xlu0 %v1820
    %v1822 = vpop.xlane.xlu0 %1821
    %v1823 = vsel %vm174, %v1787, -inf
    %1824 = vmax.xlane.f32.xlu0 %v1823
    %v1825 = vpop.xlane.xlu0 %1824
    %v1826 = vsel %vm174, %v1788, -inf
    %1827 = vmax.xlane.f32.xlu0 %v1826
    %v1828 = vpop.xlane.xlu0 %1827
    %v1829 = vsel %vm174, %v1789, -inf
    %1830 = vmax.xlane.f32.xlu0 %v1829
    %v1831 = vpop.xlane.xlu0 %1830
    %v1832 = vsel %vm174, %v1790, -inf
    %1833 = vmax.xlane.f32.xlu0 %v1832
    %v1834 = vpop.xlane.xlu0 %1833
    %v1835 = vsel %vm174, %v1791, -inf
    %1836 = vmax.xlane.f32.xlu0 %v1835
    %v1837 = vpop.xlane.xlu0 %1836
    %v1838 = vsel %vm174, %v1792, -inf
    %1839 = vmax.xlane.f32.xlu0 %v1838
    %v1840 = vpop.xlane.xlu0 %1839
    %v1841 = vsub.f32 %v1777, %v1795
    %v1842 = vsub.f32 %v1778, %v1798
    %v1843 = vsub.f32 %v1779, %v1801
    %v1844 = vsub.f32 %v1780, %v1804
    %v1845 = vsub.f32 %v1781, %v1807
    %v1846 = vsub.f32 %v1782, %v1810
    %v1847 = vsub.f32 %v1783, %v1813
    %v1848 = vsub.f32 %v1784, %v1816
    %v1849 = vsub.f32 %v1785, %v1819
    %v1850 = vsub.f32 %v1786, %v1822
    %v1851 = vsub.f32 %v1787, %v1825
    %v1852 = vsub.f32 %v1788, %v1828
    %v1853 = vsub.f32 %v1789, %v1831
    %v1854 = vsub.f32 %v1790, %v1834
    %v1855 = vsub.f32 %v1791, %v1837
    %v1856 = vsub.f32 %v1792, %v1840
    %v1857 = vmul.f32 %v1841, 1.442695
    %v1858 = vpow.pop %v1857
    %v1859 = vmul.f32 %v1842, 1.442695
    %v1860 = vpow.pop %v1859
    %v1861 = vmul.f32 %v1843, 1.442695
    %v1862 = vpow.pop %v1861
    %v1863 = vmul.f32 %v1844, 1.442695
    %v1864 = vpow.pop %v1863
    %v1865 = vmul.f32 %v1845, 1.442695
    %v1866 = vpow.pop %v1865
    %v1867 = vmul.f32 %v1846, 1.442695
    %v1868 = vpow.pop %v1867
    %v1869 = vmul.f32 %v1847, 1.442695
    %v1870 = vpow.pop %v1869
    %v1871 = vmul.f32 %v1848, 1.442695
    %v1872 = vpow.pop %v1871
    %v1873 = vmul.f32 %v1849, 1.442695
    %v1874 = vpow.pop %v1873
    %v1875 = vmul.f32 %v1850, 1.442695
    %v1876 = vpow.pop %v1875
    %v1877 = vmul.f32 %v1851, 1.442695
    %v1878 = vpow.pop %v1877
    %v1879 = vmul.f32 %v1852, 1.442695
    %v1880 = vpow.pop %v1879
    %v1881 = vmul.f32 %v1853, 1.442695
    %v1882 = vpow.pop %v1881
    %v1883 = vmul.f32 %v1854, 1.442695
    %v1884 = vpow.pop %v1883
    %v1885 = vmul.f32 %v1855, 1.442695
    %v1886 = vpow.pop %v1885
    %v1887 = vmul.f32 %v1856, 1.442695
    %v1888 = vpow.pop %v1887
    %v1889 = vsel %vm174, %v1858, 0.0
    %1890 = vadd.xlane.f32.xlu0 %v1889
    %v1891 = vpop.xlane.xlu0 %1890
    %v1892 = vsel %vm174, %v1860, 0.0
    %1893 = vadd.xlane.f32.xlu0 %v1892
    %v1894 = vpop.xlane.xlu0 %1893
    %v1895 = vsel %vm174, %v1862, 0.0
    %1896 = vadd.xlane.f32.xlu0 %v1895
    %v1897 = vpop.xlane.xlu0 %1896
    %v1898 = vsel %vm174, %v1864, 0.0
    %1899 = vadd.xlane.f32.xlu0 %v1898
    %v1900 = vpop.xlane.xlu0 %1899
    %v1901 = vsel %vm174, %v1866, 0.0
    %1902 = vadd.xlane.f32.xlu0 %v1901
    %v1903 = vpop.xlane.xlu0 %1902
    %v1904 = vsel %vm174, %v1868, 0.0
    %1905 = vadd.xlane.f32.xlu0 %v1904
    %v1906 = vpop.xlane.xlu0 %1905
    %v1907 = vsel %vm174, %v1870, 0.0
    %1908 = vadd.xlane.f32.xlu0 %v1907
    %v1909 = vpop.xlane.xlu0 %1908
    %v1910 = vsel %vm174, %v1872, 0.0
    %1911 = vadd.xlane.f32.xlu0 %v1910
    %v1912 = vpop.xlane.xlu0 %1911
    %v1913 = vsel %vm174, %v1874, 0.0
    %1914 = vadd.xlane.f32.xlu0 %v1913
    %v1915 = vpop.xlane.xlu0 %1914
    %v1916 = vsel %vm174, %v1876, 0.0
    %1917 = vadd.xlane.f32.xlu0 %v1916
    %v1918 = vpop.xlane.xlu0 %1917
    %v1919 = vsel %vm174, %v1878, 0.0
    %1920 = vadd.xlane.f32.xlu0 %v1919
    %v1921 = vpop.xlane.xlu0 %1920
    %v1922 = vsel %vm174, %v1880, 0.0
    %1923 = vadd.xlane.f32.xlu0 %v1922
    %v1924 = vpop.xlane.xlu0 %1923
    %v1925 = vsel %vm174, %v1882, 0.0
    %1926 = vadd.xlane.f32.xlu0 %v1925
    %v1927 = vpop.xlane.xlu0 %1926
    %v1928 = vsel %vm174, %v1884, 0.0
    %1929 = vadd.xlane.f32.xlu0 %v1928
    %v1930 = vpop.xlane.xlu0 %1929
    %v1931 = vsel %vm174, %v1886, 0.0
    %1932 = vadd.xlane.f32.xlu0 %v1931
    %v1933 = vpop.xlane.xlu0 %1932
    %v1934 = vsel %vm174, %v1888, 0.0
    %1935 = vadd.xlane.f32.xlu0 %v1934
    %v1936 = vpop.xlane.xlu0 %1935
    %v1937 = vrcp.pop %v1891
    %v1938 = vrcp.pop %v1894
    %v1939 = vrcp.pop %v1897
    %v1940 = vrcp.pop %v1900
    %v1941 = vrcp.pop %v1903
    %v1942 = vrcp.pop %v1906
    %v1943 = vrcp.pop %v1909
    %v1944 = vrcp.pop %v1912
    %v1945 = vrcp.pop %v1915
    %v1946 = vrcp.pop %v1918
    %v1947 = vrcp.pop %v1921
    %v1948 = vrcp.pop %v1924
    %v1949 = vrcp.pop %v1927
    %v1950 = vrcp.pop %v1930
    %v1951 = vrcp.pop %v1933
    %v1952 = vrcp.pop %v1936
    %v1953 = vmul.f32 %v1858, %v1937
    %v1954 = vmul.f32 %v1860, %v1938
    %v1955 = vmul.f32 %v1862, %v1939
    %v1956 = vmul.f32 %v1864, %v1940
    %v1957 = vmul.f32 %v1866, %v1941
    %v1958 = vmul.f32 %v1868, %v1942
    %v1959 = vmul.f32 %v1870, %v1943
    %v1960 = vmul.f32 %v1872, %v1944
    %v1961 = vmul.f32 %v1874, %v1945
    %v1962 = vmul.f32 %v1876, %v1946
    %v1963 = vmul.f32 %v1878, %v1947
    %v1964 = vmul.f32 %v1880, %v1948
    %v1965 = vmul.f32 %v1882, %v1949
    %v1966 = vmul.f32 %v1884, %v1950
    %v1967 = vmul.f32 %v1886, %v1951
    %v1968 = vmul.f32 %v1888, %v1952
    %1969 = vrot.lane.b32.xlu0 %v241, 108
    %v1970 = vpop.permute.xlu0 %1969
    %v1973 = vsel %vm174, %v1953, 0
    %1975 = vmatpush.msra.mxu0 0.0
    %1976 = vmatpush.msra.mxu0 0.0
    %1977 = vmatpush.msra.mxu0 0.0
    %1978 = vmatpush.msra.mxu0 0.0
    %1979 = vmatpush.msra.mxu0 0.0
    %1980 = vmatpush.msra.mxu0 0.0
    %1981 = vmatpush.msra.mxu0 0.0
    %1982 = vmatpush.msra.mxu0 0.0
    %1983 = vmatpush.msra.mxu0 0.0
    %1984 = vmatpush.msra.mxu0 0.0
    %1985 = vmatpush.msra.mxu0 0.0
    %1986 = vmatpush.msra.mxu0 0.0
    %1987 = vmatpush.msra.mxu0 0.0
    %1988 = vmatpush.msra.mxu0 0.0
    %1989 = vmatpush.msra.mxu0 0.0
    %1990 = vmatpush.msra.mxu0 %v1970
    %1991 = vmatmul.f32.gmra.mxu0 %v1973
    %v1992 = vpop.f32.mrf.mxu0
    %v1993 = vadd.f32 0.0, %v1992
    %1994 = vdwg.mxu0
    %1995 = vrot.lane.b32.xlu0 %v244, 108
    %v1996 = vpop.permute.xlu0 %1995
    %v1999 = vsel %vm174, %v1954, 0
    %2001 = vmatpush.msra.mxu0 0.0
    %2002 = vmatpush.msra.mxu0 0.0
    %2003 = vmatpush.msra.mxu0 0.0
    %2004 = vmatpush.msra.mxu0 0.0
    %2005 = vmatpush.msra.mxu0 0.0
    %2006 = vmatpush.msra.mxu0 0.0
    %2007 = vmatpush.msra.mxu0 0.0
    %2008 = vmatpush.msra.mxu0 0.0
    %2009 = vmatpush.msra.mxu0 0.0
    %2010 = vmatpush.msra.mxu0 0.0
    %2011 = vmatpush.msra.mxu0 0.0
    %2012 = vmatpush.msra.mxu0 0.0
    %2013 = vmatpush.msra.mxu0 0.0
    %2014 = vmatpush.msra.mxu0 0.0
    %2015 = vmatpush.msra.mxu0 0.0
    %2016 = vmatpush.msra.mxu0 %v1996
    %2017 = vmatmul.f32.gmra.mxu0 %v1999
    %v2018 = vpop.f32.mrf.mxu0
    %v2019 = vadd.f32 0.0, %v2018
    %2020 = vdwg.mxu0
    %2021 = vrot.lane.b32.xlu0 %v247, 108
    %v2022 = vpop.permute.xlu0 %2021
    %v2025 = vsel %vm174, %v1955, 0
    %2027 = vmatpush.msra.mxu0 0.0
    %2028 = vmatpush.msra.mxu0 0.0
    %2029 = vmatpush.msra.mxu0 0.0
    %2030 = vmatpush.msra.mxu0 0.0
    %2031 = vmatpush.msra.mxu0 0.0
    %2032 = vmatpush.msra.mxu0 0.0
    %2033 = vmatpush.msra.mxu0 0.0
    %2034 = vmatpush.msra.mxu0 0.0
    %2035 = vmatpush.msra.mxu0 0.0
    %2036 = vmatpush.msra.mxu0 0.0
    %2037 = vmatpush.msra.mxu0 0.0
    %2038 = vmatpush.msra.mxu0 0.0
    %2039 = vmatpush.msra.mxu0 0.0
    %2040 = vmatpush.msra.mxu0 0.0
    %2041 = vmatpush.msra.mxu0 0.0
    %2042 = vmatpush.msra.mxu0 %v2022
    %2043 = vmatmul.f32.gmra.mxu0 %v2025
    %v2044 = vpop.f32.mrf.mxu0
    %v2045 = vadd.f32 0.0, %v2044
    %2046 = vdwg.mxu0
    %2047 = vrot.lane.b32.xlu0 %v250, 108
    %v2048 = vpop.permute.xlu0 %2047
    %v2051 = vsel %vm174, %v1956, 0
    %2053 = vmatpush.msra.mxu0 0.0
    %2054 = vmatpush.msra.mxu0 0.0
    %2055 = vmatpush.msra.mxu0 0.0
    %2056 = vmatpush.msra.mxu0 0.0
    %2057 = vmatpush.msra.mxu0 0.0
    %2058 = vmatpush.msra.mxu0 0.0
    %2059 = vmatpush.msra.mxu0 0.0
    %2060 = vmatpush.msra.mxu0 0.0
    %2061 = vmatpush.msra.mxu0 0.0
    %2062 = vmatpush.msra.mxu0 0.0
    %2063 = vmatpush.msra.mxu0 0.0
    %2064 = vmatpush.msra.mxu0 0.0
    %2065 = vmatpush.msra.mxu0 0.0
    %2066 = vmatpush.msra.mxu0 0.0
    %2067 = vmatpush.msra.mxu0 0.0
    %2068 = vmatpush.msra.mxu0 %v2048
    %2069 = vmatmul.f32.gmra.mxu0 %v2051
    %v2070 = vpop.f32.mrf.mxu0
    %v2071 = vadd.f32 0.0, %v2070
    %2072 = vdwg.mxu0
    %2073 = vrot.lane.b32.xlu0 %v253, 108
    %v2074 = vpop.permute.xlu0 %2073
    %v2077 = vsel %vm174, %v1957, 0
    %2079 = vmatpush.msra.mxu0 0.0
    %2080 = vmatpush.msra.mxu0 0.0
    %2081 = vmatpush.msra.mxu0 0.0
    %2082 = vmatpush.msra.mxu0 0.0
    %2083 = vmatpush.msra.mxu0 0.0
    %2084 = vmatpush.msra.mxu0 0.0
    %2085 = vmatpush.msra.mxu0 0.0
    %2086 = vmatpush.msra.mxu0 0.0
    %2087 = vmatpush.msra.mxu0 0.0
    %2088 = vmatpush.msra.mxu0 0.0
    %2089 = vmatpush.msra.mxu0 0.0
    %2090 = vmatpush.msra.mxu0 0.0
    %2091 = vmatpush.msra.mxu0 0.0
    %2092 = vmatpush.msra.mxu0 0.0
    %2093 = vmatpush.msra.mxu0 0.0
    %2094 = vmatpush.msra.mxu0 %v2074
    %2095 = vmatmul.f32.gmra.mxu0 %v2077
    %v2096 = vpop.f32.mrf.mxu0
    %v2097 = vadd.f32 0.0, %v2096
    %2098 = vdwg.mxu0
    %2099 = vrot.lane.b32.xlu0 %v256, 108
    %v2100 = vpop.permute.xlu0 %2099
    %v2103 = vsel %vm174, %v1958, 0
    %2105 = vmatpush.msra.mxu0 0.0
    %2106 = vmatpush.msra.mxu0 0.0
    %2107 = vmatpush.msra.mxu0 0.0
    %2108 = vmatpush.msra.mxu0 0.0
    %2109 = vmatpush.msra.mxu0 0.0
    %2110 = vmatpush.msra.mxu0 0.0
    %2111 = vmatpush.msra.mxu0 0.0
    %2112 = vmatpush.msra.mxu0 0.0
    %2113 = vmatpush.msra.mxu0 0.0
    %2114 = vmatpush.msra.mxu0 0.0
    %2115 = vmatpush.msra.mxu0 0.0
    %2116 = vmatpush.msra.mxu0 0.0
    %2117 = vmatpush.msra.mxu0 0.0
    %2118 = vmatpush.msra.mxu0 0.0
    %2119 = vmatpush.msra.mxu0 0.0
    %2120 = vmatpush.msra.mxu0 %v2100
    %2121 = vmatmul.f32.gmra.mxu0 %v2103
    %v2122 = vpop.f32.mrf.mxu0
    %v2123 = vadd.f32 0.0, %v2122
    %2124 = vdwg.mxu0
    %2125 = vrot.lane.b32.xlu0 %v259, 108
    %v2126 = vpop.permute.xlu0 %2125
    %v2129 = vsel %vm174, %v1959, 0
    %2131 = vmatpush.msra.mxu0 0.0
    %2132 = vmatpush.msra.mxu0 0.0
    %2133 = vmatpush.msra.mxu0 0.0
    %2134 = vmatpush.msra.mxu0 0.0
    %2135 = vmatpush.msra.mxu0 0.0
    %2136 = vmatpush.msra.mxu0 0.0
    %2137 = vmatpush.msra.mxu0 0.0
    %2138 = vmatpush.msra.mxu0 0.0
    %2139 = vmatpush.msra.mxu0 0.0
    %2140 = vmatpush.msra.mxu0 0.0
    %2141 = vmatpush.msra.mxu0 0.0
    %2142 = vmatpush.msra.mxu0 0.0
    %2143 = vmatpush.msra.mxu0 0.0
    %2144 = vmatpush.msra.mxu0 0.0
    %2145 = vmatpush.msra.mxu0 0.0
    %2146 = vmatpush.msra.mxu0 %v2126
    %2147 = vmatmul.f32.gmra.mxu0 %v2129
    %v2148 = vpop.f32.mrf.mxu0
    %v2149 = vadd.f32 0.0, %v2148
    %2150 = vdwg.mxu0
    %2151 = vrot.lane.b32.xlu0 %v262, 108
    %v2152 = vpop.permute.xlu0 %2151
    %v2155 = vsel %vm174, %v1960, 0
    %2157 = vmatpush.msra.mxu0 0.0
    %2158 = vmatpush.msra.mxu0 0.0
    %2159 = vmatpush.msra.mxu0 0.0
    %2160 = vmatpush.msra.mxu0 0.0
    %2161 = vmatpush.msra.mxu0 0.0
    %2162 = vmatpush.msra.mxu0 0.0
    %2163 = vmatpush.msra.mxu0 0.0
    %2164 = vmatpush.msra.mxu0 0.0
    %2165 = vmatpush.msra.mxu0 0.0
    %2166 = vmatpush.msra.mxu0 0.0
    %2167 = vmatpush.msra.mxu0 0.0
    %2168 = vmatpush.msra.mxu0 0.0
    %2169 = vmatpush.msra.mxu0 0.0
    %2170 = vmatpush.msra.mxu0 0.0
    %2171 = vmatpush.msra.mxu0 0.0
    %2172 = vmatpush.msra.mxu0 %v2152
    %2173 = vmatmul.f32.gmra.mxu0 %v2155
    %v2174 = vpop.f32.mrf.mxu0
    %v2175 = vadd.f32 0.0, %v2174
    %2176 = vdwg.mxu0
    %2177 = vrot.lane.b32.xlu0 %v265, 108
    %v2178 = vpop.permute.xlu0 %2177
    %v2181 = vsel %vm174, %v1961, 0
    %2183 = vmatpush.msra.mxu0 0.0
    %2184 = vmatpush.msra.mxu0 0.0
    %2185 = vmatpush.msra.mxu0 0.0
    %2186 = vmatpush.msra.mxu0 0.0
    %2187 = vmatpush.msra.mxu0 0.0
    %2188 = vmatpush.msra.mxu0 0.0
    %2189 = vmatpush.msra.mxu0 0.0
    %2190 = vmatpush.msra.mxu0 0.0
    %2191 = vmatpush.msra.mxu0 0.0
    %2192 = vmatpush.msra.mxu0 0.0
    %2193 = vmatpush.msra.mxu0 0.0
    %2194 = vmatpush.msra.mxu0 0.0
    %2195 = vmatpush.msra.mxu0 0.0
    %2196 = vmatpush.msra.mxu0 0.0
    %2197 = vmatpush.msra.mxu0 0.0
    %2198 = vmatpush.msra.mxu0 %v2178
    %2199 = vmatmul.f32.gmra.mxu0 %v2181
    %v2200 = vpop.f32.mrf.mxu0
    %v2201 = vadd.f32 0.0, %v2200
    %2202 = vdwg.mxu0
    %2203 = vrot.lane.b32.xlu0 %v268, 108
    %v2204 = vpop.permute.xlu0 %2203
    %v2207 = vsel %vm174, %v1962, 0
    %2209 = vmatpush.msra.mxu0 0.0
    %2210 = vmatpush.msra.mxu0 0.0
    %2211 = vmatpush.msra.mxu0 0.0
    %2212 = vmatpush.msra.mxu0 0.0
    %2213 = vmatpush.msra.mxu0 0.0
    %2214 = vmatpush.msra.mxu0 0.0
    %2215 = vmatpush.msra.mxu0 0.0
    %2216 = vmatpush.msra.mxu0 0.0
    %2217 = vmatpush.msra.mxu0 0.0
    %2218 = vmatpush.msra.mxu0 0.0
    %2219 = vmatpush.msra.mxu0 0.0
    %2220 = vmatpush.msra.mxu0 0.0
    %2221 = vmatpush.msra.mxu0 0.0
    %2222 = vmatpush.msra.mxu0 0.0
    %2223 = vmatpush.msra.mxu0 0.0
    %2224 = vmatpush.msra.mxu0 %v2204
    %2225 = vmatmul.f32.gmra.mxu0 %v2207
    %v2226 = vpop.f32.mrf.mxu0
    %v2227 = vadd.f32 0.0, %v2226
    %2228 = vdwg.mxu0
    %2229 = vrot.lane.b32.xlu0 %v271, 108
    %v2230 = vpop.permute.xlu0 %2229
    %v2233 = vsel %vm174, %v1963, 0
    %2235 = vmatpush.msra.mxu0 0.0
    %2236 = vmatpush.msra.mxu0 0.0
    %2237 = vmatpush.msra.mxu0 0.0
    %2238 = vmatpush.msra.mxu0 0.0
    %2239 = vmatpush.msra.mxu0 0.0
    %2240 = vmatpush.msra.mxu0 0.0
    %2241 = vmatpush.msra.mxu0 0.0
    %2242 = vmatpush.msra.mxu0 0.0
    %2243 = vmatpush.msra.mxu0 0.0
    %2244 = vmatpush.msra.mxu0 0.0
    %2245 = vmatpush.msra.mxu0 0.0
    %2246 = vmatpush.msra.mxu0 0.0
    %2247 = vmatpush.msra.mxu0 0.0
    %2248 = vmatpush.msra.mxu0 0.0
    %2249 = vmatpush.msra.mxu0 0.0
    %2250 = vmatpush.msra.mxu0 %v2230
    %2251 = vmatmul.f32.gmra.mxu0 %v2233
    %v2252 = vpop.f32.mrf.mxu0
    %v2253 = vadd.f32 0.0, %v2252
    %2254 = vdwg.mxu0
    %2255 = vrot.lane.b32.xlu0 %v274, 108
    %v2256 = vpop.permute.xlu0 %2255
    %v2259 = vsel %vm174, %v1964, 0
    %2261 = vmatpush.msra.mxu0 0.0
    %2262 = vmatpush.msra.mxu0 0.0
    %2263 = vmatpush.msra.mxu0 0.0
    %2264 = vmatpush.msra.mxu0 0.0
    %2265 = vmatpush.msra.mxu0 0.0
    %2266 = vmatpush.msra.mxu0 0.0
    %2267 = vmatpush.msra.mxu0 0.0
    %2268 = vmatpush.msra.mxu0 0.0
    %2269 = vmatpush.msra.mxu0 0.0
    %2270 = vmatpush.msra.mxu0 0.0
    %2271 = vmatpush.msra.mxu0 0.0
    %2272 = vmatpush.msra.mxu0 0.0
    %2273 = vmatpush.msra.mxu0 0.0
    %2274 = vmatpush.msra.mxu0 0.0
    %2275 = vmatpush.msra.mxu0 0.0
    %2276 = vmatpush.msra.mxu0 %v2256
    %2277 = vmatmul.f32.gmra.mxu0 %v2259
    %v2278 = vpop.f32.mrf.mxu0
    %v2279 = vadd.f32 0.0, %v2278
    %2280 = vdwg.mxu0
    %2281 = vrot.lane.b32.xlu0 %v277, 108
    %v2282 = vpop.permute.xlu0 %2281
    %v2285 = vsel %vm174, %v1965, 0
    %2287 = vmatpush.msra.mxu0 0.0
    %2288 = vmatpush.msra.mxu0 0.0
    %2289 = vmatpush.msra.mxu0 0.0
    %2290 = vmatpush.msra.mxu0 0.0
    %2291 = vmatpush.msra.mxu0 0.0
    %2292 = vmatpush.msra.mxu0 0.0
    %2293 = vmatpush.msra.mxu0 0.0
    %2294 = vmatpush.msra.mxu0 0.0
    %2295 = vmatpush.msra.mxu0 0.0
    %2296 = vmatpush.msra.mxu0 0.0
    %2297 = vmatpush.msra.mxu0 0.0
    %2298 = vmatpush.msra.mxu0 0.0
    %2299 = vmatpush.msra.mxu0 0.0
    %2300 = vmatpush.msra.mxu0 0.0
    %2301 = vmatpush.msra.mxu0 0.0
    %2302 = vmatpush.msra.mxu0 %v2282
    %2303 = vmatmul.f32.gmra.mxu0 %v2285
    %v2304 = vpop.f32.mrf.mxu0
    %v2305 = vadd.f32 0.0, %v2304
    %2306 = vdwg.mxu0
    %2307 = vrot.lane.b32.xlu0 %v280, 108
    %v2308 = vpop.permute.xlu0 %2307
    %v2311 = vsel %vm174, %v1966, 0
    %2313 = vmatpush.msra.mxu0 0.0
    %2314 = vmatpush.msra.mxu0 0.0
    %2315 = vmatpush.msra.mxu0 0.0
    %2316 = vmatpush.msra.mxu0 0.0
    %2317 = vmatpush.msra.mxu0 0.0
    %2318 = vmatpush.msra.mxu0 0.0
    %2319 = vmatpush.msra.mxu0 0.0
    %2320 = vmatpush.msra.mxu0 0.0
    %2321 = vmatpush.msra.mxu0 0.0
    %2322 = vmatpush.msra.mxu0 0.0
    %2323 = vmatpush.msra.mxu0 0.0
    %2324 = vmatpush.msra.mxu0 0.0
    %2325 = vmatpush.msra.mxu0 0.0
    %2326 = vmatpush.msra.mxu0 0.0
    %2327 = vmatpush.msra.mxu0 0.0
    %2328 = vmatpush.msra.mxu0 %v2308
    %2329 = vmatmul.f32.gmra.mxu0 %v2311
    %v2330 = vpop.f32.mrf.mxu0
    %v2331 = vadd.f32 0.0, %v2330
    %2332 = vdwg.mxu0
    %2333 = vrot.lane.b32.xlu0 %v283, 108
    %v2334 = vpop.permute.xlu0 %2333
    %v2337 = vsel %vm174, %v1967, 0
    %2339 = vmatpush.msra.mxu0 0.0
    %2340 = vmatpush.msra.mxu0 0.0
    %2341 = vmatpush.msra.mxu0 0.0
    %2342 = vmatpush.msra.mxu0 0.0
    %2343 = vmatpush.msra.mxu0 0.0
    %2344 = vmatpush.msra.mxu0 0.0
    %2345 = vmatpush.msra.mxu0 0.0
    %2346 = vmatpush.msra.mxu0 0.0
    %2347 = vmatpush.msra.mxu0 0.0
    %2348 = vmatpush.msra.mxu0 0.0
    %2349 = vmatpush.msra.mxu0 0.0
    %2350 = vmatpush.msra.mxu0 0.0
    %2351 = vmatpush.msra.mxu0 0.0
    %2352 = vmatpush.msra.mxu0 0.0
    %2353 = vmatpush.msra.mxu0 0.0
    %2354 = vmatpush.msra.mxu0 %v2334
    %2355 = vmatmul.f32.gmra.mxu0 %v2337
    %v2356 = vpop.f32.mrf.mxu0
    %v2357 = vadd.f32 0.0, %v2356
    %2358 = vdwg.mxu0
    %2359 = vrot.lane.b32.xlu0 %v286, 108
    %v2360 = vpop.permute.xlu0 %2359
    %v2363 = vsel %vm174, %v1968, 0
    %2365 = vmatpush.msra.mxu0 0.0
    %2366 = vmatpush.msra.mxu0 0.0
    %2367 = vmatpush.msra.mxu0 0.0
    %2368 = vmatpush.msra.mxu0 0.0
    %2369 = vmatpush.msra.mxu0 0.0
    %2370 = vmatpush.msra.mxu0 0.0
    %2371 = vmatpush.msra.mxu0 0.0
    %2372 = vmatpush.msra.mxu0 0.0
    %2373 = vmatpush.msra.mxu0 0.0
    %2374 = vmatpush.msra.mxu0 0.0
    %2375 = vmatpush.msra.mxu0 0.0
    %2376 = vmatpush.msra.mxu0 0.0
    %2377 = vmatpush.msra.mxu0 0.0
    %2378 = vmatpush.msra.mxu0 0.0
    %2379 = vmatpush.msra.mxu0 0.0
    %2380 = vmatpush.msra.mxu0 %v2360
    %2381 = vmatmul.f32.gmra.mxu0 %v2363
    %v2382 = vpop.f32.mrf.mxu0
    %v2383 = vadd.f32 0.0, %v2382
    %2384 = vdwg.mxu0
    %2401 = vrot.lane.b32.xlu0 %v1993, 4
    %v2402 = vpop.permute.xlu0 %2401
    %2403 = vrot.lane.b32.xlu0 %v2019, 4
    %v2404 = vpop.permute.xlu0 %2403
    %2405 = vrot.lane.b32.xlu0 %v2045, 4
    %v2406 = vpop.permute.xlu0 %2405
    %2407 = vrot.lane.b32.xlu0 %v2071, 4
    %v2408 = vpop.permute.xlu0 %2407
    %2409 = vrot.lane.b32.xlu0 %v2097, 4
    %v2410 = vpop.permute.xlu0 %2409
    %2411 = vrot.lane.b32.xlu0 %v2123, 4
    %v2412 = vpop.permute.xlu0 %2411
    %2413 = vrot.lane.b32.xlu0 %v2149, 4
    %v2414 = vpop.permute.xlu0 %2413
    %2415 = vrot.lane.b32.xlu0 %v2175, 4
    %v2416 = vpop.permute.xlu0 %2415
    %2417 = vrot.lane.b32.xlu0 %v2201, 4
    %v2418 = vpop.permute.xlu0 %2417
    %2419 = vrot.lane.b32.xlu0 %v2227, 4
    %v2420 = vpop.permute.xlu0 %2419
    %2421 = vrot.lane.b32.xlu0 %v2253, 4
    %v2422 = vpop.permute.xlu0 %2421
    %2423 = vrot.lane.b32.xlu0 %v2279, 4
    %v2424 = vpop.permute.xlu0 %2423
    %2425 = vrot.lane.b32.xlu0 %v2305, 4
    %v2426 = vpop.permute.xlu0 %2425
    %2427 = vrot.lane.b32.xlu0 %v2331, 4
    %v2428 = vpop.permute.xlu0 %2427
    %2429 = vrot.lane.b32.xlu0 %v2357, 4
    %v2430 = vpop.permute.xlu0 %2429
    %2431 = vrot.lane.b32.xlu0 %v2383, 4
    %v2432 = vpop.permute.xlu0 %2431
    %v2449 = vsel %vm291, %v937, %v2402
    %v2450 = vsel %vm291, %v963, %v2404
    %v2451 = vsel %vm291, %v989, %v2406
    %v2452 = vsel %vm291, %v1015, %v2408
    %v2453 = vsel %vm291, %v1041, %v2410
    %v2454 = vsel %vm291, %v1067, %v2412
    %v2455 = vsel %vm291, %v1093, %v2414
    %v2456 = vsel %vm291, %v1119, %v2416
    %v2457 = vsel %vm291, %v1145, %v2418
    %v2458 = vsel %vm291, %v1171, %v2420
    %v2459 = vsel %vm291, %v1197, %v2422
    %v2460 = vsel %vm291, %v1223, %v2424
    %v2461 = vsel %vm291, %v1249, %v2426
    %v2462 = vsel %vm291, %v1275, %v2428
    %v2463 = vsel %vm291, %v1301, %v2430
    %v2464 = vsel %vm291, %v1327, %v2432
    %v2465 = vld [vmem:[#allocation2 + $0x10] sm:$0xff]
    %v2466 = vld [vmem:[%s3 + $0x3] sm:$0x1]
    %v2467 = vperm.slane %v2466, 0
    %v2469 = vsel %vm174, %v2449, 0
    %v2472 = vsel %vm174, %v2450, 0
    %v2475 = vsel %vm174, %v2451, 0
    %v2478 = vsel %vm174, %v2452, 0
    %v2481 = vsel %vm174, %v2453, 0
    %v2484 = vsel %vm174, %v2454, 0
    %v2487 = vsel %vm174, %v2455, 0
    %v2490 = vsel %vm174, %v2456, 0
    %v2493 = vsel %vm174, %v2457, 0
    %v2496 = vsel %vm174, %v2458, 0
    %v2499 = vsel %vm174, %v2459, 0
    %v2502 = vsel %vm174, %v2460, 0
    %v2505 = vsel %vm174, %v2461, 0
    %v2508 = vsel %vm174, %v2462, 0
    %v2511 = vsel %vm174, %v2463, 0
    %v2514 = vsel %vm174, %v2464, 0
    %2516 = vmatpush.msra.mxu0 0.0
    %2517 = vmatpush.msra.mxu0 0.0
    %2518 = vmatpush.msra.mxu0 0.0
    %2519 = vmatpush.msra.mxu0 0.0
    %2520 = vmatpush.msra.mxu0 0.0
    %2521 = vmatpush.msra.mxu0 0.0
    %2522 = vmatpush.msra.mxu0 0.0
    %2523 = vmatpush.msra.mxu0 0.0
    %2524 = vmatpush.msra.mxu0 0.0
    %2525 = vmatpush.msra.mxu0 0.0
    %2526 = vmatpush.msra.mxu0 0.0
    %2527 = vmatpush.msra.mxu0 0.0
    %2528 = vmatpush.msra.mxu0 0.0
    %2529 = vmatpush.msra.mxu0 0.0
    %2530 = vmatpush.msra.mxu0 0.0
    %2531 = vmatpush.msra.mxu0 %v2465
    %2532 = vmatmul.f32.gmra.mxu0 %v2469
    %v2533 = vpop.f32.mrf.mxu0
    %v2534 = vadd.f32 %v2467, %v2533
    %2535 = vmatmul.f32.gmra.mxu0 %v2472
    %v2536 = vpop.f32.mrf.mxu0
    %v2537 = vadd.f32 %v2467, %v2536
    %2538 = vmatmul.f32.gmra.mxu0 %v2475
    %v2539 = vpop.f32.mrf.mxu0
    %v2540 = vadd.f32 %v2467, %v2539
    %2541 = vmatmul.f32.gmra.mxu0 %v2478
    %v2542 = vpop.f32.mrf.mxu0
    %v2543 = vadd.f32 %v2467, %v2542
    %2544 = vmatmul.f32.gmra.mxu0 %v2481
    %v2545 = vpop.f32.mrf.mxu0
    %v2546 = vadd.f32 %v2467, %v2545
    %2547 = vmatmul.f32.gmra.mxu0 %v2484
    %v2548 = vpop.f32.mrf.mxu0
    %v2549 = vadd.f32 %v2467, %v2548
    %2550 = vmatmul.f32.gmra.mxu0 %v2487
    %v2551 = vpop.f32.mrf.mxu0
    %v2552 = vadd.f32 %v2467, %v2551
    %2553 = vmatmul.f32.gmra.mxu0 %v2490
    %v2554 = vpop.f32.mrf.mxu0
    %v2555 = vadd.f32 %v2467, %v2554
    %2556 = vmatmul.f32.gmra.mxu0 %v2493
    %v2557 = vpop.f32.mrf.mxu0
    %v2558 = vadd.f32 %v2467, %v2557
    %2559 = vmatmul.f32.gmra.mxu0 %v2496
    %v2560 = vpop.f32.mrf.mxu0
    %v2561 = vadd.f32 %v2467, %v2560
    %2562 = vmatmul.f32.gmra.mxu0 %v2499
    %v2563 = vpop.f32.mrf.mxu0
    %v2564 = vadd.f32 %v2467, %v2563
    %2565 = vmatmul.f32.gmra.mxu0 %v2502
    %v2566 = vpop.f32.mrf.mxu0
    %v2567 = vadd.f32 %v2467, %v2566
    %2568 = vmatmul.f32.gmra.mxu0 %v2505
    %v2569 = vpop.f32.mrf.mxu0
    %v2570 = vadd.f32 %v2467, %v2569
    %2571 = vmatmul.f32.gmra.mxu0 %v2508
    %v2572 = vpop.f32.mrf.mxu0
    %v2573 = vadd.f32 %v2467, %v2572
    %2574 = vmatmul.f32.gmra.mxu0 %v2511
    %v2575 = vpop.f32.mrf.mxu0
    %v2576 = vadd.f32 %v2467, %v2575
    %2577 = vmatmul.f32.gmra.mxu0 %v2514
    %v2578 = vpop.f32.mrf.mxu0
    %v2579 = vadd.f32 %v2467, %v2578
    %2580 = vdwg.mxu0
    %v2581 = vadd.f32 %v124, %v2534
    %v2582 = vadd.f32 %v127, %v2537
    %v2583 = vadd.f32 %v130, %v2540
    %v2584 = vadd.f32 %v133, %v2543
    %v2585 = vadd.f32 %v136, %v2546
    %v2586 = vadd.f32 %v139, %v2549
    %v2587 = vadd.f32 %v142, %v2552
    %v2588 = vadd.f32 %v145, %v2555
    %v2589 = vadd.f32 %v148, %v2558
    %v2590 = vadd.f32 %v151, %v2561
    %v2591 = vadd.f32 %v154, %v2564
    %v2592 = vadd.f32 %v157, %v2567
    %v2593 = vadd.f32 %v160, %v2570
    %v2594 = vadd.f32 %v163, %v2573
    %v2595 = vadd.f32 %v166, %v2576
    %v2596 = vadd.f32 %v169, %v2579
    %v2597 = vld [vmem:[%s3 + $0x4] sm:$0x1]
    %v2598 = vld [vmem:[%s3 + $0x5] sm:$0x1]
    %v2599 = vsel %vm174, %v2581, 0.0
    %2600 = vadd.xlane.f32.xlu0 %v2599
    %v2601 = vpop.xlane.xlu0 %2600
    %v2602 = vsel %vm174, %v2582, 0.0
    %2603 = vadd.xlane.f32.xlu0 %v2602
    %v2604 = vpop.xlane.xlu0 %2603
    %v2605 = vsel %vm174, %v2583, 0.0
    %2606 = vadd.xlane.f32.xlu0 %v2605
    %v2607 = vpop.xlane.xlu0 %2606
    %v2608 = vsel %vm174, %v2584, 0.0
    %2609 = vadd.xlane.f32.xlu0 %v2608
    %v2610 = vpop.xlane.xlu0 %2609
    %v2611 = vsel %vm174, %v2585, 0.0
    %2612 = vadd.xlane.f32.xlu0 %v2611
    %v2613 = vpop.xlane.xlu0 %2612
    %v2614 = vsel %vm174, %v2586, 0.0
    %2615 = vadd.xlane.f32.xlu0 %v2614
    %v2616 = vpop.xlane.xlu0 %2615
    %v2617 = vsel %vm174, %v2587, 0.0
    %2618 = vadd.xlane.f32.xlu0 %v2617
    %v2619 = vpop.xlane.xlu0 %2618
    %v2620 = vsel %vm174, %v2588, 0.0
    %2621 = vadd.xlane.f32.xlu0 %v2620
    %v2622 = vpop.xlane.xlu0 %2621
    %v2623 = vsel %vm174, %v2589, 0.0
    %2624 = vadd.xlane.f32.xlu0 %v2623
    %v2625 = vpop.xlane.xlu0 %2624
    %v2626 = vsel %vm174, %v2590, 0.0
    %2627 = vadd.xlane.f32.xlu0 %v2626
    %v2628 = vpop.xlane.xlu0 %2627
    %v2629 = vsel %vm174, %v2591, 0.0
    %2630 = vadd.xlane.f32.xlu0 %v2629
    %v2631 = vpop.xlane.xlu0 %2630
    %v2632 = vsel %vm174, %v2592, 0.0
    %2633 = vadd.xlane.f32.xlu0 %v2632
    %v2634 = vpop.xlane.xlu0 %2633
    %v2635 = vsel %vm174, %v2593, 0.0
    %2636 = vadd.xlane.f32.xlu0 %v2635
    %v2637 = vpop.xlane.xlu0 %2636
    %v2638 = vsel %vm174, %v2594, 0.0
    %2639 = vadd.xlane.f32.xlu0 %v2638
    %v2640 = vpop.xlane.xlu0 %2639
    %v2641 = vsel %vm174, %v2595, 0.0
    %2642 = vadd.xlane.f32.xlu0 %v2641
    %v2643 = vpop.xlane.xlu0 %2642
    %v2644 = vsel %vm174, %v2596, 0.0
    %2645 = vadd.xlane.f32.xlu0 %v2644
    %v2646 = vpop.xlane.xlu0 %2645
    %v2647 = vrcp.pop 8.0
    %v2648 = vmul.f32 8.0, %v2647
    %v2649 = vsub.f32 1.0, %v2648
    %v2650 = vmul.f32 %v2647, %v2649
    %v2651 = vadd.f32 %v2647, %v2650
    %vm2652 = vweird.f32 %v2647
    %v2653 = vsel %vm2652, %v2647, %v2651
    %v2654 = vmul.f32 %v2601, %v2653
    %v2655 = vmul.f32 %v2604, %v2653
    %v2656 = vmul.f32 %v2607, %v2653
    %v2657 = vmul.f32 %v2610, %v2653
    %v2658 = vmul.f32 %v2613, %v2653
    %v2659 = vmul.f32 %v2616, %v2653
    %v2660 = vmul.f32 %v2619, %v2653
    %v2661 = vmul.f32 %v2622, %v2653
    %v2662 = vmul.f32 %v2625, %v2653
    %v2663 = vmul.f32 %v2628, %v2653
    %v2664 = vmul.f32 %v2631, %v2653
    %v2665 = vmul.f32 %v2634, %v2653
    %v2666 = vmul.f32 %v2637, %v2653
    %v2667 = vmul.f32 %v2640, %v2653
    %v2668 = vmul.f32 %v2643, %v2653
    %v2669 = vmul.f32 %v2646, %v2653
    %v2670 = vsub.f32 %v2581, %v2654
    %v2671 = vsub.f32 %v2582, %v2655
    %v2672 = vsub.f32 %v2583, %v2656
    %v2673 = vsub.f32 %v2584, %v2657
    %v2674 = vsub.f32 %v2585, %v2658
    %v2675 = vsub.f32 %v2586, %v2659
    %v2676 = vsub.f32 %v2587, %v2660
    %v2677 = vsub.f32 %v2588, %v2661
    %v2678 = vsub.f32 %v2589, %v2662
    %v2679 = vsub.f32 %v2590, %v2663
    %v2680 = vsub.f32 %v2591, %v2664
    %v2681 = vsub.f32 %v2592, %v2665
    %v2682 = vsub.f32 %v2593, %v2666
    %v2683 = vsub.f32 %v2594, %v2667
    %v2684 = vsub.f32 %v2595, %v2668
    %v2685 = vsub.f32 %v2596, %v2669
    %v2686 = vmul.f32 %v2670, %v2670
    %v2687 = vmul.f32 %v2671, %v2671
    %v2688 = vmul.f32 %v2672, %v2672
    %v2689 = vmul.f32 %v2673, %v2673
    %v2690 = vmul.f32 %v2674, %v2674
    %v2691 = vmul.f32 %v2675, %v2675
    %v2692 = vmul.f32 %v2676, %v2676
    %v2693 = vmul.f32 %v2677, %v2677
    %v2694 = vmul.f32 %v2678, %v2678
    %v2695 = vmul.f32 %v2679, %v2679
    %v2696 = vmul.f32 %v2680, %v2680
    %v2697 = vmul.f32 %v2681, %v2681
    %v2698 = vmul.f32 %v2682, %v2682
    %v2699 = vmul.f32 %v2683, %v2683
    %v2700 = vmul.f32 %v2684, %v2684
    %v2701 = vmul.f32 %v2685, %v2685
    %v2702 = vsel %vm174, %v2686, 0.0
    %2703 = vadd.xlane.f32.xlu0 %v2702
    %v2704 = vpop.xlane.xlu0 %2703
    %v2705 = vsel %vm174, %v2687, 0.0
    %2706 = vadd.xlane.f32.xlu0 %v2705
    %v2707 = vpop.xlane.xlu0 %2706
    %v2708 = vsel %vm174, %v2688, 0.0
    %2709 = vadd.xlane.f32.xlu0 %v2708
    %v2710 = vpop.xlane.xlu0 %2709
    %v2711 = vsel %vm174, %v2689, 0.0
    %2712 = vadd.xlane.f32.xlu0 %v2711
    %v2713 = vpop.xlane.xlu0 %2712
    %v2714 = vsel %vm174, %v2690, 0.0
    %2715 = vadd.xlane.f32.xlu0 %v2714
    %v2716 = vpop.xlane.xlu0 %2715
    %v2717 = vsel %vm174, %v2691, 0.0
    %2718 = vadd.xlane.f32.xlu0 %v2717
    %v2719 = vpop.xlane.xlu0 %2718
    %v2720 = vsel %vm174, %v2692, 0.0
    %2721 = vadd.xlane.f32.xlu0 %v2720
    %v2722 = vpop.xlane.xlu0 %2721
    %v2723 = vsel %vm174, %v2693, 0.0
    %2724 = vadd.xlane.f32.xlu0 %v2723
    %v2725 = vpop.xlane.xlu0 %2724
    %v2726 = vsel %vm174, %v2694, 0.0
    %2727 = vadd.xlane.f32.xlu0 %v2726
    %v2728 = vpop.xlane.xlu0 %2727
    %v2729 = vsel %vm174, %v2695, 0.0
    %2730 = vadd.xlane.f32.xlu0 %v2729
    %v2731 = vpop.xlane.xlu0 %2730
    %v2732 = vsel %vm174, %v2696, 0.0
    %2733 = vadd.xlane.f32.xlu0 %v2732
    %v2734 = vpop.xlane.xlu0 %2733
    %v2735 = vsel %vm174, %v2697, 0.0
    %2736 = vadd.xlane.f32.xlu0 %v2735
    %v2737 = vpop.xlane.xlu0 %2736
    %v2738 = vsel %vm174, %v2698, 0.0
    %2739 = vadd.xlane.f32.xlu0 %v2738
    %v2740 = vpop.xlane.xlu0 %2739
    %v2741 = vsel %vm174, %v2699, 0.0
    %2742 = vadd.xlane.f32.xlu0 %v2741
    %v2743 = vpop.xlane.xlu0 %2742
    %v2744 = vsel %vm174, %v2700, 0.0
    %2745 = vadd.xlane.f32.xlu0 %v2744
    %v2746 = vpop.xlane.xlu0 %2745
    %v2747 = vsel %vm174, %v2701, 0.0
    %2748 = vadd.xlane.f32.xlu0 %v2747
    %v2749 = vpop.xlane.xlu0 %2748
    %v2750 = vmul.f32 %v2704, %v2653
    %v2751 = vmul.f32 %v2707, %v2653
    %v2752 = vmul.f32 %v2710, %v2653
    %v2753 = vmul.f32 %v2713, %v2653
    %v2754 = vmul.f32 %v2716, %v2653
    %v2755 = vmul.f32 %v2719, %v2653
    %v2756 = vmul.f32 %v2722, %v2653
    %v2757 = vmul.f32 %v2725, %v2653
    %v2758 = vmul.f32 %v2728, %v2653
    %v2759 = vmul.f32 %v2731, %v2653
    %v2760 = vmul.f32 %v2734, %v2653
    %v2761 = vmul.f32 %v2737, %v2653
    %v2762 = vmul.f32 %v2740, %v2653
    %v2763 = vmul.f32 %v2743, %v2653
    %v2764 = vmul.f32 %v2746, %v2653
    %v2765 = vmul.f32 %v2749, %v2653
    %v2766 = vadd.f32 %v2750, 1e-05
    %v2767 = vadd.f32 %v2751, 1e-05
    %v2768 = vadd.f32 %v2752, 1e-05
    %v2769 = vadd.f32 %v2753, 1e-05
    %v2770 = vadd.f32 %v2754, 1e-05
    %v2771 = vadd.f32 %v2755, 1e-05
    %v2772 = vadd.f32 %v2756, 1e-05
    %v2773 = vadd.f32 %v2757, 1e-05
    %v2774 = vadd.f32 %v2758, 1e-05
    %v2775 = vadd.f32 %v2759, 1e-05
    %v2776 = vadd.f32 %v2760, 1e-05
    %v2777 = vadd.f32 %v2761, 1e-05
    %v2778 = vadd.f32 %v2762, 1e-05
    %v2779 = vadd.f32 %v2763, 1e-05
    %v2780 = vadd.f32 %v2764, 1e-05
    %v2781 = vadd.f32 %v2765, 1e-05
    %v2782 = vrsqrt.pop %v2766
    %v2783 = vmul.f32 %v2782, %v2766
    %v2784 = vmul.f32 %v2783, %v2782
    %v2785 = vmul.f32 0.5, %v2784
    %v2786 = vsub.f32 1.5, %v2785
    %v2787 = vmul.f32 %v2782, %v2786
    %vm2788 = vweird.f32 %v2766
    %vm2789 = vweird.f32 %v2782
    %vm2790 = vmor %vm2788, %vm2789
    %v2791 = vsel %vm2790, %v2782, %v2787
    %v2792 = vrsqrt.pop %v2767
    %v2793 = vmul.f32 %v2792, %v2767
    %v2794 = vmul.f32 %v2793, %v2792
    %v2795 = vmul.f32 0.5, %v2794
    %v2796 = vsub.f32 1.5, %v2795
    %v2797 = vmul.f32 %v2792, %v2796
    %vm2798 = vweird.f32 %v2767
    %vm2799 = vweird.f32 %v2792
    %vm2800 = vmor %vm2798, %vm2799
    %v2801 = vsel %vm2800, %v2792, %v2797
    %v2802 = vrsqrt.pop %v2768
    %v2803 = vmul.f32 %v2802, %v2768
    %v2804 = vmul.f32 %v2803, %v2802
    %v2805 = vmul.f32 0.5, %v2804
    %v2806 = vsub.f32 1.5, %v2805
    %v2807 = vmul.f32 %v2802, %v2806
    %vm2808 = vweird.f32 %v2768
    %vm2809 = vweird.f32 %v2802
    %vm2810 = vmor %vm2808, %vm2809
    %v2811 = vsel %vm2810, %v2802, %v2807
    %v2812 = vrsqrt.pop %v2769
    %v2813 = vmul.f32 %v2812, %v2769
    %v2814 = vmul.f32 %v2813, %v2812
    %v2815 = vmul.f32 0.5, %v2814
    %v2816 = vsub.f32 1.5, %v2815
    %v2817 = vmul.f32 %v2812, %v2816
    %vm2818 = vweird.f32 %v2769
    %vm2819 = vweird.f32 %v2812
    %vm2820 = vmor %vm2818, %vm2819
    %v2821 = vsel %vm2820, %v2812, %v2817
    %v2822 = vrsqrt.pop %v2770
    %v2823 = vmul.f32 %v2822, %v2770
    %v2824 = vmul.f32 %v2823, %v2822
    %v2825 = vmul.f32 0.5, %v2824
    %v2826 = vsub.f32 1.5, %v2825
    %v2827 = vmul.f32 %v2822, %v2826
    %vm2828 = vweird.f32 %v2770
    %vm2829 = vweird.f32 %v2822
    %vm2830 = vmor %vm2828, %vm2829
    %v2831 = vsel %vm2830, %v2822, %v2827
    %v2832 = vrsqrt.pop %v2771
    %v2833 = vmul.f32 %v2832, %v2771
    %v2834 = vmul.f32 %v2833, %v2832
    %v2835 = vmul.f32 0.5, %v2834
    %v2836 = vsub.f32 1.5, %v2835
    %v2837 = vmul.f32 %v2832, %v2836
    %vm2838 = vweird.f32 %v2771
    %vm2839 = vweird.f32 %v2832
    %vm2840 = vmor %vm2838, %vm2839
    %v2841 = vsel %vm2840, %v2832, %v2837
    %v2842 = vrsqrt.pop %v2772
    %v2843 = vmul.f32 %v2842, %v2772
    %v2844 = vmul.f32 %v2843, %v2842
    %v2845 = vmul.f32 0.5, %v2844
    %v2846 = vsub.f32 1.5, %v2845
    %v2847 = vmul.f32 %v2842, %v2846
    %vm2848 = vweird.f32 %v2772
    %vm2849 = vweird.f32 %v2842
    %vm2850 = vmor %vm2848, %vm2849
    %v2851 = vsel %vm2850, %v2842, %v2847
    %v2852 = vrsqrt.pop %v2773
    %v2853 = vmul.f32 %v2852, %v2773
    %v2854 = vmul.f32 %v2853, %v2852
    %v2855 = vmul.f32 0.5, %v2854
    %v2856 = vsub.f32 1.5, %v2855
    %v2857 = vmul.f32 %v2852, %v2856
    %vm2858 = vweird.f32 %v2773
    %vm2859 = vweird.f32 %v2852
    %vm2860 = vmor %vm2858, %vm2859
    %v2861 = vsel %vm2860, %v2852, %v2857
    %v2862 = vrsqrt.pop %v2774
    %v2863 = vmul.f32 %v2862, %v2774
    %v2864 = vmul.f32 %v2863, %v2862
    %v2865 = vmul.f32 0.5, %v2864
    %v2866 = vsub.f32 1.5, %v2865
    %v2867 = vmul.f32 %v2862, %v2866
    %vm2868 = vweird.f32 %v2774
    %vm2869 = vweird.f32 %v2862
    %vm2870 = vmor %vm2868, %vm2869
    %v2871 = vsel %vm2870, %v2862, %v2867
    %v2872 = vrsqrt.pop %v2775
    %v2873 = vmul.f32 %v2872, %v2775
    %v2874 = vmul.f32 %v2873, %v2872
    %v2875 = vmul.f32 0.5, %v2874
    %v2876 = vsub.f32 1.5, %v2875
    %v2877 = vmul.f32 %v2872, %v2876
    %vm2878 = vweird.f32 %v2775
    %vm2879 = vweird.f32 %v2872
    %vm2880 = vmor %vm2878, %vm2879
    %v2881 = vsel %vm2880, %v2872, %v2877
    %v2882 = vrsqrt.pop %v2776
    %v2883 = vmul.f32 %v2882, %v2776
    %v2884 = vmul.f32 %v2883, %v2882
    %v2885 = vmul.f32 0.5, %v2884
    %v2886 = vsub.f32 1.5, %v2885
    %v2887 = vmul.f32 %v2882, %v2886
    %vm2888 = vweird.f32 %v2776
    %vm2889 = vweird.f32 %v2882
    %vm2890 = vmor %vm2888, %vm2889
    %v2891 = vsel %vm2890, %v2882, %v2887
    %v2892 = vrsqrt.pop %v2777
    %v2893 = vmul.f32 %v2892, %v2777
    %v2894 = vmul.f32 %v2893, %v2892
    %v2895 = vmul.f32 0.5, %v2894
    %v2896 = vsub.f32 1.5, %v2895
    %v2897 = vmul.f32 %v2892, %v2896
    %vm2898 = vweird.f32 %v2777
    %vm2899 = vweird.f32 %v2892
    %vm2900 = vmor %vm2898, %vm2899
    %v2901 = vsel %vm2900, %v2892, %v2897
    %v2902 = vrsqrt.pop %v2778
    %v2903 = vmul.f32 %v2902, %v2778
    %v2904 = vmul.f32 %v2903, %v2902
    %v2905 = vmul.f32 0.5, %v2904
    %v2906 = vsub.f32 1.5, %v2905
    %v2907 = vmul.f32 %v2902, %v2906
    %vm2908 = vweird.f32 %v2778
    %vm2909 = vweird.f32 %v2902
    %vm2910 = vmor %vm2908, %vm2909
    %v2911 = vsel %vm2910, %v2902, %v2907
    %v2912 = vrsqrt.pop %v2779
    %v2913 = vmul.f32 %v2912, %v2779
    %v2914 = vmul.f32 %v2913, %v2912
    %v2915 = vmul.f32 0.5, %v2914
    %v2916 = vsub.f32 1.5, %v2915
    %v2917 = vmul.f32 %v2912, %v2916
    %vm2918 = vweird.f32 %v2779
    %vm2919 = vweird.f32 %v2912
    %vm2920 = vmor %vm2918, %vm2919
    %v2921 = vsel %vm2920, %v2912, %v2917
    %v2922 = vrsqrt.pop %v2780
    %v2923 = vmul.f32 %v2922, %v2780
    %v2924 = vmul.f32 %v2923, %v2922
    %v2925 = vmul.f32 0.5, %v2924
    %v2926 = vsub.f32 1.5, %v2925
    %v2927 = vmul.f32 %v2922, %v2926
    %vm2928 = vweird.f32 %v2780
    %vm2929 = vweird.f32 %v2922
    %vm2930 = vmor %vm2928, %vm2929
    %v2931 = vsel %vm2930, %v2922, %v2927
    %v2932 = vrsqrt.pop %v2781
    %v2933 = vmul.f32 %v2932, %v2781
    %v2934 = vmul.f32 %v2933, %v2932
    %v2935 = vmul.f32 0.5, %v2934
    %v2936 = vsub.f32 1.5, %v2935
    %v2937 = vmul.f32 %v2932, %v2936
    %vm2938 = vweird.f32 %v2781
    %vm2939 = vweird.f32 %v2932
    %vm2940 = vmor %vm2938, %vm2939
    %v2941 = vsel %vm2940, %v2932, %v2937
    %v2942 = vmul.f32 %v2670, %v2791
    %v2943 = vmul.f32 %v2671, %v2801
    %v2944 = vmul.f32 %v2672, %v2811
    %v2945 = vmul.f32 %v2673, %v2821
    %v2946 = vmul.f32 %v2674, %v2831
    %v2947 = vmul.f32 %v2675, %v2841
    %v2948 = vmul.f32 %v2676, %v2851
    %v2949 = vmul.f32 %v2677, %v2861
    %v2950 = vmul.f32 %v2678, %v2871
    %v2951 = vmul.f32 %v2679, %v2881
    %v2952 = vmul.f32 %v2680, %v2891
    %v2953 = vmul.f32 %v2681, %v2901
    %v2954 = vmul.f32 %v2682, %v2911
    %v2955 = vmul.f32 %v2683, %v2921
    %v2956 = vmul.f32 %v2684, %v2931
    %v2957 = vmul.f32 %v2685, %v2941
    %v2958 = vperm.slane %v2597, 0
    %v2959 = vmul.f32 %v2942, %v2958
    %v2960 = vmul.f32 %v2943, %v2958
    %v2961 = vmul.f32 %v2944, %v2958
    %v2962 = vmul.f32 %v2945, %v2958
    %v2963 = vmul.f32 %v2946, %v2958
    %v2964 = vmul.f32 %v2947, %v2958
    %v2965 = vmul.f32 %v2948, %v2958
    %v2966 = vmul.f32 %v2949, %v2958
    %v2967 = vmul.f32 %v2950, %v2958
    %v2968 = vmul.f32 %v2951, %v2958
    %v2969 = vmul.f32 %v2952, %v2958
    %v2970 = vmul.f32 %v2953, %v2958
    %v2971 = vmul.f32 %v2954, %v2958
    %v2972 = vmul.f32 %v2955, %v2958
    %v2973 = vmul.f32 %v2956, %v2958
    %v2974 = vmul.f32 %v2957, %v2958
    %v2975 = vperm.slane %v2598, 0
    %v2976 = vadd.f32 %v2959, %v2975
    %v2977 = vadd.f32 %v2960, %v2975
    %v2978 = vadd.f32 %v2961, %v2975
    %v2979 = vadd.f32 %v2962, %v2975
    %v2980 = vadd.f32 %v2963, %v2975
    %v2981 = vadd.f32 %v2964, %v2975
    %v2982 = vadd.f32 %v2965, %v2975
    %v2983 = vadd.f32 %v2966, %v2975
    %v2984 = vadd.f32 %v2967, %v2975
    %v2985 = vadd.f32 %v2968, %v2975
    %v2986 = vadd.f32 %v2969, %v2975
    %v2987 = vadd.f32 %v2970, %v2975
    %v2988 = vadd.f32 %v2971, %v2975
    %v2989 = vadd.f32 %v2972, %v2975
    %v2990 = vadd.f32 %v2973, %v2975
    %v2991 = vadd.f32 %v2974, %v2975
    %v2992 = vld [vmem:[#allocation2 + $0x18] sm:$0xff]
    %v2993 = vld [vmem:[%s3 + $0x6] sm:$0x1]
    %v2994 = vperm.slane %v2993, 0
    %v2996 = vsel %vm174, %v2976, 0
    %v2999 = vsel %vm174, %v2977, 0
    %v3002 = vsel %vm174, %v2978, 0
    %v3005 = vsel %vm174, %v2979, 0
    %v3008 = vsel %vm174, %v2980, 0
    %v3011 = vsel %vm174, %v2981, 0
    %v3014 = vsel %vm174, %v2982, 0
    %v3017 = vsel %vm174, %v2983, 0
    %v3020 = vsel %vm174, %v2984, 0
    %v3023 = vsel %vm174, %v2985, 0
    %v3026 = vsel %vm174, %v2986, 0
    %v3029 = vsel %vm174, %v2987, 0
    %v3032 = vsel %vm174, %v2988, 0
    %v3035 = vsel %vm174, %v2989, 0
    %v3038 = vsel %vm174, %v2990, 0
    %v3041 = vsel %vm174, %v2991, 0
    %3043 = vmatpush.msra.mxu0 0.0
    %3044 = vmatpush.msra.mxu0 0.0
    %3045 = vmatpush.msra.mxu0 0.0
    %3046 = vmatpush.msra.mxu0 0.0
    %3047 = vmatpush.msra.mxu0 0.0
    %3048 = vmatpush.msra.mxu0 0.0
    %3049 = vmatpush.msra.mxu0 0.0
    %3050 = vmatpush.msra.mxu0 0.0
    %3051 = vmatpush.msra.mxu0 0.0
    %3052 = vmatpush.msra.mxu0 0.0
    %3053 = vmatpush.msra.mxu0 0.0
    %3054 = vmatpush.msra.mxu0 0.0
    %3055 = vmatpush.msra.mxu0 0.0
    %3056 = vmatpush.msra.mxu0 0.0
    %3057 = vmatpush.msra.mxu0 0.0
    %3058 = vmatpush.msra.mxu0 %v2992
    %3059 = vmatmul.f32.gmra.mxu0 %v2996
    %v3060 = vpop.f32.mrf.mxu0
    %v3061 = vadd.f32 %v2994, %v3060
    %3062 = vmatmul.f32.gmra.mxu0 %v2999
    %v3063 = vpop.f32.mrf.mxu0
    %v3064 = vadd.f32 %v2994, %v3063
    %3065 = vmatmul.f32.gmra.mxu0 %v3002
    %v3066 = vpop.f32.mrf.mxu0
    %v3067 = vadd.f32 %v2994, %v3066
    %3068 = vmatmul.f32.gmra.mxu0 %v3005
    %v3069 = vpop.f32.mrf.mxu0
    %v3070 = vadd.f32 %v2994, %v3069
    %3071 = vmatmul.f32.gmra.mxu0 %v3008
    %v3072 = vpop.f32.mrf.mxu0
    %v3073 = vadd.f32 %v2994, %v3072
    %3074 = vmatmul.f32.gmra.mxu0 %v3011
    %v3075 = vpop.f32.mrf.mxu0
    %v3076 = vadd.f32 %v2994, %v3075
    %3077 = vmatmul.f32.gmra.mxu0 %v3014
    %v3078 = vpop.f32.mrf.mxu0
    %v3079 = vadd.f32 %v2994, %v3078
    %3080 = vmatmul.f32.gmra.mxu0 %v3017
    %v3081 = vpop.f32.mrf.mxu0
    %v3082 = vadd.f32 %v2994, %v3081
    %3083 = vmatmul.f32.gmra.mxu0 %v3020
    %v3084 = vpop.f32.mrf.mxu0
    %v3085 = vadd.f32 %v2994, %v3084
    %3086 = vmatmul.f32.gmra.mxu0 %v3023
    %v3087 = vpop.f32.mrf.mxu0
    %v3088 = vadd.f32 %v2994, %v3087
    %3089 = vmatmul.f32.gmra.mxu0 %v3026
    %v3090 = vpop.f32.mrf.mxu0
    %v3091 = vadd.f32 %v2994, %v3090
    %3092 = vmatmul.f32.gmra.mxu0 %v3029
    %v3093 = vpop.f32.mrf.mxu0
    %v3094 = vadd.f32 %v2994, %v3093
    %3095 = vmatmul.f32.gmra.mxu0 %v3032
    %v3096 = vpop.f32.mrf.mxu0
    %v3097 = vadd.f32 %v2994, %v3096
    %3098 = vmatmul.f32.gmra.mxu0 %v3035
    %v3099 = vpop.f32.mrf.mxu0
    %v3100 = vadd.f32 %v2994, %v3099
    %3101 = vmatmul.f32.gmra.mxu0 %v3038
    %v3102 = vpop.f32.mrf.mxu0
    %v3103 = vadd.f32 %v2994, %v3102
    %3104 = vmatmul.f32.gmra.mxu0 %v3041
    %v3105 = vpop.f32.mrf.mxu0
    %v3106 = vadd.f32 %v2994, %v3105
    %3107 = vdwg.mxu0
    %v3108 = vmax.f32 %v3061, 0.0
    %v3109 = vmax.f32 %v3064, 0.0
    %v3110 = vmax.f32 %v3067, 0.0
    %v3111 = vmax.f32 %v3070, 0.0
    %v3112 = vmax.f32 %v3073, 0.0
    %v3113 = vmax.f32 %v3076, 0.0
    %v3114 = vmax.f32 %v3079, 0.0
    %v3115 = vmax.f32 %v3082, 0.0
    %v3116 = vmax.f32 %v3085, 0.0
    %v3117 = vmax.f32 %v3088, 0.0
    %v3118 = vmax.f32 %v3091, 0.0
    %v3119 = vmax.f32 %v3094, 0.0
    %v3120 = vmax.f32 %v3097, 0.0
    %v3121 = vmax.f32 %v3100, 0.0
    %v3122 = vmax.f32 %v3103, 0.0
    %v3123 = vmax.f32 %v3106, 0.0
    %v3124 = vld [vmem:[#allocation2 + $0x20] sm:$0xff]
    %v3125 = vld [vmem:[#allocation2 + $0x28] sm:$0xff]
    %v3126 = vld [vmem:[#allocation2 + $0x30] sm:$0xff]
    %v3127 = vld [vmem:[#allocation2 + $0x38] sm:$0xff]
    %v3128 = vld [vmem:[%s3 + $0x7] sm:$0x1]
    %v3129 = vperm.slane %v3128, 0
    %vm3130 = vcmask 261120
    %v3132 = vsel %vm3130, %v3108, 0
    %v3135 = vsel %vm3130, %v3109, 0
    %v3138 = vsel %vm3130, %v3110, 0
    %v3141 = vsel %vm3130, %v3111, 0
    %v3144 = vsel %vm3130, %v3112, 0
    %v3147 = vsel %vm3130, %v3113, 0
    %v3150 = vsel %vm3130, %v3114, 0
    %v3153 = vsel %vm3130, %v3115, 0
    %v3156 = vsel %vm3130, %v3116, 0
    %v3159 = vsel %vm3130, %v3117, 0
    %v3162 = vsel %vm3130, %v3118, 0
    %v3165 = vsel %vm3130, %v3119, 0
    %v3168 = vsel %vm3130, %v3120, 0
    %v3171 = vsel %vm3130, %v3121, 0
    %v3174 = vsel %vm3130, %v3122, 0
    %v3177 = vsel %vm3130, %v3123, 0
    %3179 = vmatpush.msra.mxu0 0.0
    %3180 = vmatpush.msra.mxu0 0.0
    %3181 = vmatpush.msra.mxu0 0.0
    %3182 = vmatpush.msra.mxu0 0.0
    %3183 = vmatpush.msra.mxu0 0.0
    %3184 = vmatpush.msra.mxu0 0.0
    %3185 = vmatpush.msra.mxu0 0.0
    %3186 = vmatpush.msra.mxu0 0.0
    %3187 = vmatpush.msra.mxu0 0.0
    %3188 = vmatpush.msra.mxu0 0.0
    %3189 = vmatpush.msra.mxu0 0.0
    %3190 = vmatpush.msra.mxu0 0.0
    %3191 = vmatpush.msra.mxu0 %v3127
    %3192 = vmatpush.msra.mxu0 %v3126
    %3193 = vmatpush.msra.mxu0 %v3125
    %3194 = vmatpush.msra.mxu0 %v3124
    %3195 = vmatmul.f32.gmra.mxu0 %v3132
    %v3196 = vpop.f32.mrf.mxu0
    %v3197 = vadd.f32 %v3129, %v3196
    %3198 = vmatmul.f32.gmra.mxu0 %v3135
    %v3199 = vpop.f32.mrf.mxu0
    %v3200 = vadd.f32 %v3129, %v3199
    %3201 = vmatmul.f32.gmra.mxu0 %v3138
    %v3202 = vpop.f32.mrf.mxu0
    %v3203 = vadd.f32 %v3129, %v3202
    %3204 = vmatmul.f32.gmra.mxu0 %v3141
    %v3205 = vpop.f32.mrf.mxu0
    %v3206 = vadd.f32 %v3129, %v3205
    %3207 = vmatmul.f32.gmra.mxu0 %v3144
    %v3208 = vpop.f32.mrf.mxu0
    %v3209 = vadd.f32 %v3129, %v3208
    %3210 = vmatmul.f32.gmra.mxu0 %v3147
    %v3211 = vpop.f32.mrf.mxu0
    %v3212 = vadd.f32 %v3129, %v3211
    %3213 = vmatmul.f32.gmra.mxu0 %v3150
    %v3214 = vpop.f32.mrf.mxu0
    %v3215 = vadd.f32 %v3129, %v3214
    %3216 = vmatmul.f32.gmra.mxu0 %v3153
    %v3217 = vpop.f32.mrf.mxu0
    %v3218 = vadd.f32 %v3129, %v3217
    %3219 = vmatmul.f32.gmra.mxu0 %v3156
    %v3220 = vpop.f32.mrf.mxu0
    %v3221 = vadd.f32 %v3129, %v3220
    %3222 = vmatmul.f32.gmra.mxu0 %v3159
    %v3223 = vpop.f32.mrf.mxu0
    %v3224 = vadd.f32 %v3129, %v3223
    %3225 = vmatmul.f32.gmra.mxu0 %v3162
    %v3226 = vpop.f32.mrf.mxu0
    %v3227 = vadd.f32 %v3129, %v3226
    %3228 = vmatmul.f32.gmra.mxu0 %v3165
    %v3229 = vpop.f32.mrf.mxu0
    %v3230 = vadd.f32 %v3129, %v3229
    %3231 = vmatmul.f32.gmra.mxu0 %v3168
    %v3232 = vpop.f32.mrf.mxu0
    %v3233 = vadd.f32 %v3129, %v3232
    %3234 = vmatmul.f32.gmra.mxu0 %v3171
    %v3235 = vpop.f32.mrf.mxu0
    %v3236 = vadd.f32 %v3129, %v3235
    %3237 = vmatmul.f32.gmra.mxu0 %v3174
    %v3238 = vpop.f32.mrf.mxu0
    %v3239 = vadd.f32 %v3129, %v3238
    %3240 = vmatmul.f32.gmra.mxu0 %v3177
    %v3241 = vpop.f32.mrf.mxu0
    %v3242 = vadd.f32 %v3129, %v3241
    %3243 = vdwg.mxu0
    %v3244 = vadd.f32 %v2976, %v3197
    %v3245 = vadd.f32 %v2977, %v3200
    %v3246 = vadd.f32 %v2978, %v3203
    %v3247 = vadd.f32 %v2979, %v3206
    %v3248 = vadd.f32 %v2980, %v3209
    %v3249 = vadd.f32 %v2981, %v3212
    %v3250 = vadd.f32 %v2982, %v3215
    %v3251 = vadd.f32 %v2983, %v3218
    %v3252 = vadd.f32 %v2984, %v3221
    %v3253 = vadd.f32 %v2985, %v3224
    %v3254 = vadd.f32 %v2986, %v3227
    %v3255 = vadd.f32 %v2987, %v3230
    %v3256 = vadd.f32 %v2988, %v3233
    %v3257 = vadd.f32 %v2989, %v3236
    %v3258 = vadd.f32 %v2990, %v3239
    %v3259 = vadd.f32 %v2991, %v3242
    %v3260 = vld [vmem:[%s3 + $0x8] sm:$0x1]
    %v3261 = vld [vmem:[%s3 + $0x9] sm:$0x1]
    %v3262 = vsel %vm174, %v3244, 0.0
    %3263 = vadd.xlane.f32.xlu0 %v3262
    %v3264 = vpop.xlane.xlu0 %3263
    %v3265 = vsel %vm174, %v3245, 0.0
    %3266 = vadd.xlane.f32.xlu0 %v3265
    %v3267 = vpop.xlane.xlu0 %3266
    %v3268 = vsel %vm174, %v3246, 0.0
    %3269 = vadd.xlane.f32.xlu0 %v3268
    %v3270 = vpop.xlane.xlu0 %3269
    %v3271 = vsel %vm174, %v3247, 0.0
    %3272 = vadd.xlane.f32.xlu0 %v3271
    %v3273 = vpop.xlane.xlu0 %3272
    %v3274 = vsel %vm174, %v3248, 0.0
    %3275 = vadd.xlane.f32.xlu0 %v3274
    %v3276 = vpop.xlane.xlu0 %3275
    %v3277 = vsel %vm174, %v3249, 0.0
    %3278 = vadd.xlane.f32.xlu0 %v3277
    %v3279 = vpop.xlane.xlu0 %3278
    %v3280 = vsel %vm174, %v3250, 0.0
    %3281 = vadd.xlane.f32.xlu0 %v3280
    %v3282 = vpop.xlane.xlu0 %3281
    %v3283 = vsel %vm174, %v3251, 0.0
    %3284 = vadd.xlane.f32.xlu0 %v3283
    %v3285 = vpop.xlane.xlu0 %3284
    %v3286 = vsel %vm174, %v3252, 0.0
    %3287 = vadd.xlane.f32.xlu0 %v3286
    %v3288 = vpop.xlane.xlu0 %3287
    %v3289 = vsel %vm174, %v3253, 0.0
    %3290 = vadd.xlane.f32.xlu0 %v3289
    %v3291 = vpop.xlane.xlu0 %3290
    %v3292 = vsel %vm174, %v3254, 0.0
    %3293 = vadd.xlane.f32.xlu0 %v3292
    %v3294 = vpop.xlane.xlu0 %3293
    %v3295 = vsel %vm174, %v3255, 0.0
    %3296 = vadd.xlane.f32.xlu0 %v3295
    %v3297 = vpop.xlane.xlu0 %3296
    %v3298 = vsel %vm174, %v3256, 0.0
    %3299 = vadd.xlane.f32.xlu0 %v3298
    %v3300 = vpop.xlane.xlu0 %3299
    %v3301 = vsel %vm174, %v3257, 0.0
    %3302 = vadd.xlane.f32.xlu0 %v3301
    %v3303 = vpop.xlane.xlu0 %3302
    %v3304 = vsel %vm174, %v3258, 0.0
    %3305 = vadd.xlane.f32.xlu0 %v3304
    %v3306 = vpop.xlane.xlu0 %3305
    %v3307 = vsel %vm174, %v3259, 0.0
    %3308 = vadd.xlane.f32.xlu0 %v3307
    %v3309 = vpop.xlane.xlu0 %3308
    %v3310 = vmul.f32 %v3264, %v2653
    %v3311 = vmul.f32 %v3267, %v2653
    %v3312 = vmul.f32 %v3270, %v2653
    %v3313 = vmul.f32 %v3273, %v2653
    %v3314 = vmul.f32 %v3276, %v2653
    %v3315 = vmul.f32 %v3279, %v2653
    %v3316 = vmul.f32 %v3282, %v2653
    %v3317 = vmul.f32 %v3285, %v2653
    %v3318 = vmul.f32 %v3288, %v2653
    %v3319 = vmul.f32 %v3291, %v2653
    %v3320 = vmul.f32 %v3294, %v2653
    %v3321 = vmul.f32 %v3297, %v2653
    %v3322 = vmul.f32 %v3300, %v2653
    %v3323 = vmul.f32 %v3303, %v2653
    %v3324 = vmul.f32 %v3306, %v2653
    %v3325 = vmul.f32 %v3309, %v2653
    %v3326 = vsub.f32 %v3244, %v3310
    %v3327 = vsub.f32 %v3245, %v3311
    %v3328 = vsub.f32 %v3246, %v3312
    %v3329 = vsub.f32 %v3247, %v3313
    %v3330 = vsub.f32 %v3248, %v3314
    %v3331 = vsub.f32 %v3249, %v3315
    %v3332 = vsub.f32 %v3250, %v3316
    %v3333 = vsub.f32 %v3251, %v3317
    %v3334 = vsub.f32 %v3252, %v3318
    %v3335 = vsub.f32 %v3253, %v3319
    %v3336 = vsub.f32 %v3254, %v3320
    %v3337 = vsub.f32 %v3255, %v3321
    %v3338 = vsub.f32 %v3256, %v3322
    %v3339 = vsub.f32 %v3257, %v3323
    %v3340 = vsub.f32 %v3258, %v3324
    %v3341 = vsub.f32 %v3259, %v3325
    %v3342 = vmul.f32 %v3326, %v3326
    %v3343 = vmul.f32 %v3327, %v3327
    %v3344 = vmul.f32 %v3328, %v3328
    %v3345 = vmul.f32 %v3329, %v3329
    %v3346 = vmul.f32 %v3330, %v3330
    %v3347 = vmul.f32 %v3331, %v3331
    %v3348 = vmul.f32 %v3332, %v3332
    %v3349 = vmul.f32 %v3333, %v3333
    %v3350 = vmul.f32 %v3334, %v3334
    %v3351 = vmul.f32 %v3335, %v3335
    %v3352 = vmul.f32 %v3336, %v3336
    %v3353 = vmul.f32 %v3337, %v3337
    %v3354 = vmul.f32 %v3338, %v3338
    %v3355 = vmul.f32 %v3339, %v3339
    %v3356 = vmul.f32 %v3340, %v3340
    %v3357 = vmul.f32 %v3341, %v3341
    %v3358 = vsel %vm174, %v3342, 0.0
    %3359 = vadd.xlane.f32.xlu0 %v3358
    %v3360 = vpop.xlane.xlu0 %3359
    %v3361 = vsel %vm174, %v3343, 0.0
    %3362 = vadd.xlane.f32.xlu0 %v3361
    %v3363 = vpop.xlane.xlu0 %3362
    %v3364 = vsel %vm174, %v3344, 0.0
    %3365 = vadd.xlane.f32.xlu0 %v3364
    %v3366 = vpop.xlane.xlu0 %3365
    %v3367 = vsel %vm174, %v3345, 0.0
    %3368 = vadd.xlane.f32.xlu0 %v3367
    %v3369 = vpop.xlane.xlu0 %3368
    %v3370 = vsel %vm174, %v3346, 0.0
    %3371 = vadd.xlane.f32.xlu0 %v3370
    %v3372 = vpop.xlane.xlu0 %3371
    %v3373 = vsel %vm174, %v3347, 0.0
    %3374 = vadd.xlane.f32.xlu0 %v3373
    %v3375 = vpop.xlane.xlu0 %3374
    %v3376 = vsel %vm174, %v3348, 0.0
    %3377 = vadd.xlane.f32.xlu0 %v3376
    %v3378 = vpop.xlane.xlu0 %3377
    %v3379 = vsel %vm174, %v3349, 0.0
    %3380 = vadd.xlane.f32.xlu0 %v3379
    %v3381 = vpop.xlane.xlu0 %3380
    %v3382 = vsel %vm174, %v3350, 0.0
    %3383 = vadd.xlane.f32.xlu0 %v3382
    %v3384 = vpop.xlane.xlu0 %3383
    %v3385 = vsel %vm174, %v3351, 0.0
    %3386 = vadd.xlane.f32.xlu0 %v3385
    %v3387 = vpop.xlane.xlu0 %3386
    %v3388 = vsel %vm174, %v3352, 0.0
    %3389 = vadd.xlane.f32.xlu0 %v3388
    %v3390 = vpop.xlane.xlu0 %3389
    %v3391 = vsel %vm174, %v3353, 0.0
    %3392 = vadd.xlane.f32.xlu0 %v3391
    %v3393 = vpop.xlane.xlu0 %3392
    %v3394 = vsel %vm174, %v3354, 0.0
    %3395 = vadd.xlane.f32.xlu0 %v3394
    %v3396 = vpop.xlane.xlu0 %3395
    %v3397 = vsel %vm174, %v3355, 0.0
    %3398 = vadd.xlane.f32.xlu0 %v3397
    %v3399 = vpop.xlane.xlu0 %3398
    %v3400 = vsel %vm174, %v3356, 0.0
    %3401 = vadd.xlane.f32.xlu0 %v3400
    %v3402 = vpop.xlane.xlu0 %3401
    %v3403 = vsel %vm174, %v3357, 0.0
    %3404 = vadd.xlane.f32.xlu0 %v3403
    %v3405 = vpop.xlane.xlu0 %3404
    %v3406 = vmul.f32 %v3360, %v2653
    %v3407 = vmul.f32 %v3363, %v2653
    %v3408 = vmul.f32 %v3366, %v2653
    %v3409 = vmul.f32 %v3369, %v2653
    %v3410 = vmul.f32 %v3372, %v2653
    %v3411 = vmul.f32 %v3375, %v2653
    %v3412 = vmul.f32 %v3378, %v2653
    %v3413 = vmul.f32 %v3381, %v2653
    %v3414 = vmul.f32 %v3384, %v2653
    %v3415 = vmul.f32 %v3387, %v2653
    %v3416 = vmul.f32 %v3390, %v2653
    %v3417 = vmul.f32 %v3393, %v2653
    %v3418 = vmul.f32 %v3396, %v2653
    %v3419 = vmul.f32 %v3399, %v2653
    %v3420 = vmul.f32 %v3402, %v2653
    %v3421 = vmul.f32 %v3405, %v2653
    %v3422 = vadd.f32 %v3406, 1e-05
    %v3423 = vadd.f32 %v3407, 1e-05
    %v3424 = vadd.f32 %v3408, 1e-05
    %v3425 = vadd.f32 %v3409, 1e-05
    %v3426 = vadd.f32 %v3410, 1e-05
    %v3427 = vadd.f32 %v3411, 1e-05
    %v3428 = vadd.f32 %v3412, 1e-05
    %v3429 = vadd.f32 %v3413, 1e-05
    %v3430 = vadd.f32 %v3414, 1e-05
    %v3431 = vadd.f32 %v3415, 1e-05
    %v3432 = vadd.f32 %v3416, 1e-05
    %v3433 = vadd.f32 %v3417, 1e-05
    %v3434 = vadd.f32 %v3418, 1e-05
    %v3435 = vadd.f32 %v3419, 1e-05
    %v3436 = vadd.f32 %v3420, 1e-05
    %v3437 = vadd.f32 %v3421, 1e-05
    %v3438 = vrsqrt.pop %v3422
    %v3439 = vmul.f32 %v3438, %v3422
    %v3440 = vmul.f32 %v3439, %v3438
    %v3441 = vmul.f32 0.5, %v3440
    %v3442 = vsub.f32 1.5, %v3441
    %v3443 = vmul.f32 %v3438, %v3442
    %vm3444 = vweird.f32 %v3422
    %vm3445 = vweird.f32 %v3438
    %vm3446 = vmor %vm3444, %vm3445
    %v3447 = vsel %vm3446, %v3438, %v3443
    %v3448 = vrsqrt.pop %v3423
    %v3449 = vmul.f32 %v3448, %v3423
    %v3450 = vmul.f32 %v3449, %v3448
    %v3451 = vmul.f32 0.5, %v3450
    %v3452 = vsub.f32 1.5, %v3451
    %v3453 = vmul.f32 %v3448, %v3452
    %vm3454 = vweird.f32 %v3423
    %vm3455 = vweird.f32 %v3448
    %vm3456 = vmor %vm3454, %vm3455
    %v3457 = vsel %vm3456, %v3448, %v3453
    %v3458 = vrsqrt.pop %v3424
    %v3459 = vmul.f32 %v3458, %v3424
    %v3460 = vmul.f32 %v3459, %v3458
    %v3461 = vmul.f32 0.5, %v3460
    %v3462 = vsub.f32 1.5, %v3461
    %v3463 = vmul.f32 %v3458, %v3462
    %vm3464 = vweird.f32 %v3424
    %vm3465 = vweird.f32 %v3458
    %vm3466 = vmor %vm3464, %vm3465
    %v3467 = vsel %vm3466, %v3458, %v3463
    %v3468 = vrsqrt.pop %v3425
    %v3469 = vmul.f32 %v3468, %v3425
    %v3470 = vmul.f32 %v3469, %v3468
    %v3471 = vmul.f32 0.5, %v3470
    %v3472 = vsub.f32 1.5, %v3471
    %v3473 = vmul.f32 %v3468, %v3472
    %vm3474 = vweird.f32 %v3425
    %vm3475 = vweird.f32 %v3468
    %vm3476 = vmor %vm3474, %vm3475
    %v3477 = vsel %vm3476, %v3468, %v3473
    %v3478 = vrsqrt.pop %v3426
    %v3479 = vmul.f32 %v3478, %v3426
    %v3480 = vmul.f32 %v3479, %v3478
    %v3481 = vmul.f32 0.5, %v3480
    %v3482 = vsub.f32 1.5, %v3481
    %v3483 = vmul.f32 %v3478, %v3482
    %vm3484 = vweird.f32 %v3426
    %vm3485 = vweird.f32 %v3478
    %vm3486 = vmor %vm3484, %vm3485
    %v3487 = vsel %vm3486, %v3478, %v3483
    %v3488 = vrsqrt.pop %v3427
    %v3489 = vmul.f32 %v3488, %v3427
    %v3490 = vmul.f32 %v3489, %v3488
    %v3491 = vmul.f32 0.5, %v3490
    %v3492 = vsub.f32 1.5, %v3491
    %v3493 = vmul.f32 %v3488, %v3492
    %vm3494 = vweird.f32 %v3427
    %vm3495 = vweird.f32 %v3488
    %vm3496 = vmor %vm3494, %vm3495
    %v3497 = vsel %vm3496, %v3488, %v3493
    %v3498 = vrsqrt.pop %v3428
    %v3499 = vmul.f32 %v3498, %v3428
    %v3500 = vmul.f32 %v3499, %v3498
    %v3501 = vmul.f32 0.5, %v3500
    %v3502 = vsub.f32 1.5, %v3501
    %v3503 = vmul.f32 %v3498, %v3502
    %vm3504 = vweird.f32 %v3428
    %vm3505 = vweird.f32 %v3498
    %vm3506 = vmor %vm3504, %vm3505
    %v3507 = vsel %vm3506, %v3498, %v3503
    %v3508 = vrsqrt.pop %v3429
    %v3509 = vmul.f32 %v3508, %v3429
    %v3510 = vmul.f32 %v3509, %v3508
    %v3511 = vmul.f32 0.5, %v3510
    %v3512 = vsub.f32 1.5, %v3511
    %v3513 = vmul.f32 %v3508, %v3512
    %vm3514 = vweird.f32 %v3429
    %vm3515 = vweird.f32 %v3508
    %vm3516 = vmor %vm3514, %vm3515
    %v3517 = vsel %vm3516, %v3508, %v3513
    %v3518 = vrsqrt.pop %v3430
    %v3519 = vmul.f32 %v3518, %v3430
    %v3520 = vmul.f32 %v3519, %v3518
    %v3521 = vmul.f32 0.5, %v3520
    %v3522 = vsub.f32 1.5, %v3521
    %v3523 = vmul.f32 %v3518, %v3522
    %vm3524 = vweird.f32 %v3430
    %vm3525 = vweird.f32 %v3518
    %vm3526 = vmor %vm3524, %vm3525
    %v3527 = vsel %vm3526, %v3518, %v3523
    %v3528 = vrsqrt.pop %v3431
    %v3529 = vmul.f32 %v3528, %v3431
    %v3530 = vmul.f32 %v3529, %v3528
    %v3531 = vmul.f32 0.5, %v3530
    %v3532 = vsub.f32 1.5, %v3531
    %v3533 = vmul.f32 %v3528, %v3532
    %vm3534 = vweird.f32 %v3431
    %vm3535 = vweird.f32 %v3528
    %vm3536 = vmor %vm3534, %vm3535
    %v3537 = vsel %vm3536, %v3528, %v3533
    %v3538 = vrsqrt.pop %v3432
    %v3539 = vmul.f32 %v3538, %v3432
    %v3540 = vmul.f32 %v3539, %v3538
    %v3541 = vmul.f32 0.5, %v3540
    %v3542 = vsub.f32 1.5, %v3541
    %v3543 = vmul.f32 %v3538, %v3542
    %vm3544 = vweird.f32 %v3432
    %vm3545 = vweird.f32 %v3538
    %vm3546 = vmor %vm3544, %vm3545
    %v3547 = vsel %vm3546, %v3538, %v3543
    %v3548 = vrsqrt.pop %v3433
    %v3549 = vmul.f32 %v3548, %v3433
    %v3550 = vmul.f32 %v3549, %v3548
    %v3551 = vmul.f32 0.5, %v3550
    %v3552 = vsub.f32 1.5, %v3551
    %v3553 = vmul.f32 %v3548, %v3552
    %vm3554 = vweird.f32 %v3433
    %vm3555 = vweird.f32 %v3548
    %vm3556 = vmor %vm3554, %vm3555
    %v3557 = vsel %vm3556, %v3548, %v3553
    %v3558 = vrsqrt.pop %v3434
    %v3559 = vmul.f32 %v3558, %v3434
    %v3560 = vmul.f32 %v3559, %v3558
    %v3561 = vmul.f32 0.5, %v3560
    %v3562 = vsub.f32 1.5, %v3561
    %v3563 = vmul.f32 %v3558, %v3562
    %vm3564 = vweird.f32 %v3434
    %vm3565 = vweird.f32 %v3558
    %vm3566 = vmor %vm3564, %vm3565
    %v3567 = vsel %vm3566, %v3558, %v3563
    %v3568 = vrsqrt.pop %v3435
    %v3569 = vmul.f32 %v3568, %v3435
    %v3570 = vmul.f32 %v3569, %v3568
    %v3571 = vmul.f32 0.5, %v3570
    %v3572 = vsub.f32 1.5, %v3571
    %v3573 = vmul.f32 %v3568, %v3572
    %vm3574 = vweird.f32 %v3435
    %vm3575 = vweird.f32 %v3568
    %vm3576 = vmor %vm3574, %vm3575
    %v3577 = vsel %vm3576, %v3568, %v3573
    %v3578 = vrsqrt.pop %v3436
    %v3579 = vmul.f32 %v3578, %v3436
    %v3580 = vmul.f32 %v3579, %v3578
    %v3581 = vmul.f32 0.5, %v3580
    %v3582 = vsub.f32 1.5, %v3581
    %v3583 = vmul.f32 %v3578, %v3582
    %vm3584 = vweird.f32 %v3436
    %vm3585 = vweird.f32 %v3578
    %vm3586 = vmor %vm3584, %vm3585
    %v3587 = vsel %vm3586, %v3578, %v3583
    %v3588 = vrsqrt.pop %v3437
    %v3589 = vmul.f32 %v3588, %v3437
    %v3590 = vmul.f32 %v3589, %v3588
    %v3591 = vmul.f32 0.5, %v3590
    %v3592 = vsub.f32 1.5, %v3591
    %v3593 = vmul.f32 %v3588, %v3592
    %vm3594 = vweird.f32 %v3437
    %vm3595 = vweird.f32 %v3588
    %vm3596 = vmor %vm3594, %vm3595
    %v3597 = vsel %vm3596, %v3588, %v3593
    %v3598 = vmul.f32 %v3326, %v3447
    %v3599 = vmul.f32 %v3327, %v3457
    %v3600 = vmul.f32 %v3328, %v3467
    %v3601 = vmul.f32 %v3329, %v3477
    %v3602 = vmul.f32 %v3330, %v3487
    %v3603 = vmul.f32 %v3331, %v3497
    %v3604 = vmul.f32 %v3332, %v3507
    %v3605 = vmul.f32 %v3333, %v3517
    %v3606 = vmul.f32 %v3334, %v3527
    %v3607 = vmul.f32 %v3335, %v3537
    %v3608 = vmul.f32 %v3336, %v3547
    %v3609 = vmul.f32 %v3337, %v3557
    %v3610 = vmul.f32 %v3338, %v3567
    %v3611 = vmul.f32 %v3339, %v3577
    %v3612 = vmul.f32 %v3340, %v3587
    %v3613 = vmul.f32 %v3341, %v3597
    %v3614 = vperm.slane %v3260, 0
    %v3615 = vmul.f32 %v3598, %v3614
    %v3616 = vmul.f32 %v3599, %v3614
    %v3617 = vmul.f32 %v3600, %v3614
    %v3618 = vmul.f32 %v3601, %v3614
    %v3619 = vmul.f32 %v3602, %v3614
    %v3620 = vmul.f32 %v3603, %v3614
    %v3621 = vmul.f32 %v3604, %v3614
    %v3622 = vmul.f32 %v3605, %v3614
    %v3623 = vmul.f32 %v3606, %v3614
    %v3624 = vmul.f32 %v3607, %v3614
    %v3625 = vmul.f32 %v3608, %v3614
    %v3626 = vmul.f32 %v3609, %v3614
    %v3627 = vmul.f32 %v3610, %v3614
    %v3628 = vmul.f32 %v3611, %v3614
    %v3629 = vmul.f32 %v3612, %v3614
    %v3630 = vmul.f32 %v3613, %v3614
    %v3631 = vperm.slane %v3261, 0
    %v3632 = vadd.f32 %v3615, %v3631
    %v3633 = vadd.f32 %v3616, %v3631
    %v3634 = vadd.f32 %v3617, %v3631
    %v3635 = vadd.f32 %v3618, %v3631
    %v3636 = vadd.f32 %v3619, %v3631
    %v3637 = vadd.f32 %v3620, %v3631
    %v3638 = vadd.f32 %v3621, %v3631
    %v3639 = vadd.f32 %v3622, %v3631
    %v3640 = vadd.f32 %v3623, %v3631
    %v3641 = vadd.f32 %v3624, %v3631
    %v3642 = vadd.f32 %v3625, %v3631
    %v3643 = vadd.f32 %v3626, %v3631
    %v3644 = vadd.f32 %v3627, %v3631
    %v3645 = vadd.f32 %v3628, %v3631
    %v3646 = vadd.f32 %v3629, %v3631
    %v3647 = vadd.f32 %v3630, %v3631
    %v3648 = vsel %vm174, %v3632, 0.0
    %v3649 = vrot.slane %v3648, 4
    %v3650 = vadd.f32 %v3648, %v3649
    %v3651 = vrot.slane %v3650, 2
    %v3652 = vadd.f32 %v3650, %v3651
    %v3653 = vrot.slane %v3652, 1
    %v3654 = vadd.f32 %v3652, %v3653
    %v3655 = vsel %vm174, %v3633, 0.0
    %v3656 = vrot.slane %v3655, 4
    %v3657 = vadd.f32 %v3655, %v3656
    %v3658 = vrot.slane %v3657, 2
    %v3659 = vadd.f32 %v3657, %v3658
    %v3660 = vrot.slane %v3659, 1
    %v3661 = vadd.f32 %v3659, %v3660
    %v3662 = vsel %vm174, %v3634, 0.0
    %v3663 = vrot.slane %v3662, 4
    %v3664 = vadd.f32 %v3662, %v3663
    %v3665 = vrot.slane %v3664, 2
    %v3666 = vadd.f32 %v3664, %v3665
    %v3667 = vrot.slane %v3666, 1
    %v3668 = vadd.f32 %v3666, %v3667
    %v3669 = vsel %vm174, %v3635, 0.0
    %v3670 = vrot.slane %v3669, 4
    %v3671 = vadd.f32 %v3669, %v3670
    %v3672 = vrot.slane %v3671, 2
    %v3673 = vadd.f32 %v3671, %v3672
    %v3674 = vrot.slane %v3673, 1
    %v3675 = vadd.f32 %v3673, %v3674
    %v3676 = vsel %vm174, %v3636, 0.0
    %v3677 = vrot.slane %v3676, 4
    %v3678 = vadd.f32 %v3676, %v3677
    %v3679 = vrot.slane %v3678, 2
    %v3680 = vadd.f32 %v3678, %v3679
    %v3681 = vrot.slane %v3680, 1
    %v3682 = vadd.f32 %v3680, %v3681
    %v3683 = vsel %vm174, %v3637, 0.0
    %v3684 = vrot.slane %v3683, 4
    %v3685 = vadd.f32 %v3683, %v3684
    %v3686 = vrot.slane %v3685, 2
    %v3687 = vadd.f32 %v3685, %v3686
    %v3688 = vrot.slane %v3687, 1
    %v3689 = vadd.f32 %v3687, %v3688
    %v3690 = vsel %vm174, %v3638, 0.0
    %v3691 = vrot.slane %v3690, 4
    %v3692 = vadd.f32 %v3690, %v3691
    %v3693 = vrot.slane %v3692, 2
    %v3694 = vadd.f32 %v3692, %v3693
    %v3695 = vrot.slane %v3694, 1
    %v3696 = vadd.f32 %v3694, %v3695
    %v3697 = vsel %vm174, %v3639, 0.0
    %v3698 = vrot.slane %v3697, 4
    %v3699 = vadd.f32 %v3697, %v3698
    %v3700 = vrot.slane %v3699, 2
    %v3701 = vadd.f32 %v3699, %v3700
    %v3702 = vrot.slane %v3701, 1
    %v3703 = vadd.f32 %v3701, %v3702
    %v3704 = vsel %vm174, %v3640, 0.0
    %v3705 = vrot.slane %v3704, 4
    %v3706 = vadd.f32 %v3704, %v3705
    %v3707 = vrot.slane %v3706, 2
    %v3708 = vadd.f32 %v3706, %v3707
    %v3709 = vrot.slane %v3708, 1
    %v3710 = vadd.f32 %v3708, %v3709
    %v3711 = vsel %vm174, %v3641, 0.0
    %v3712 = vrot.slane %v3711, 4
    %v3713 = vadd.f32 %v3711, %v3712
    %v3714 = vrot.slane %v3713, 2
    %v3715 = vadd.f32 %v3713, %v3714
    %v3716 = vrot.slane %v3715, 1
    %v3717 = vadd.f32 %v3715, %v3716
    %v3718 = vsel %vm174, %v3642, 0.0
    %v3719 = vrot.slane %v3718, 4
    %v3720 = vadd.f32 %v3718, %v3719
    %v3721 = vrot.slane %v3720, 2
    %v3722 = vadd.f32 %v3720, %v3721
    %v3723 = vrot.slane %v3722, 1
    %v3724 = vadd.f32 %v3722, %v3723
    %v3725 = vsel %vm174, %v3643, 0.0
    %v3726 = vrot.slane %v3725, 4
    %v3727 = vadd.f32 %v3725, %v3726
    %v3728 = vrot.slane %v3727, 2
    %v3729 = vadd.f32 %v3727, %v3728
    %v3730 = vrot.slane %v3729, 1
    %v3731 = vadd.f32 %v3729, %v3730
    %v3732 = vsel %vm174, %v3644, 0.0
    %v3733 = vrot.slane %v3732, 4
    %v3734 = vadd.f32 %v3732, %v3733
    %v3735 = vrot.slane %v3734, 2
    %v3736 = vadd.f32 %v3734, %v3735
    %v3737 = vrot.slane %v3736, 1
    %v3738 = vadd.f32 %v3736, %v3737
    %v3739 = vsel %vm174, %v3645, 0.0
    %v3740 = vrot.slane %v3739, 4
    %v3741 = vadd.f32 %v3739, %v3740
    %v3742 = vrot.slane %v3741, 2
    %v3743 = vadd.f32 %v3741, %v3742
    %v3744 = vrot.slane %v3743, 1
    %v3745 = vadd.f32 %v3743, %v3744
    %v3746 = vsel %vm174, %v3646, 0.0
    %v3747 = vrot.slane %v3746, 4
    %v3748 = vadd.f32 %v3746, %v3747
    %v3749 = vrot.slane %v3748, 2
    %v3750 = vadd.f32 %v3748, %v3749
    %v3751 = vrot.slane %v3750, 1
    %v3752 = vadd.f32 %v3750, %v3751
    %v3753 = vsel %vm174, %v3647, 0.0
    %v3754 = vrot.slane %v3753, 4
    %v3755 = vadd.f32 %v3753, %v3754
    %v3756 = vrot.slane %v3755, 2
    %v3757 = vadd.f32 %v3755, %v3756
    %v3758 = vrot.slane %v3757, 1
    %v3759 = vadd.f32 %v3757, %v3758
    %v3760 = vld [vmem:[%s3] sm:$0x1]
    %v3761 = vperm.slane %v3760, 0
    %vm3778 = vcmask 1041409
    %v3779 = vsel %vm3778, %v3661, %v3654
    %vm3780 = vcmask 1042434
    %v3781 = vsel %vm3780, %v3668, %v3779
    %vm3782 = vcmask 1043459
    %v3783 = vsel %vm3782, %v3675, %v3781
    %vm3784 = vcmask 1044484
    %v3785 = vsel %vm3784, %v3682, %v3783
    %vm3786 = vcmask 1045509
    %v3787 = vsel %vm3786, %v3689, %v3785
    %vm3788 = vcmask 1046534
    %v3789 = vsel %vm3788, %v3696, %v3787
    %vm3790 = vcmask 1047559
    %v3791 = vsel %vm3790, %v3703, %v3789
    %v3792 = vsel %vm3778, %v3717, %v3710
    %v3793 = vsel %vm3780, %v3724, %v3792
    %v3794 = vsel %vm3782, %v3731, %v3793
    %v3795 = vsel %vm3784, %v3738, %v3794
    %v3796 = vsel %vm3786, %v3745, %v3795
    %v3797 = vsel %vm3788, %v3752, %v3796
    %v3798 = vsel %vm3790, %v3759, %v3797
    %3799 = vrot.lane.b32.xlu0 %v3791, 24
    %v3800 = vpop.permute.xlu0 %3799
    %3801 = vrot.lane.b32.xlu0 %v3798, 24
    %v3802 = vpop.permute.xlu0 %3801
    %vm3805 = vcmask 195584
    %v3806 = vsel %vm3805, %v3761, %v3800
    %v3807 = vsel %vm3805, %v3761, %v3802
    %v3808 = vld [vmem:[%s0] sm:$0xff]
    %v3809 = vld [vmem:[%s0 + $0x8] sm:$0xff]
    %v3810 = vld [vmem:[#allocation2 + $0x40] sm:$0xff]
    %v3811 = vld [vmem:[#allocation2 + $0x48] sm:$0xff]
    %v3812 = vld [vmem:[#allocation2 + $0x50] sm:$0xff]
    %v3813 = vld [vmem:[#allocation2 + $0x58] sm:$0xff]
    %v3815 = vsel %vm3130, %v3806, 0
    %v3818 = vsel %vm3130, %v3807, 0
    %3820 = vmatpush.msra.mxu0 0.0
    %3821 = vmatpush.msra.mxu0 0.0
    %3822 = vmatpush.msra.mxu0 0.0
    %3823 = vmatpush.msra.mxu0 0.0
    %3824 = vmatpush.msra.mxu0 0.0
    %3825 = vmatpush.msra.mxu0 0.0
    %3826 = vmatpush.msra.mxu0 0.0
    %3827 = vmatpush.msra.mxu0 0.0
    %3828 = vmatpush.msra.mxu0 0.0
    %3829 = vmatpush.msra.mxu0 0.0
    %3830 = vmatpush.msra.mxu0 0.0
    %3831 = vmatpush.msra.mxu0 0.0
    %3832 = vmatpush.msra.mxu0 %v3813
    %3833 = vmatpush.msra.mxu0 %v3812
    %3834 = vmatpush.msra.mxu0 %v3811
    %3835 = vmatpush.msra.mxu0 %v3810
    %3836 = vmatmul.f32.gmra.mxu0 %v3815
    %v3837 = vpop.f32.mrf.mxu0
    %v3838 = vadd.f32 0.0, %v3837
    %3839 = vmatmul.f32.gmra.mxu0 %v3818
    %v3840 = vpop.f32.mrf.mxu0
    %v3841 = vadd.f32 0.0, %v3840
    %3842 = vdwg.mxu0
    %3845 = vrot.lane.b32.xlu0 %v3838, 96
    %v3846 = vpop.permute.xlu0 %3845
    %3847 = vrot.lane.b32.xlu0 %v3841, 96
    %v3848 = vpop.permute.xlu0 %3847
    %v3849 = vsel %vm174, %v3838, 0
    %v3851 = vsel %vm174, %v3841, 0
    %v3853 = vsel %vm174, %v3846, 0
    %v3855 = vsel %vm174, %v3848, 0
    %3857 = vmatpush.xpose.msra.mxu0 0.0
    %3858 = vmatpush.xpose.msra.mxu0 0.0
    %3859 = vmatpush.xpose.msra.mxu0 0.0
    %3860 = vmatpush.xpose.msra.mxu0 0.0
    %3861 = vmatpush.xpose.msra.mxu0 0.0
    %3862 = vmatpush.xpose.msra.mxu0 0.0
    %3863 = vmatpush.xpose.msra.mxu0 0.0
    %3864 = vmatpush.xpose.msra.mxu0 0.0
    %3865 = vmatpush.xpose.msra.mxu0 0.0
    %3866 = vmatpush.xpose.msra.mxu0 0.0
    %3867 = vmatpush.xpose.msra.mxu0 0.0
    %3868 = vmatpush.xpose.msra.mxu0 0.0
    %3869 = vmatpush.xpose.msra.mxu0 0.0
    %3870 = vmatpush.xpose.msra.mxu0 0.0
    %3871 = vmatpush.xpose.msra.mxu0 %v3855
    %3872 = vmatpush.xpose.msra.mxu0 %v3853
    %3873 = vmatmul.f32.gmra.mxu0 %v3849
    %v3874 = vpop.f32.mrf.mxu0
    %v3875 = vadd.f32 0.0, %v3874
    %3876 = vmatmul.f32.gmra.mxu0 %v3851
    %v3877 = vpop.f32.mrf.mxu0
    %v3878 = vadd.f32 0.0, %v3877
    %3879 = vdwg.mxu0
    %v3880 = vmul.f32 %v3875, 0.35355338
    %v3881 = vmul.f32 %v3878, 0.35355338
    %v3882 = vmax.f32 %v3880, -5.0
    %v3883 = vmax.f32 %v3881, -5.0
    %v3884 = vmin.f32 %v3882, 5.0
    %v3885 = vmin.f32 %v3883, 5.0
    %v3886 = vmul.f32 %v3884, 1.442695
    %v3887 = vpow.pop %v3886
    %v3888 = vmul.f32 %v3885, 1.442695
    %v3889 = vpow.pop %v3888
    %v3890 = vmul.f32 %v3887, %v3808
    %v3891 = vmul.f32 %v3889, %v3809
    %vm3892 = vcmask 130048
    %v3893 = vsel %vm3892, %v3890, 0.0
    %3894 = vadd.xlane.f32.xlu0 %v3893
    %v3895 = vpop.xlane.xlu0 %3894
    %v3896 = vsel %vm3892, %v3891, 0.0
    %3897 = vadd.xlane.f32.xlu0 %v3896
    %v3898 = vpop.xlane.xlu0 %3897
    %3899 = vrot.lane.b32.xlu0 %v3838, 64
    %v3900 = vpop.permute.xlu0 %3899
    %3901 = vrot.lane.b32.xlu0 %v3841, 64
    %v3902 = vpop.permute.xlu0 %3901
    %v3906 = vsel %vm3892, %v3890, 0
    %v3909 = vsel %vm3892, %v3891, 0
    %3911 = vmatpush.msra.mxu0 0.0
    %3912 = vmatpush.msra.mxu0 0.0
    %3913 = vmatpush.msra.mxu0 0.0
    %3914 = vmatpush.msra.mxu0 0.0
    %3915 = vmatpush.msra.mxu0 0.0
    %3916 = vmatpush.msra.mxu0 0.0
    %3917 = vmatpush.msra.mxu0 0.0
    %3918 = vmatpush.msra.mxu0 0.0
    %3919 = vmatpush.msra.mxu0 0.0
    %3920 = vmatpush.msra.mxu0 0.0
    %3921 = vmatpush.msra.mxu0 0.0
    %3922 = vmatpush.msra.mxu0 0.0
    %3923 = vmatpush.msra.mxu0 0.0
    %3924 = vmatpush.msra.mxu0 0.0
    %3925 = vmatpush.msra.mxu0 %v3902
    %3926 = vmatpush.msra.mxu0 %v3900
    %3927 = vmatmul.f32.gmra.mxu0 %v3906
    %v3928 = vpop.f32.mrf.mxu0
    %v3929 = vadd.f32 0.0, %v3928
    %3930 = vmatmul.f32.gmra.mxu0 %v3909
    %v3931 = vpop.f32.mrf.mxu0
    %v3932 = vadd.f32 0.0, %v3931
    %3933 = vdwg.mxu0
    %v3934 = vadd.f32 %v3895, 1e-06
    %v3935 = vadd.f32 %v3898, 1e-06
    %v3936 = vrcp.pop %v3934
    %v3937 = vrcp.pop %v3935
    %v3938 = vmul.f32 %v3929, %v3936
    %v3939 = vmul.f32 %v3932, %v3937
    %3940 = vrot.lane.b32.xlu0 %v3838, 120
    %v3941 = vpop.permute.xlu0 %3940
    %3942 = vrot.lane.b32.xlu0 %v3841, 120
    %v3943 = vpop.permute.xlu0 %3942
    %3944 = vrot.lane.b32.xlu0 %v3838, 88
    %v3945 = vpop.permute.xlu0 %3944
    %3946 = vrot.lane.b32.xlu0 %v3841, 88
    %v3947 = vpop.permute.xlu0 %3946
    %v3948 = vsel %vm174, %v3941, 0
    %v3950 = vsel %vm174, %v3943, 0
    %v3952 = vsel %vm174, %v3945, 0
    %v3954 = vsel %vm174, %v3947, 0
    %3956 = vmatpush.xpose.msra.mxu0 0.0
    %3957 = vmatpush.xpose.msra.mxu0 0.0
    %3958 = vmatpush.xpose.msra.mxu0 0.0
    %3959 = vmatpush.xpose.msra.mxu0 0.0
    %3960 = vmatpush.xpose.msra.mxu0 0.0
    %3961 = vmatpush.xpose.msra.mxu0 0.0
    %3962 = vmatpush.xpose.msra.mxu0 0.0
    %3963 = vmatpush.xpose.msra.mxu0 0.0
    %3964 = vmatpush.xpose.msra.mxu0 0.0
    %3965 = vmatpush.xpose.msra.mxu0 0.0
    %3966 = vmatpush.xpose.msra.mxu0 0.0
    %3967 = vmatpush.xpose.msra.mxu0 0.0
    %3968 = vmatpush.xpose.msra.mxu0 0.0
    %3969 = vmatpush.xpose.msra.mxu0 0.0
    %3970 = vmatpush.xpose.msra.mxu0 %v3954
    %3971 = vmatpush.xpose.msra.mxu0 %v3952
    %3972 = vmatmul.f32.gmra.mxu0 %v3948
    %v3973 = vpop.f32.mrf.mxu0
    %v3974 = vadd.f32 0.0, %v3973
    %3975 = vmatmul.f32.gmra.mxu0 %v3950
    %v3976 = vpop.f32.mrf.mxu0
    %v3977 = vadd.f32 0.0, %v3976
    %3978 = vdwg.mxu0
    %v3979 = vmul.f32 %v3974, 0.35355338
    %v3980 = vmul.f32 %v3977, 0.35355338
    %v3981 = vmax.f32 %v3979, -5.0
    %v3982 = vmax.f32 %v3980, -5.0
    %v3983 = vmin.f32 %v3981, 5.0
    %v3984 = vmin.f32 %v3982, 5.0
    %v3985 = vmul.f32 %v3983, 1.442695
    %v3986 = vpow.pop %v3985
    %v3987 = vmul.f32 %v3984, 1.442695
    %v3988 = vpow.pop %v3987
    %v3989 = vmul.f32 %v3986, %v3808
    %v3990 = vmul.f32 %v3988, %v3809
    %v3991 = vsel %vm3892, %v3989, 0.0
    %3992 = vadd.xlane.f32.xlu0 %v3991
    %v3993 = vpop.xlane.xlu0 %3992
    %v3994 = vsel %vm3892, %v3990, 0.0
    %3995 = vadd.xlane.f32.xlu0 %v3994
    %v3996 = vpop.xlane.xlu0 %3995
    %3997 = vrot.lane.b32.xlu0 %v3838, 56
    %v3998 = vpop.permute.xlu0 %3997
    %3999 = vrot.lane.b32.xlu0 %v3841, 56
    %v4000 = vpop.permute.xlu0 %3999
    %v4004 = vsel %vm3892, %v3989, 0
    %v4007 = vsel %vm3892, %v3990, 0
    %4009 = vmatpush.msra.mxu0 0.0
    %4010 = vmatpush.msra.mxu0 0.0
    %4011 = vmatpush.msra.mxu0 0.0
    %4012 = vmatpush.msra.mxu0 0.0
    %4013 = vmatpush.msra.mxu0 0.0
    %4014 = vmatpush.msra.mxu0 0.0
    %4015 = vmatpush.msra.mxu0 0.0
    %4016 = vmatpush.msra.mxu0 0.0
    %4017 = vmatpush.msra.mxu0 0.0
    %4018 = vmatpush.msra.mxu0 0.0
    %4019 = vmatpush.msra.mxu0 0.0
    %4020 = vmatpush.msra.mxu0 0.0
    %4021 = vmatpush.msra.mxu0 0.0
    %4022 = vmatpush.msra.mxu0 0.0
    %4023 = vmatpush.msra.mxu0 %v4000
    %4024 = vmatpush.msra.mxu0 %v3998
    %4025 = vmatmul.f32.gmra.mxu0 %v4004
    %v4026 = vpop.f32.mrf.mxu0
    %v4027 = vadd.f32 0.0, %v4026
    %4028 = vmatmul.f32.gmra.mxu0 %v4007
    %v4029 = vpop.f32.mrf.mxu0
    %v4030 = vadd.f32 0.0, %v4029
    %4031 = vdwg.mxu0
    %v4032 = vadd.f32 %v3993, 1e-06
    %v4033 = vadd.f32 %v3996, 1e-06
    %v4034 = vrcp.pop %v4032
    %v4035 = vrcp.pop %v4033
    %v4036 = vmul.f32 %v4027, %v4034
    %v4037 = vmul.f32 %v4030, %v4035
    %4038 = vrot.lane.b32.xlu0 %v3838, 112
    %v4039 = vpop.permute.xlu0 %4038
    %4040 = vrot.lane.b32.xlu0 %v3841, 112
    %v4041 = vpop.permute.xlu0 %4040
    %4042 = vrot.lane.b32.xlu0 %v3838, 80
    %v4043 = vpop.permute.xlu0 %4042
    %4044 = vrot.lane.b32.xlu0 %v3841, 80
    %v4045 = vpop.permute.xlu0 %4044
    %v4046 = vsel %vm174, %v4039, 0
    %v4048 = vsel %vm174, %v4041, 0
    %v4050 = vsel %vm174, %v4043, 0
    %v4052 = vsel %vm174, %v4045, 0
    %4054 = vmatpush.xpose.msra.mxu0 0.0
    %4055 = vmatpush.xpose.msra.mxu0 0.0
    %4056 = vmatpush.xpose.msra.mxu0 0.0
    %4057 = vmatpush.xpose.msra.mxu0 0.0
    %4058 = vmatpush.xpose.msra.mxu0 0.0
    %4059 = vmatpush.xpose.msra.mxu0 0.0
    %4060 = vmatpush.xpose.msra.mxu0 0.0
    %4061 = vmatpush.xpose.msra.mxu0 0.0
    %4062 = vmatpush.xpose.msra.mxu0 0.0
    %4063 = vmatpush.xpose.msra.mxu0 0.0
    %4064 = vmatpush.xpose.msra.mxu0 0.0
    %4065 = vmatpush.xpose.msra.mxu0 0.0
    %4066 = vmatpush.xpose.msra.mxu0 0.0
    %4067 = vmatpush.xpose.msra.mxu0 0.0
    %4068 = vmatpush.xpose.msra.mxu0 %v4052
    %4069 = vmatpush.xpose.msra.mxu0 %v4050
    %4070 = vmatmul.f32.gmra.mxu0 %v4046
    %v4071 = vpop.f32.mrf.mxu0
    %v4072 = vadd.f32 0.0, %v4071
    %4073 = vmatmul.f32.gmra.mxu0 %v4048
    %v4074 = vpop.f32.mrf.mxu0
    %v4075 = vadd.f32 0.0, %v4074
    %4076 = vdwg.mxu0
    %v4077 = vmul.f32 %v4072, 0.35355338
    %v4078 = vmul.f32 %v4075, 0.35355338
    %v4079 = vmax.f32 %v4077, -5.0
    %v4080 = vmax.f32 %v4078, -5.0
    %v4081 = vmin.f32 %v4079, 5.0
    %v4082 = vmin.f32 %v4080, 5.0
    %v4083 = vmul.f32 %v4081, 1.442695
    %v4084 = vpow.pop %v4083
    %v4085 = vmul.f32 %v4082, 1.442695
    %v4086 = vpow.pop %v4085
    %v4087 = vmul.f32 %v4084, %v3808
    %v4088 = vmul.f32 %v4086, %v3809
    %v4089 = vsel %vm3892, %v4087, 0.0
    %4090 = vadd.xlane.f32.xlu0 %v4089
    %v4091 = vpop.xlane.xlu0 %4090
    %v4092 = vsel %vm3892, %v4088, 0.0
    %4093 = vadd.xlane.f32.xlu0 %v4092
    %v4094 = vpop.xlane.xlu0 %4093
    %4095 = vrot.lane.b32.xlu0 %v3838, 48
    %v4096 = vpop.permute.xlu0 %4095
    %4097 = vrot.lane.b32.xlu0 %v3841, 48
    %v4098 = vpop.permute.xlu0 %4097
    %v4102 = vsel %vm3892, %v4087, 0
    %v4105 = vsel %vm3892, %v4088, 0
    %4107 = vmatpush.msra.mxu0 0.0
    %4108 = vmatpush.msra.mxu0 0.0
    %4109 = vmatpush.msra.mxu0 0.0
    %4110 = vmatpush.msra.mxu0 0.0
    %4111 = vmatpush.msra.mxu0 0.0
    %4112 = vmatpush.msra.mxu0 0.0
    %4113 = vmatpush.msra.mxu0 0.0
    %4114 = vmatpush.msra.mxu0 0.0
    %4115 = vmatpush.msra.mxu0 0.0
    %4116 = vmatpush.msra.mxu0 0.0
    %4117 = vmatpush.msra.mxu0 0.0
    %4118 = vmatpush.msra.mxu0 0.0
    %4119 = vmatpush.msra.mxu0 0.0
    %4120 = vmatpush.msra.mxu0 0.0
    %4121 = vmatpush.msra.mxu0 %v4098
    %4122 = vmatpush.msra.mxu0 %v4096
    %4123 = vmatmul.f32.gmra.mxu0 %v4102
    %v4124 = vpop.f32.mrf.mxu0
    %v4125 = vadd.f32 0.0, %v4124
    %4126 = vmatmul.f32.gmra.mxu0 %v4105
    %v4127 = vpop.f32.mrf.mxu0
    %v4128 = vadd.f32 0.0, %v4127
    %4129 = vdwg.mxu0
    %v4130 = vadd.f32 %v4091, 1e-06
    %v4131 = vadd.f32 %v4094, 1e-06
    %v4132 = vrcp.pop %v4130
    %v4133 = vrcp.pop %v4131
    %v4134 = vmul.f32 %v4125, %v4132
    %v4135 = vmul.f32 %v4128, %v4133
    %4136 = vrot.lane.b32.xlu0 %v3838, 104
    %v4137 = vpop.permute.xlu0 %4136
    %4138 = vrot.lane.b32.xlu0 %v3841, 104
    %v4139 = vpop.permute.xlu0 %4138
    %4140 = vrot.lane.b32.xlu0 %v3838, 72
    %v4141 = vpop.permute.xlu0 %4140
    %4142 = vrot.lane.b32.xlu0 %v3841, 72
    %v4143 = vpop.permute.xlu0 %4142
    %v4144 = vsel %vm174, %v4137, 0
    %v4146 = vsel %vm174, %v4139, 0
    %v4148 = vsel %vm174, %v4141, 0
    %v4150 = vsel %vm174, %v4143, 0
    %4152 = vmatpush.xpose.msra.mxu0 0.0
    %4153 = vmatpush.xpose.msra.mxu0 0.0
    %4154 = vmatpush.xpose.msra.mxu0 0.0
    %4155 = vmatpush.xpose.msra.mxu0 0.0
    %4156 = vmatpush.xpose.msra.mxu0 0.0
    %4157 = vmatpush.xpose.msra.mxu0 0.0
    %4158 = vmatpush.xpose.msra.mxu0 0.0
    %4159 = vmatpush.xpose.msra.mxu0 0.0
    %4160 = vmatpush.xpose.msra.mxu0 0.0
    %4161 = vmatpush.xpose.msra.mxu0 0.0
    %4162 = vmatpush.xpose.msra.mxu0 0.0
    %4163 = vmatpush.xpose.msra.mxu0 0.0
    %4164 = vmatpush.xpose.msra.mxu0 0.0
    %4165 = vmatpush.xpose.msra.mxu0 0.0
    %4166 = vmatpush.xpose.msra.mxu0 %v4150
    %4167 = vmatpush.xpose.msra.mxu0 %v4148
    %4168 = vmatmul.f32.gmra.mxu0 %v4144
    %v4169 = vpop.f32.mrf.mxu0
    %v4170 = vadd.f32 0.0, %v4169
    %4171 = vmatmul.f32.gmra.mxu0 %v4146
    %v4172 = vpop.f32.mrf.mxu0
    %v4173 = vadd.f32 0.0, %v4172
    %4174 = vdwg.mxu0
    %v4175 = vmul.f32 %v4170, 0.35355338
    %v4176 = vmul.f32 %v4173, 0.35355338
    %v4177 = vmax.f32 %v4175, -5.0
    %v4178 = vmax.f32 %v4176, -5.0
    %v4179 = vmin.f32 %v4177, 5.0
    %v4180 = vmin.f32 %v4178, 5.0
    %v4181 = vmul.f32 %v4179, 1.442695
    %v4182 = vpow.pop %v4181
    %v4183 = vmul.f32 %v4180, 1.442695
    %v4184 = vpow.pop %v4183
    %v4185 = vmul.f32 %v4182, %v3808
    %v4186 = vmul.f32 %v4184, %v3809
    %v4187 = vsel %vm3892, %v4185, 0.0
    %4188 = vadd.xlane.f32.xlu0 %v4187
    %v4189 = vpop.xlane.xlu0 %4188
    %v4190 = vsel %vm3892, %v4186, 0.0
    %4191 = vadd.xlane.f32.xlu0 %v4190
    %v4192 = vpop.xlane.xlu0 %4191
    %4193 = vrot.lane.b32.xlu0 %v3838, 40
    %v4194 = vpop.permute.xlu0 %4193
    %4195 = vrot.lane.b32.xlu0 %v3841, 40
    %v4196 = vpop.permute.xlu0 %4195
    %v4200 = vsel %vm3892, %v4185, 0
    %v4203 = vsel %vm3892, %v4186, 0
    %4205 = vmatpush.msra.mxu0 0.0
    %4206 = vmatpush.msra.mxu0 0.0
    %4207 = vmatpush.msra.mxu0 0.0
    %4208 = vmatpush.msra.mxu0 0.0
    %4209 = vmatpush.msra.mxu0 0.0
    %4210 = vmatpush.msra.mxu0 0.0
    %4211 = vmatpush.msra.mxu0 0.0
    %4212 = vmatpush.msra.mxu0 0.0
    %4213 = vmatpush.msra.mxu0 0.0
    %4214 = vmatpush.msra.mxu0 0.0
    %4215 = vmatpush.msra.mxu0 0.0
    %4216 = vmatpush.msra.mxu0 0.0
    %4217 = vmatpush.msra.mxu0 0.0
    %4218 = vmatpush.msra.mxu0 0.0
    %4219 = vmatpush.msra.mxu0 %v4196
    %4220 = vmatpush.msra.mxu0 %v4194
    %4221 = vmatmul.f32.gmra.mxu0 %v4200
    %v4222 = vpop.f32.mrf.mxu0
    %v4223 = vadd.f32 0.0, %v4222
    %4224 = vmatmul.f32.gmra.mxu0 %v4203
    %v4225 = vpop.f32.mrf.mxu0
    %v4226 = vadd.f32 0.0, %v4225
    %4227 = vdwg.mxu0
    %v4228 = vadd.f32 %v4189, 1e-06
    %v4229 = vadd.f32 %v4192, 1e-06
    %v4230 = vrcp.pop %v4228
    %v4231 = vrcp.pop %v4229
    %v4232 = vmul.f32 %v4223, %v4230
    %v4233 = vmul.f32 %v4226, %v4231
    %4236 = vrot.lane.b32.xlu0 %v4036, 8
    %v4237 = vpop.permute.xlu0 %4236
    %4238 = vrot.lane.b32.xlu0 %v4037, 8
    %v4239 = vpop.permute.xlu0 %4238
    %4244 = vrot.lane.b32.xlu0 %v4134, 16
    %v4245 = vpop.permute.xlu0 %4244
    %4246 = vrot.lane.b32.xlu0 %v4135, 16
    %v4247 = vpop.permute.xlu0 %4246
    %4252 = vrot.lane.b32.xlu0 %v4232, 24
    %v4253 = vpop.permute.xlu0 %4252
    %4254 = vrot.lane.b32.xlu0 %v4233, 24
    %v4255 = vpop.permute.xlu0 %4254
    %v4258 = vsel %vm174, %v3938, %v4237
    %v4259 = vsel %vm174, %v3939, %v4239
    %v4260 = vsel %vm3892, %v4258, %v4245
    %v4261 = vsel %vm3892, %v4259, %v4247
    %v4262 = vsel %vm3805, %v4260, %v4253
    %v4263 = vsel %vm3805, %v4261, %v4255
    %v4264 = vld [vmem:[#allocation2 + $0x60] sm:$0xff]
    %v4265 = vld [vmem:[#allocation2 + $0x68] sm:$0xff]
    %v4266 = vld [vmem:[#allocation2 + $0x70] sm:$0xff]
    %v4267 = vld [vmem:[#allocation2 + $0x78] sm:$0xff]
    %v4268 = vld [vmem:[%s3 + $0xa] sm:$0x1]
    %v4269 = vperm.slane %v4268, 0
    %v4271 = vsel %vm3130, %v4262, 0
    %v4274 = vsel %vm3130, %v4263, 0
    %4276 = vmatpush.msra.mxu0 0.0
    %4277 = vmatpush.msra.mxu0 0.0
    %4278 = vmatpush.msra.mxu0 0.0
    %4279 = vmatpush.msra.mxu0 0.0
    %4280 = vmatpush.msra.mxu0 0.0
    %4281 = vmatpush.msra.mxu0 0.0
    %4282 = vmatpush.msra.mxu0 0.0
    %4283 = vmatpush.msra.mxu0 0.0
    %4284 = vmatpush.msra.mxu0 0.0
    %4285 = vmatpush.msra.mxu0 0.0
    %4286 = vmatpush.msra.mxu0 0.0
    %4287 = vmatpush.msra.mxu0 0.0
    %4288 = vmatpush.msra.mxu0 %v4267
    %4289 = vmatpush.msra.mxu0 %v4266
    %4290 = vmatpush.msra.mxu0 %v4265
    %4291 = vmatpush.msra.mxu0 %v4264
    %4292 = vmatmul.f32.gmra.mxu0 %v4271
    %v4293 = vpop.f32.mrf.mxu0
    %v4294 = vadd.f32 %v4269, %v4293
    %4295 = vmatmul.f32.gmra.mxu0 %v4274
    %v4296 = vpop.f32.mrf.mxu0
    %v4297 = vadd.f32 %v4269, %v4296
    %4298 = vdwg.mxu0
    %v4299 = vadd.f32 %v3806, %v4294
    %v4300 = vadd.f32 %v3807, %v4297
    %v4301 = vld [vmem:[%s3 + $0xb] sm:$0x1]
    %v4302 = vld [vmem:[%s3 + $0xc] sm:$0x1]
    %v4303 = vsel %vm3130, %v4299, 0.0
    %4304 = vadd.xlane.f32.xlu0 %v4303
    %v4305 = vpop.xlane.xlu0 %4304
    %v4306 = vsel %vm3130, %v4300, 0.0
    %4307 = vadd.xlane.f32.xlu0 %v4306
    %v4308 = vpop.xlane.xlu0 %4307
    %v4309 = vrcp.pop 32.0
    %v4310 = vmul.f32 32.0, %v4309
    %v4311 = vsub.f32 1.0, %v4310
    %v4312 = vmul.f32 %v4309, %v4311
    %v4313 = vadd.f32 %v4309, %v4312
    %vm4314 = vweird.f32 %v4309
    %v4315 = vsel %vm4314, %v4309, %v4313
    %v4316 = vmul.f32 %v4305, %v4315
    %v4317 = vmul.f32 %v4308, %v4315
    %v4318 = vsub.f32 %v4299, %v4316
    %v4319 = vsub.f32 %v4300, %v4317
    %v4320 = vmul.f32 %v4318, %v4318
    %v4321 = vmul.f32 %v4319, %v4319
    %v4322 = vsel %vm3130, %v4320, 0.0
    %4323 = vadd.xlane.f32.xlu0 %v4322
    %v4324 = vpop.xlane.xlu0 %4323
    %v4325 = vsel %vm3130, %v4321, 0.0
    %4326 = vadd.xlane.f32.xlu0 %v4325
    %v4327 = vpop.xlane.xlu0 %4326
    %v4328 = vmul.f32 %v4324, %v4315
    %v4329 = vmul.f32 %v4327, %v4315
    %v4330 = vadd.f32 %v4328, 1e-05
    %v4331 = vadd.f32 %v4329, 1e-05
    %v4332 = vrsqrt.pop %v4330
    %v4333 = vmul.f32 %v4332, %v4330
    %v4334 = vmul.f32 %v4333, %v4332
    %v4335 = vmul.f32 0.5, %v4334
    %v4336 = vsub.f32 1.5, %v4335
    %v4337 = vmul.f32 %v4332, %v4336
    %vm4338 = vweird.f32 %v4330
    %vm4339 = vweird.f32 %v4332
    %vm4340 = vmor %vm4338, %vm4339
    %v4341 = vsel %vm4340, %v4332, %v4337
    %v4342 = vrsqrt.pop %v4331
    %v4343 = vmul.f32 %v4342, %v4331
    %v4344 = vmul.f32 %v4343, %v4342
    %v4345 = vmul.f32 0.5, %v4344
    %v4346 = vsub.f32 1.5, %v4345
    %v4347 = vmul.f32 %v4342, %v4346
    %vm4348 = vweird.f32 %v4331
    %vm4349 = vweird.f32 %v4342
    %vm4350 = vmor %vm4348, %vm4349
    %v4351 = vsel %vm4350, %v4342, %v4347
    %v4352 = vmul.f32 %v4318, %v4341
    %v4353 = vmul.f32 %v4319, %v4351
    %v4354 = vperm.slane %v4301, 0
    %v4355 = vmul.f32 %v4352, %v4354
    %v4356 = vmul.f32 %v4353, %v4354
    %v4357 = vperm.slane %v4302, 0
    %v4358 = vadd.f32 %v4355, %v4357
    %v4359 = vadd.f32 %v4356, %v4357
    %v4360 = vld [vmem:[#allocation2 + $0x80] sm:$0xff]
    %v4361 = vld [vmem:[#allocation2 + $0x88] sm:$0xff]
    %v4362 = vld [vmem:[#allocation2 + $0x90] sm:$0xff]
    %v4363 = vld [vmem:[#allocation2 + $0x98] sm:$0xff]
    %v4364 = vld [vmem:[%s3 + $0xd] sm:$0x1]
    %v4365 = vperm.slane %v4364, 0
    %v4367 = vsel %vm3130, %v4358, 0
    %v4370 = vsel %vm3130, %v4359, 0
    %4372 = vmatpush.msra.mxu0 0.0
    %4373 = vmatpush.msra.mxu0 0.0
    %4374 = vmatpush.msra.mxu0 0.0
    %4375 = vmatpush.msra.mxu0 0.0
    %4376 = vmatpush.msra.mxu0 0.0
    %4377 = vmatpush.msra.mxu0 0.0
    %4378 = vmatpush.msra.mxu0 0.0
    %4379 = vmatpush.msra.mxu0 0.0
    %4380 = vmatpush.msra.mxu0 0.0
    %4381 = vmatpush.msra.mxu0 0.0
    %4382 = vmatpush.msra.mxu0 0.0
    %4383 = vmatpush.msra.mxu0 0.0
    %4384 = vmatpush.msra.mxu0 %v4363
    %4385 = vmatpush.msra.mxu0 %v4362
    %4386 = vmatpush.msra.mxu0 %v4361
    %4387 = vmatpush.msra.mxu0 %v4360
    %4388 = vmatmul.f32.gmra.mxu0 %v4367
    %v4389 = vpop.f32.mrf.mxu0
    %v4390 = vadd.f32 %v4365, %v4389
    %4391 = vmatmul.f32.gmra.mxu0 %v4370
    %v4392 = vpop.f32.mrf.mxu0
    %v4393 = vadd.f32 %v4365, %v4392
    %4394 = vdwg.mxu0
    %v4395 = vmax.f32 %v4390, 0.0
    %v4396 = vmax.f32 %v4393, 0.0
    %v4397 = vld [vmem:[#allocation2 + $0xa0] sm:$0xff]
    %v4398 = vld [vmem:[#allocation2 + $0xa8] sm:$0xff]
    %v4399 = vld [vmem:[#allocation2 + $0xb0] sm:$0xff]
    %v4400 = vld [vmem:[#allocation2 + $0xb8] sm:$0xff]
    %v4401 = vld [vmem:[#allocation2 + $0xc0] sm:$0xff]
    %v4402 = vld [vmem:[#allocation2 + $0xc8] sm:$0xff]
    %v4403 = vld [vmem:[#allocation2 + $0xd0] sm:$0xff]
    %v4404 = vld [vmem:[#allocation2 + $0xd8] sm:$0xff]
    %v4405 = vld [vmem:[%s3 + $0xe] sm:$0x1]
    %v4406 = vperm.slane %v4405, 0
    %vm4407 = vcmask 523264
    %v4409 = vsel %vm4407, %v4395, 0
    %v4412 = vsel %vm4407, %v4396, 0
    %4414 = vmatpush.msra.mxu0 0.0
    %4415 = vmatpush.msra.mxu0 0.0
    %4416 = vmatpush.msra.mxu0 0.0
    %4417 = vmatpush.msra.mxu0 0.0
    %4418 = vmatpush.msra.mxu0 0.0
    %4419 = vmatpush.msra.mxu0 0.0
    %4420 = vmatpush.msra.mxu0 0.0
    %4421 = vmatpush.msra.mxu0 0.0
    %4422 = vmatpush.msra.mxu0 %v4404
    %4423 = vmatpush.msra.mxu0 %v4403
    %4424 = vmatpush.msra.mxu0 %v4402
    %4425 = vmatpush.msra.mxu0 %v4401
    %4426 = vmatpush.msra.mxu0 %v4400
    %4427 = vmatpush.msra.mxu0 %v4399
    %4428 = vmatpush.msra.mxu0 %v4398
    %4429 = vmatpush.msra.mxu0 %v4397
    %4430 = vmatmul.f32.gmra.mxu0 %v4409
    %v4431 = vpop.f32.mrf.mxu0
    %v4432 = vadd.f32 %v4406, %v4431
    %4433 = vmatmul.f32.gmra.mxu0 %v4412
    %v4434 = vpop.f32.mrf.mxu0
    %v4435 = vadd.f32 %v4406, %v4434
    %4436 = vdwg.mxu0
    %v4437 = vadd.f32 %v4358, %v4432
    %v4438 = vadd.f32 %v4359, %v4435
    %v4439 = vld [vmem:[%s3 + $0xf] sm:$0x1]
    %v4440 = vld [vmem:[%s3 + $0x10] sm:$0x1]
    %v4441 = vsel %vm3130, %v4437, 0.0
    %4442 = vadd.xlane.f32.xlu0 %v4441
    %v4443 = vpop.xlane.xlu0 %4442
    %v4444 = vsel %vm3130, %v4438, 0.0
    %4445 = vadd.xlane.f32.xlu0 %v4444
    %v4446 = vpop.xlane.xlu0 %4445
    %v4447 = vmul.f32 %v4443, %v4315
    %v4448 = vmul.f32 %v4446, %v4315
    %v4449 = vsub.f32 %v4437, %v4447
    %v4450 = vsub.f32 %v4438, %v4448
    %v4451 = vmul.f32 %v4449, %v4449
    %v4452 = vmul.f32 %v4450, %v4450
    %v4453 = vsel %vm3130, %v4451, 0.0
    %4454 = vadd.xlane.f32.xlu0 %v4453
    %v4455 = vpop.xlane.xlu0 %4454
    %v4456 = vsel %vm3130, %v4452, 0.0
    %4457 = vadd.xlane.f32.xlu0 %v4456
    %v4458 = vpop.xlane.xlu0 %4457
    %v4459 = vmul.f32 %v4455, %v4315
    %v4460 = vmul.f32 %v4458, %v4315
    %v4461 = vadd.f32 %v4459, 1e-05
    %v4462 = vadd.f32 %v4460, 1e-05
    %v4463 = vrsqrt.pop %v4461
    %v4464 = vmul.f32 %v4463, %v4461
    %v4465 = vmul.f32 %v4464, %v4463
    %v4466 = vmul.f32 0.5, %v4465
    %v4467 = vsub.f32 1.5, %v4466
    %v4468 = vmul.f32 %v4463, %v4467
    %vm4469 = vweird.f32 %v4461
    %vm4470 = vweird.f32 %v4463
    %vm4471 = vmor %vm4469, %vm4470
    %v4472 = vsel %vm4471, %v4463, %v4468
    %v4473 = vrsqrt.pop %v4462
    %v4474 = vmul.f32 %v4473, %v4462
    %v4475 = vmul.f32 %v4474, %v4473
    %v4476 = vmul.f32 0.5, %v4475
    %v4477 = vsub.f32 1.5, %v4476
    %v4478 = vmul.f32 %v4473, %v4477
    %vm4479 = vweird.f32 %v4462
    %vm4480 = vweird.f32 %v4473
    %vm4481 = vmor %vm4479, %vm4480
    %v4482 = vsel %vm4481, %v4473, %v4478
    %v4483 = vmul.f32 %v4449, %v4472
    %v4484 = vmul.f32 %v4450, %v4482
    %v4485 = vperm.slane %v4439, 0
    %v4486 = vmul.f32 %v4483, %v4485
    %v4487 = vmul.f32 %v4484, %v4485
    %v4488 = vperm.slane %v4440, 0
    %v4489 = vadd.f32 %v4486, %v4488
    %v4490 = vadd.f32 %v4487, %v4488
    %v4491 = vld [vmem:[#allocation2 + $0xe0] sm:$0xff]
    %v4492 = vld [vmem:[#allocation2 + $0xe8] sm:$0xff]
    %v4493 = vld [vmem:[#allocation2 + $0xf0] sm:$0xff]
    %v4494 = vld [vmem:[#allocation2 + $0xf8] sm:$0xff]
    %v4496 = vsel %vm3130, %v4489, 0
    %v4499 = vsel %vm3130, %v4490, 0
    %4501 = vmatpush.msra.mxu0 0.0
    %4502 = vmatpush.msra.mxu0 0.0
    %4503 = vmatpush.msra.mxu0 0.0
    %4504 = vmatpush.msra.mxu0 0.0
    %4505 = vmatpush.msra.mxu0 0.0
    %4506 = vmatpush.msra.mxu0 0.0
    %4507 = vmatpush.msra.mxu0 0.0
    %4508 = vmatpush.msra.mxu0 0.0
    %4509 = vmatpush.msra.mxu0 0.0
    %4510 = vmatpush.msra.mxu0 0.0
    %4511 = vmatpush.msra.mxu0 0.0
    %4512 = vmatpush.msra.mxu0 0.0
    %4513 = vmatpush.msra.mxu0 %v4494
    %4514 = vmatpush.msra.mxu0 %v4493
    %4515 = vmatpush.msra.mxu0 %v4492
    %4516 = vmatpush.msra.mxu0 %v4491
    %4517 = vmatmul.f32.gmra.mxu0 %v4496
    %v4518 = vpop.f32.mrf.mxu0
    %v4519 = vadd.f32 0.0, %v4518
    %4520 = vmatmul.f32.gmra.mxu0 %v4499
    %v4521 = vpop.f32.mrf.mxu0
    %v4522 = vadd.f32 0.0, %v4521
    %4523 = vdwg.mxu0
    %4526 = vrot.lane.b32.xlu0 %v4519, 96
    %v4527 = vpop.permute.xlu0 %4526
    %4528 = vrot.lane.b32.xlu0 %v4522, 96
    %v4529 = vpop.permute.xlu0 %4528
    %v4530 = vsel %vm174, %v4519, 0
    %v4532 = vsel %vm174, %v4522, 0
    %v4534 = vsel %vm174, %v4527, 0
    %v4536 = vsel %vm174, %v4529, 0
    %4538 = vmatpush.xpose.msra.mxu0 0.0
    %4539 = vmatpush.xpose.msra.mxu0 0.0
    %4540 = vmatpush.xpose.msra.mxu0 0.0
    %4541 = vmatpush.xpose.msra.mxu0 0.0
    %4542 = vmatpush.xpose.msra.mxu0 0.0
    %4543 = vmatpush.xpose.msra.mxu0 0.0
    %4544 = vmatpush.xpose.msra.mxu0 0.0
    %4545 = vmatpush.xpose.msra.mxu0 0.0
    %4546 = vmatpush.xpose.msra.mxu0 0.0
    %4547 = vmatpush.xpose.msra.mxu0 0.0
    %4548 = vmatpush.xpose.msra.mxu0 0.0
    %4549 = vmatpush.xpose.msra.mxu0 0.0
    %4550 = vmatpush.xpose.msra.mxu0 0.0
    %4551 = vmatpush.xpose.msra.mxu0 0.0
    %4552 = vmatpush.xpose.msra.mxu0 %v4536
    %4553 = vmatpush.xpose.msra.mxu0 %v4534
    %4554 = vmatmul.f32.gmra.mxu0 %v4530
    %v4555 = vpop.f32.mrf.mxu0
    %v4556 = vadd.f32 0.0, %v4555
    %4557 = vmatmul.f32.gmra.mxu0 %v4532
    %v4558 = vpop.f32.mrf.mxu0
    %v4559 = vadd.f32 0.0, %v4558
    %4560 = vdwg.mxu0
    %v4561 = vmul.f32 %v4556, 0.35355338
    %v4562 = vmul.f32 %v4559, 0.35355338
    %v4563 = vmax.f32 %v4561, -5.0
    %v4564 = vmax.f32 %v4562, -5.0
    %v4565 = vmin.f32 %v4563, 5.0
    %v4566 = vmin.f32 %v4564, 5.0
    %v4567 = vmul.f32 %v4565, 1.442695
    %v4568 = vpow.pop %v4567
    %v4569 = vmul.f32 %v4566, 1.442695
    %v4570 = vpow.pop %v4569
    %v4571 = vmul.f32 %v4568, %v3808
    %v4572 = vmul.f32 %v4570, %v3809
    %v4573 = vsel %vm3892, %v4571, 0.0
    %4574 = vadd.xlane.f32.xlu0 %v4573
    %v4575 = vpop.xlane.xlu0 %4574
    %v4576 = vsel %vm3892, %v4572, 0.0
    %4577 = vadd.xlane.f32.xlu0 %v4576
    %v4578 = vpop.xlane.xlu0 %4577
    %4579 = vrot.lane.b32.xlu0 %v4519, 64
    %v4580 = vpop.permute.xlu0 %4579
    %4581 = vrot.lane.b32.xlu0 %v4522, 64
    %v4582 = vpop.permute.xlu0 %4581
    %v4586 = vsel %vm3892, %v4571, 0
    %v4589 = vsel %vm3892, %v4572, 0
    %4591 = vmatpush.msra.mxu0 0.0
    %4592 = vmatpush.msra.mxu0 0.0
    %4593 = vmatpush.msra.mxu0 0.0
    %4594 = vmatpush.msra.mxu0 0.0
    %4595 = vmatpush.msra.mxu0 0.0
    %4596 = vmatpush.msra.mxu0 0.0
    %4597 = vmatpush.msra.mxu0 0.0
    %4598 = vmatpush.msra.mxu0 0.0
    %4599 = vmatpush.msra.mxu0 0.0
    %4600 = vmatpush.msra.mxu0 0.0
    %4601 = vmatpush.msra.mxu0 0.0
    %4602 = vmatpush.msra.mxu0 0.0
    %4603 = vmatpush.msra.mxu0 0.0
    %4604 = vmatpush.msra.mxu0 0.0
    %4605 = vmatpush.msra.mxu0 %v4582
    %4606 = vmatpush.msra.mxu0 %v4580
    %4607 = vmatmul.f32.gmra.mxu0 %v4586
    %v4608 = vpop.f32.mrf.mxu0
    %v4609 = vadd.f32 0.0, %v4608
    %4610 = vmatmul.f32.gmra.mxu0 %v4589
    %v4611 = vpop.f32.mrf.mxu0
    %v4612 = vadd.f32 0.0, %v4611
    %4613 = vdwg.mxu0
    %v4614 = vadd.f32 %v4575, 1e-06
    %v4615 = vadd.f32 %v4578, 1e-06
    %v4616 = vrcp.pop %v4614
    %v4617 = vrcp.pop %v4615
    %v4618 = vmul.f32 %v4609, %v4616
    %v4619 = vmul.f32 %v4612, %v4617
    %4620 = vrot.lane.b32.xlu0 %v4519, 120
    %v4621 = vpop.permute.xlu0 %4620
    %4622 = vrot.lane.b32.xlu0 %v4522, 120
    %v4623 = vpop.permute.xlu0 %4622
    %4624 = vrot.lane.b32.xlu0 %v4519, 88
    %v4625 = vpop.permute.xlu0 %4624
    %4626 = vrot.lane.b32.xlu0 %v4522, 88
    %v4627 = vpop.permute.xlu0 %4626
    %v4628 = vsel %vm174, %v4621, 0
    %v4630 = vsel %vm174, %v4623, 0
    %v4632 = vsel %vm174, %v4625, 0
    %v4634 = vsel %vm174, %v4627, 0
    %4636 = vmatpush.xpose.msra.mxu0 0.0
    %4637 = vmatpush.xpose.msra.mxu0 0.0
    %4638 = vmatpush.xpose.msra.mxu0 0.0
    %4639 = vmatpush.xpose.msra.mxu0 0.0
    %4640 = vmatpush.xpose.msra.mxu0 0.0
    %4641 = vmatpush.xpose.msra.mxu0 0.0
    %4642 = vmatpush.xpose.msra.mxu0 0.0
    %4643 = vmatpush.xpose.msra.mxu0 0.0
    %4644 = vmatpush.xpose.msra.mxu0 0.0
    %4645 = vmatpush.xpose.msra.mxu0 0.0
    %4646 = vmatpush.xpose.msra.mxu0 0.0
    %4647 = vmatpush.xpose.msra.mxu0 0.0
    %4648 = vmatpush.xpose.msra.mxu0 0.0
    %4649 = vmatpush.xpose.msra.mxu0 0.0
    %4650 = vmatpush.xpose.msra.mxu0 %v4634
    %4651 = vmatpush.xpose.msra.mxu0 %v4632
    %4652 = vmatmul.f32.gmra.mxu0 %v4628
    %v4653 = vpop.f32.mrf.mxu0
    %v4654 = vadd.f32 0.0, %v4653
    %4655 = vmatmul.f32.gmra.mxu0 %v4630
    %v4656 = vpop.f32.mrf.mxu0
    %v4657 = vadd.f32 0.0, %v4656
    %4658 = vdwg.mxu0
    %v4659 = vmul.f32 %v4654, 0.35355338
    %v4660 = vmul.f32 %v4657, 0.35355338
    %v4661 = vmax.f32 %v4659, -5.0
    %v4662 = vmax.f32 %v4660, -5.0
    %v4663 = vmin.f32 %v4661, 5.0
    %v4664 = vmin.f32 %v4662, 5.0
    %v4665 = vmul.f32 %v4663, 1.442695
    %v4666 = vpow.pop %v4665
    %v4667 = vmul.f32 %v4664, 1.442695
    %v4668 = vpow.pop %v4667
    %v4669 = vmul.f32 %v4666, %v3808
    %v4670 = vmul.f32 %v4668, %v3809
    %v4671 = vsel %vm3892, %v4669, 0.0
    %4672 = vadd.xlane.f32.xlu0 %v4671
    %v4673 = vpop.xlane.xlu0 %4672
    %v4674 = vsel %vm3892, %v4670, 0.0
    %4675 = vadd.xlane.f32.xlu0 %v4674
    %v4676 = vpop.xlane.xlu0 %4675
    %4677 = vrot.lane.b32.xlu0 %v4519, 56
    %v4678 = vpop.permute.xlu0 %4677
    %4679 = vrot.lane.b32.xlu0 %v4522, 56
    %v4680 = vpop.permute.xlu0 %4679
    %v4684 = vsel %vm3892, %v4669, 0
    %v4687 = vsel %vm3892, %v4670, 0
    %4689 = vmatpush.msra.mxu0 0.0
    %4690 = vmatpush.msra.mxu0 0.0
    %4691 = vmatpush.msra.mxu0 0.0
    %4692 = vmatpush.msra.mxu0 0.0
    %4693 = vmatpush.msra.mxu0 0.0
    %4694 = vmatpush.msra.mxu0 0.0
    %4695 = vmatpush.msra.mxu0 0.0
    %4696 = vmatpush.msra.mxu0 0.0
    %4697 = vmatpush.msra.mxu0 0.0
    %4698 = vmatpush.msra.mxu0 0.0
    %4699 = vmatpush.msra.mxu0 0.0
    %4700 = vmatpush.msra.mxu0 0.0
    %4701 = vmatpush.msra.mxu0 0.0
    %4702 = vmatpush.msra.mxu0 0.0
    %4703 = vmatpush.msra.mxu0 %v4680
    %4704 = vmatpush.msra.mxu0 %v4678
    %4705 = vmatmul.f32.gmra.mxu0 %v4684
    %v4706 = vpop.f32.mrf.mxu0
    %v4707 = vadd.f32 0.0, %v4706
    %4708 = vmatmul.f32.gmra.mxu0 %v4687
    %v4709 = vpop.f32.mrf.mxu0
    %v4710 = vadd.f32 0.0, %v4709
    %4711 = vdwg.mxu0
    %v4712 = vadd.f32 %v4673, 1e-06
    %v4713 = vadd.f32 %v4676, 1e-06
    %v4714 = vrcp.pop %v4712
    %v4715 = vrcp.pop %v4713
    %v4716 = vmul.f32 %v4707, %v4714
    %v4717 = vmul.f32 %v4710, %v4715
    %4718 = vrot.lane.b32.xlu0 %v4519, 112
    %v4719 = vpop.permute.xlu0 %4718
    %4720 = vrot.lane.b32.xlu0 %v4522, 112
    %v4721 = vpop.permute.xlu0 %4720
    %4722 = vrot.lane.b32.xlu0 %v4519, 80
    %v4723 = vpop.permute.xlu0 %4722
    %4724 = vrot.lane.b32.xlu0 %v4522, 80
    %v4725 = vpop.permute.xlu0 %4724
    %v4726 = vsel %vm174, %v4719, 0
    %v4728 = vsel %vm174, %v4721, 0
    %v4730 = vsel %vm174, %v4723, 0
    %v4732 = vsel %vm174, %v4725, 0
    %4734 = vmatpush.xpose.msra.mxu0 0.0
    %4735 = vmatpush.xpose.msra.mxu0 0.0
    %4736 = vmatpush.xpose.msra.mxu0 0.0
    %4737 = vmatpush.xpose.msra.mxu0 0.0
    %4738 = vmatpush.xpose.msra.mxu0 0.0
    %4739 = vmatpush.xpose.msra.mxu0 0.0
    %4740 = vmatpush.xpose.msra.mxu0 0.0
    %4741 = vmatpush.xpose.msra.mxu0 0.0
    %4742 = vmatpush.xpose.msra.mxu0 0.0
    %4743 = vmatpush.xpose.msra.mxu0 0.0
    %4744 = vmatpush.xpose.msra.mxu0 0.0
    %4745 = vmatpush.xpose.msra.mxu0 0.0
    %4746 = vmatpush.xpose.msra.mxu0 0.0
    %4747 = vmatpush.xpose.msra.mxu0 0.0
    %4748 = vmatpush.xpose.msra.mxu0 %v4732
    %4749 = vmatpush.xpose.msra.mxu0 %v4730
    %4750 = vmatmul.f32.gmra.mxu0 %v4726
    %v4751 = vpop.f32.mrf.mxu0
    %v4752 = vadd.f32 0.0, %v4751
    %4753 = vmatmul.f32.gmra.mxu0 %v4728
    %v4754 = vpop.f32.mrf.mxu0
    %v4755 = vadd.f32 0.0, %v4754
    %4756 = vdwg.mxu0
    %v4757 = vmul.f32 %v4752, 0.35355338
    %v4758 = vmul.f32 %v4755, 0.35355338
    %v4759 = vmax.f32 %v4757, -5.0
    %v4760 = vmax.f32 %v4758, -5.0
    %v4761 = vmin.f32 %v4759, 5.0
    %v4762 = vmin.f32 %v4760, 5.0
    %v4763 = vmul.f32 %v4761, 1.442695
    %v4764 = vpow.pop %v4763
    %v4765 = vmul.f32 %v4762, 1.442695
    %v4766 = vpow.pop %v4765
    %v4767 = vmul.f32 %v4764, %v3808
    %v4768 = vmul.f32 %v4766, %v3809
    %v4769 = vsel %vm3892, %v4767, 0.0
    %4770 = vadd.xlane.f32.xlu0 %v4769
    %v4771 = vpop.xlane.xlu0 %4770
    %v4772 = vsel %vm3892, %v4768, 0.0
    %4773 = vadd.xlane.f32.xlu0 %v4772
    %v4774 = vpop.xlane.xlu0 %4773
    %4775 = vrot.lane.b32.xlu0 %v4519, 48
    %v4776 = vpop.permute.xlu0 %4775
    %4777 = vrot.lane.b32.xlu0 %v4522, 48
    %v4778 = vpop.permute.xlu0 %4777
    %v4782 = vsel %vm3892, %v4767, 0
    %v4785 = vsel %vm3892, %v4768, 0
    %4787 = vmatpush.msra.mxu0 0.0
    %4788 = vmatpush.msra.mxu0 0.0
    %4789 = vmatpush.msra.mxu0 0.0
    %4790 = vmatpush.msra.mxu0 0.0
    %4791 = vmatpush.msra.mxu0 0.0
    %4792 = vmatpush.msra.mxu0 0.0
    %4793 = vmatpush.msra.mxu0 0.0
    %4794 = vmatpush.msra.mxu0 0.0
    %4795 = vmatpush.msra.mxu0 0.0
    %4796 = vmatpush.msra.mxu0 0.0
    %4797 = vmatpush.msra.mxu0 0.0
    %4798 = vmatpush.msra.mxu0 0.0
    %4799 = vmatpush.msra.mxu0 0.0
    %4800 = vmatpush.msra.mxu0 0.0
    %4801 = vmatpush.msra.mxu0 %v4778
    %4802 = vmatpush.msra.mxu0 %v4776
    %4803 = vmatmul.f32.gmra.mxu0 %v4782
    %v4804 = vpop.f32.mrf.mxu0
    %v4805 = vadd.f32 0.0, %v4804
    %4806 = vmatmul.f32.gmra.mxu0 %v4785
    %v4807 = vpop.f32.mrf.mxu0
    %v4808 = vadd.f32 0.0, %v4807
    %4809 = vdwg.mxu0
    %v4810 = vadd.f32 %v4771, 1e-06
    %v4811 = vadd.f32 %v4774, 1e-06
    %v4812 = vrcp.pop %v4810
    %v4813 = vrcp.pop %v4811
    %v4814 = vmul.f32 %v4805, %v4812
    %v4815 = vmul.f32 %v4808, %v4813
    %4816 = vrot.lane.b32.xlu0 %v4519, 104
    %v4817 = vpop.permute.xlu0 %4816
    %4818 = vrot.lane.b32.xlu0 %v4522, 104
    %v4819 = vpop.permute.xlu0 %4818
    %4820 = vrot.lane.b32.xlu0 %v4519, 72
    %v4821 = vpop.permute.xlu0 %4820
    %4822 = vrot.lane.b32.xlu0 %v4522, 72
    %v4823 = vpop.permute.xlu0 %4822
    %v4824 = vsel %vm174, %v4817, 0
    %v4826 = vsel %vm174, %v4819, 0
    %v4828 = vsel %vm174, %v4821, 0
    %v4830 = vsel %vm174, %v4823, 0
    %4832 = vmatpush.xpose.msra.mxu0 0.0
    %4833 = vmatpush.xpose.msra.mxu0 0.0
    %4834 = vmatpush.xpose.msra.mxu0 0.0
    %4835 = vmatpush.xpose.msra.mxu0 0.0
    %4836 = vmatpush.xpose.msra.mxu0 0.0
    %4837 = vmatpush.xpose.msra.mxu0 0.0
    %4838 = vmatpush.xpose.msra.mxu0 0.0
    %4839 = vmatpush.xpose.msra.mxu0 0.0
    %4840 = vmatpush.xpose.msra.mxu0 0.0
    %4841 = vmatpush.xpose.msra.mxu0 0.0
    %4842 = vmatpush.xpose.msra.mxu0 0.0
    %4843 = vmatpush.xpose.msra.mxu0 0.0
    %4844 = vmatpush.xpose.msra.mxu0 0.0
    %4845 = vmatpush.xpose.msra.mxu0 0.0
    %4846 = vmatpush.xpose.msra.mxu0 %v4830
    %4847 = vmatpush.xpose.msra.mxu0 %v4828
    %4848 = vmatmul.f32.gmra.mxu0 %v4824
    %v4849 = vpop.f32.mrf.mxu0
    %v4850 = vadd.f32 0.0, %v4849
    %4851 = vmatmul.f32.gmra.mxu0 %v4826
    %v4852 = vpop.f32.mrf.mxu0
    %v4853 = vadd.f32 0.0, %v4852
    %4854 = vdwg.mxu0
    %v4855 = vmul.f32 %v4850, 0.35355338
    %v4856 = vmul.f32 %v4853, 0.35355338
    %v4857 = vmax.f32 %v4855, -5.0
    %v4858 = vmax.f32 %v4856, -5.0
    %v4859 = vmin.f32 %v4857, 5.0
    %v4860 = vmin.f32 %v4858, 5.0
    %v4861 = vmul.f32 %v4859, 1.442695
    %v4862 = vpow.pop %v4861
    %v4863 = vmul.f32 %v4860, 1.442695
    %v4864 = vpow.pop %v4863
    %v4865 = vmul.f32 %v4862, %v3808
    %v4866 = vmul.f32 %v4864, %v3809
    %v4867 = vsel %vm3892, %v4865, 0.0
    %4868 = vadd.xlane.f32.xlu0 %v4867
    %v4869 = vpop.xlane.xlu0 %4868
    %v4870 = vsel %vm3892, %v4866, 0.0
    %4871 = vadd.xlane.f32.xlu0 %v4870
    %v4872 = vpop.xlane.xlu0 %4871
    %4873 = vrot.lane.b32.xlu0 %v4519, 40
    %v4874 = vpop.permute.xlu0 %4873
    %4875 = vrot.lane.b32.xlu0 %v4522, 40
    %v4876 = vpop.permute.xlu0 %4875
    %v4880 = vsel %vm3892, %v4865, 0
    %v4883 = vsel %vm3892, %v4866, 0
    %4885 = vmatpush.msra.mxu0 0.0
    %4886 = vmatpush.msra.mxu0 0.0
    %4887 = vmatpush.msra.mxu0 0.0
    %4888 = vmatpush.msra.mxu0 0.0
    %4889 = vmatpush.msra.mxu0 0.0
    %4890 = vmatpush.msra.mxu0 0.0
    %4891 = vmatpush.msra.mxu0 0.0
    %4892 = vmatpush.msra.mxu0 0.0
    %4893 = vmatpush.msra.mxu0 0.0
    %4894 = vmatpush.msra.mxu0 0.0
    %4895 = vmatpush.msra.mxu0 0.0
    %4896 = vmatpush.msra.mxu0 0.0
    %4897 = vmatpush.msra.mxu0 0.0
    %4898 = vmatpush.msra.mxu0 0.0
    %4899 = vmatpush.msra.mxu0 %v4876
    %4900 = vmatpush.msra.mxu0 %v4874
    %4901 = vmatmul.f32.gmra.mxu0 %v4880
    %v4902 = vpop.f32.mrf.mxu0
    %v4903 = vadd.f32 0.0, %v4902
    %4904 = vmatmul.f32.gmra.mxu0 %v4883
    %v4905 = vpop.f32.mrf.mxu0
    %v4906 = vadd.f32 0.0, %v4905
    %4907 = vdwg.mxu0
    %v4908 = vadd.f32 %v4869, 1e-06
    %v4909 = vadd.f32 %v4872, 1e-06
    %v4910 = vrcp.pop %v4908
    %v4911 = vrcp.pop %v4909
    %v4912 = vmul.f32 %v4903, %v4910
    %v4913 = vmul.f32 %v4906, %v4911
    %4916 = vrot.lane.b32.xlu0 %v4716, 8
    %v4917 = vpop.permute.xlu0 %4916
    %4918 = vrot.lane.b32.xlu0 %v4717, 8
    %v4919 = vpop.permute.xlu0 %4918
    %4924 = vrot.lane.b32.xlu0 %v4814, 16
    %v4925 = vpop.permute.xlu0 %4924
    %4926 = vrot.lane.b32.xlu0 %v4815, 16
    %v4927 = vpop.permute.xlu0 %4926
    %4932 = vrot.lane.b32.xlu0 %v4912, 24
    %v4933 = vpop.permute.xlu0 %4932
    %4934 = vrot.lane.b32.xlu0 %v4913, 24
    %v4935 = vpop.permute.xlu0 %4934
    %v4938 = vsel %vm174, %v4618, %v4917
    %v4939 = vsel %vm174, %v4619, %v4919
    %v4940 = vsel %vm3892, %v4938, %v4925
    %v4941 = vsel %vm3892, %v4939, %v4927
    %v4942 = vsel %vm3805, %v4940, %v4933
    %v4943 = vsel %vm3805, %v4941, %v4935
    %v4944 = vld [vmem:[#allocation2 + $0x100] sm:$0xff]
    %v4945 = vld [vmem:[#allocation2 + $0x108] sm:$0xff]
    %v4946 = vld [vmem:[#allocation2 + $0x110] sm:$0xff]
    %v4947 = vld [vmem:[#allocation2 + $0x118] sm:$0xff]
    %v4948 = vld [vmem:[%s3 + $0x11] sm:$0x1]
    %v4949 = vperm.slane %v4948, 0
    %v4951 = vsel %vm3130, %v4942, 0
    %v4954 = vsel %vm3130, %v4943, 0
    %4956 = vmatpush.msra.mxu0 0.0
    %4957 = vmatpush.msra.mxu0 0.0
    %4958 = vmatpush.msra.mxu0 0.0
    %4959 = vmatpush.msra.mxu0 0.0
    %4960 = vmatpush.msra.mxu0 0.0
    %4961 = vmatpush.msra.mxu0 0.0
    %4962 = vmatpush.msra.mxu0 0.0
    %4963 = vmatpush.msra.mxu0 0.0
    %4964 = vmatpush.msra.mxu0 0.0
    %4965 = vmatpush.msra.mxu0 0.0
    %4966 = vmatpush.msra.mxu0 0.0
    %4967 = vmatpush.msra.mxu0 0.0
    %4968 = vmatpush.msra.mxu0 %v4947
    %4969 = vmatpush.msra.mxu0 %v4946
    %4970 = vmatpush.msra.mxu0 %v4945
    %4971 = vmatpush.msra.mxu0 %v4944
    %4972 = vmatmul.f32.gmra.mxu0 %v4951
    %v4973 = vpop.f32.mrf.mxu0
    %v4974 = vadd.f32 %v4949, %v4973
    %4975 = vmatmul.f32.gmra.mxu0 %v4954
    %v4976 = vpop.f32.mrf.mxu0
    %v4977 = vadd.f32 %v4949, %v4976
    %4978 = vdwg.mxu0
    %v4979 = vadd.f32 %v4489, %v4974
    %v4980 = vadd.f32 %v4490, %v4977
    %v4981 = vld [vmem:[%s3 + $0x12] sm:$0x1]
    %v4982 = vld [vmem:[%s3 + $0x13] sm:$0x1]
    %v4983 = vsel %vm3130, %v4979, 0.0
    %4984 = vadd.xlane.f32.xlu0 %v4983
    %v4985 = vpop.xlane.xlu0 %4984
    %v4986 = vsel %vm3130, %v4980, 0.0
    %4987 = vadd.xlane.f32.xlu0 %v4986
    %v4988 = vpop.xlane.xlu0 %4987
    %v4989 = vmul.f32 %v4985, %v4315
    %v4990 = vmul.f32 %v4988, %v4315
    %v4991 = vsub.f32 %v4979, %v4989
    %v4992 = vsub.f32 %v4980, %v4990
    %v4993 = vmul.f32 %v4991, %v4991
    %v4994 = vmul.f32 %v4992, %v4992
    %v4995 = vsel %vm3130, %v4993, 0.0
    %4996 = vadd.xlane.f32.xlu0 %v4995
    %v4997 = vpop.xlane.xlu0 %4996
    %v4998 = vsel %vm3130, %v4994, 0.0
    %4999 = vadd.xlane.f32.xlu0 %v4998
    %v5000 = vpop.xlane.xlu0 %4999
    %v5001 = vmul.f32 %v4997, %v4315
    %v5002 = vmul.f32 %v5000, %v4315
    %v5003 = vadd.f32 %v5001, 1e-05
    %v5004 = vadd.f32 %v5002, 1e-05
    %v5005 = vrsqrt.pop %v5003
    %v5006 = vmul.f32 %v5005, %v5003
    %v5007 = vmul.f32 %v5006, %v5005
    %v5008 = vmul.f32 0.5, %v5007
    %v5009 = vsub.f32 1.5, %v5008
    %v5010 = vmul.f32 %v5005, %v5009
    %vm5011 = vweird.f32 %v5003
    %vm5012 = vweird.f32 %v5005
    %vm5013 = vmor %vm5011, %vm5012
    %v5014 = vsel %vm5013, %v5005, %v5010
    %v5015 = vrsqrt.pop %v5004
    %v5016 = vmul.f32 %v5015, %v5004
    %v5017 = vmul.f32 %v5016, %v5015
    %v5018 = vmul.f32 0.5, %v5017
    %v5019 = vsub.f32 1.5, %v5018
    %v5020 = vmul.f32 %v5015, %v5019
    %vm5021 = vweird.f32 %v5004
    %vm5022 = vweird.f32 %v5015
    %vm5023 = vmor %vm5021, %vm5022
    %v5024 = vsel %vm5023, %v5015, %v5020
    %v5025 = vmul.f32 %v4991, %v5014
    %v5026 = vmul.f32 %v4992, %v5024
    %v5027 = vperm.slane %v4981, 0
    %v5028 = vmul.f32 %v5025, %v5027
    %v5029 = vmul.f32 %v5026, %v5027
    %v5030 = vperm.slane %v4982, 0
    %v5031 = vadd.f32 %v5028, %v5030
    %v5032 = vadd.f32 %v5029, %v5030
    %v5033 = vld [vmem:[#allocation2 + $0x120] sm:$0xff]
    %v5034 = vld [vmem:[#allocation2 + $0x128] sm:$0xff]
    %v5035 = vld [vmem:[#allocation2 + $0x130] sm:$0xff]
    %v5036 = vld [vmem:[#allocation2 + $0x138] sm:$0xff]
    %v5037 = vld [vmem:[%s3 + $0x14] sm:$0x1]
    %v5038 = vperm.slane %v5037, 0
    %v5040 = vsel %vm3130, %v5031, 0
    %v5043 = vsel %vm3130, %v5032, 0
    %5045 = vmatpush.msra.mxu0 0.0
    %5046 = vmatpush.msra.mxu0 0.0
    %5047 = vmatpush.msra.mxu0 0.0
    %5048 = vmatpush.msra.mxu0 0.0
    %5049 = vmatpush.msra.mxu0 0.0
    %5050 = vmatpush.msra.mxu0 0.0
    %5051 = vmatpush.msra.mxu0 0.0
    %5052 = vmatpush.msra.mxu0 0.0
    %5053 = vmatpush.msra.mxu0 0.0
    %5054 = vmatpush.msra.mxu0 0.0
    %5055 = vmatpush.msra.mxu0 0.0
    %5056 = vmatpush.msra.mxu0 0.0
    %5057 = vmatpush.msra.mxu0 %v5036
    %5058 = vmatpush.msra.mxu0 %v5035
    %5059 = vmatpush.msra.mxu0 %v5034
    %5060 = vmatpush.msra.mxu0 %v5033
    %5061 = vmatmul.f32.gmra.mxu0 %v5040
    %v5062 = vpop.f32.mrf.mxu0
    %v5063 = vadd.f32 %v5038, %v5062
    %5064 = vmatmul.f32.gmra.mxu0 %v5043
    %v5065 = vpop.f32.mrf.mxu0
    %v5066 = vadd.f32 %v5038, %v5065
    %5067 = vdwg.mxu0
    %v5068 = vmax.f32 %v5063, 0.0
    %v5069 = vmax.f32 %v5066, 0.0
    %v5070 = vld [vmem:[#allocation2 + $0x140] sm:$0xff]
    %v5071 = vld [vmem:[#allocation2 + $0x148] sm:$0xff]
    %v5072 = vld [vmem:[#allocation2 + $0x150] sm:$0xff]
    %v5073 = vld [vmem:[#allocation2 + $0x158] sm:$0xff]
    %v5074 = vld [vmem:[#allocation2 + $0x160] sm:$0xff]
    %v5075 = vld [vmem:[#allocation2 + $0x168] sm:$0xff]
    %v5076 = vld [vmem:[#allocation2 + $0x170] sm:$0xff]
    %v5077 = vld [vmem:[#allocation2 + $0x178] sm:$0xff]
    %v5078 = vld [vmem:[%s3 + $0x15] sm:$0x1]
    %v5079 = vperm.slane %v5078, 0
    %v5081 = vsel %vm4407, %v5068, 0
    %v5084 = vsel %vm4407, %v5069, 0
    %5086 = vmatpush.msra.mxu0 0.0
    %5087 = vmatpush.msra.mxu0 0.0
    %5088 = vmatpush.msra.mxu0 0.0
    %5089 = vmatpush.msra.mxu0 0.0
    %5090 = vmatpush.msra.mxu0 0.0
    %5091 = vmatpush.msra.mxu0 0.0
    %5092 = vmatpush.msra.mxu0 0.0
    %5093 = vmatpush.msra.mxu0 0.0
    %5094 = vmatpush.msra.mxu0 %v5077
    %5095 = vmatpush.msra.mxu0 %v5076
    %5096 = vmatpush.msra.mxu0 %v5075
    %5097 = vmatpush.msra.mxu0 %v5074
    %5098 = vmatpush.msra.mxu0 %v5073
    %5099 = vmatpush.msra.mxu0 %v5072
    %5100 = vmatpush.msra.mxu0 %v5071
    %5101 = vmatpush.msra.mxu0 %v5070
    %5102 = vmatmul.f32.gmra.mxu0 %v5081
    %v5103 = vpop.f32.mrf.mxu0
    %v5104 = vadd.f32 %v5079, %v5103
    %5105 = vmatmul.f32.gmra.mxu0 %v5084
    %v5106 = vpop.f32.mrf.mxu0
    %v5107 = vadd.f32 %v5079, %v5106
    %5108 = vdwg.mxu0
    %v5109 = vadd.f32 %v5031, %v5104
    %v5110 = vadd.f32 %v5032, %v5107
    %v5111 = vld [vmem:[%s3 + $0x16] sm:$0x1]
    %v5112 = vld [vmem:[%s3 + $0x17] sm:$0x1]
    %v5113 = vsel %vm3130, %v5109, 0.0
    %5114 = vadd.xlane.f32.xlu0 %v5113
    %v5115 = vpop.xlane.xlu0 %5114
    %v5116 = vsel %vm3130, %v5110, 0.0
    %5117 = vadd.xlane.f32.xlu0 %v5116
    %v5118 = vpop.xlane.xlu0 %5117
    %v5119 = vmul.f32 %v5115, %v4315
    %v5120 = vmul.f32 %v5118, %v4315
    %v5121 = vsub.f32 %v5109, %v5119
    %v5122 = vsub.f32 %v5110, %v5120
    %v5123 = vmul.f32 %v5121, %v5121
    %v5124 = vmul.f32 %v5122, %v5122
    %v5125 = vsel %vm3130, %v5123, 0.0
    %5126 = vadd.xlane.f32.xlu0 %v5125
    %v5127 = vpop.xlane.xlu0 %5126
    %v5128 = vsel %vm3130, %v5124, 0.0
    %5129 = vadd.xlane.f32.xlu0 %v5128
    %v5130 = vpop.xlane.xlu0 %5129
    %v5131 = vmul.f32 %v5127, %v4315
    %v5132 = vmul.f32 %v5130, %v4315
    %v5133 = vadd.f32 %v5131, 1e-05
    %v5134 = vadd.f32 %v5132, 1e-05
    %v5135 = vrsqrt.pop %v5133
    %v5136 = vmul.f32 %v5135, %v5133
    %v5137 = vmul.f32 %v5136, %v5135
    %v5138 = vmul.f32 0.5, %v5137
    %v5139 = vsub.f32 1.5, %v5138
    %v5140 = vmul.f32 %v5135, %v5139
    %vm5141 = vweird.f32 %v5133
    %vm5142 = vweird.f32 %v5135
    %vm5143 = vmor %vm5141, %vm5142
    %v5144 = vsel %vm5143, %v5135, %v5140
    %v5145 = vrsqrt.pop %v5134
    %v5146 = vmul.f32 %v5145, %v5134
    %v5147 = vmul.f32 %v5146, %v5145
    %v5148 = vmul.f32 0.5, %v5147
    %v5149 = vsub.f32 1.5, %v5148
    %v5150 = vmul.f32 %v5145, %v5149
    %vm5151 = vweird.f32 %v5134
    %vm5152 = vweird.f32 %v5145
    %vm5153 = vmor %vm5151, %vm5152
    %v5154 = vsel %vm5153, %v5145, %v5150
    %v5155 = vmul.f32 %v5121, %v5144
    %v5156 = vmul.f32 %v5122, %v5154
    %v5157 = vperm.slane %v5111, 0
    %v5158 = vmul.f32 %v5155, %v5157
    %v5159 = vmul.f32 %v5156, %v5157
    %v5160 = vperm.slane %v5112, 0
    %v5161 = vadd.f32 %v5158, %v5160
    %v5162 = vadd.f32 %v5159, %v5160
    %v5163 = vsel %vm3130, %v5161, 0.0
    %v5164 = vsel %vm3130, %v5162, 0.0
    %v5165 = vadd.f32 %v5163, %v5164
    %v5166 = vrot.slane %v5165, 4
    %v5167 = vadd.f32 %v5165, %v5166
    %v5168 = vrot.slane %v5167, 2
    %v5169 = vadd.f32 %v5167, %v5168
    %v5170 = vrot.slane %v5169, 1
    %v5171 = vadd.f32 %v5169, %v5170
    %v5172 = vrcp.pop 16.0
    %v5173 = vmul.f32 16.0, %v5172
    %v5174 = vsub.f32 1.0, %v5173
    %v5175 = vmul.f32 %v5172, %v5174
    %v5176 = vadd.f32 %v5172, %v5175
    %vm5177 = vweird.f32 %v5172
    %v5178 = vsel %vm5177, %v5172, %v5176
    %v5179 = vmul.f32 %v5171, %v5178
    %v5180 = vld [vmem:[#allocation2 + $0x180] sm:$0xff]
    %v5181 = vld [vmem:[#allocation2 + $0x188] sm:$0xff]
    %v5182 = vld [vmem:[#allocation2 + $0x190] sm:$0xff]
    %v5183 = vld [vmem:[#allocation2 + $0x198] sm:$0xff]
    %v5184 = vld [vmem:[%s3 + $0x18] sm:$0x1]
    %v5186 = vsel %vm3130, %v5179, 0
    %5188 = vmatpush.msra.mxu0 0.0
    %5189 = vmatpush.msra.mxu0 0.0
    %5190 = vmatpush.msra.mxu0 0.0
    %5191 = vmatpush.msra.mxu0 0.0
    %5192 = vmatpush.msra.mxu0 0.0
    %5193 = vmatpush.msra.mxu0 0.0
    %5194 = vmatpush.msra.mxu0 0.0
    %5195 = vmatpush.msra.mxu0 0.0
    %5196 = vmatpush.msra.mxu0 0.0
    %5197 = vmatpush.msra.mxu0 0.0
    %5198 = vmatpush.msra.mxu0 0.0
    %5199 = vmatpush.msra.mxu0 0.0
    %5200 = vmatpush.msra.mxu0 %v5183
    %5201 = vmatpush.msra.mxu0 %v5182
    %5202 = vmatpush.msra.mxu0 %v5181
    %5203 = vmatpush.msra.mxu0 %v5180
    %5204 = vmatmul.f32.gmra.mxu0 %v5186
    %v5205 = vpop.f32.mrf.mxu0
    %v5206 = vadd.f32 %v5184, %v5205
    %5207 = vdwg.mxu0
    %v5208 = vmax.f32 %v5206, 0.0
    %v5209 = vld [vmem:[#allocation2 + $0x1a0] sm:$0xff]
    %v5210 = vld [vmem:[#allocation2 + $0x1a8] sm:$0xff]
    %v5211 = vld [vmem:[%s3 + $0x19] sm:$0x1]
    %v5213 = vsel %vm3892, %v5208, 0
    %5215 = vmatpush.msra.mxu0 0.0
    %5216 = vmatpush.msra.mxu0 0.0
    %5217 = vmatpush.msra.mxu0 0.0
    %5218 = vmatpush.msra.mxu0 0.0
    %5219 = vmatpush.msra.mxu0 0.0
    %5220 = vmatpush.msra.mxu0 0.0
    %5221 = vmatpush.msra.mxu0 0.0
    %5222 = vmatpush.msra.mxu0 0.0
    %5223 = vmatpush.msra.mxu0 0.0
    %5224 = vmatpush.msra.mxu0 0.0
    %5225 = vmatpush.msra.mxu0 0.0
    %5226 = vmatpush.msra.mxu0 0.0
    %5227 = vmatpush.msra.mxu0 0.0
    %5228 = vmatpush.msra.mxu0 0.0
    %5229 = vmatpush.msra.mxu0 %v5210
    %5230 = vmatpush.msra.mxu0 %v5209
    %5231 = vmatmul.f32.gmra.mxu0 %v5213
    %v5232 = vpop.f32.mrf.mxu0
    %v5233 = vadd.f32 %v5211, %v5232
    %5234 = vdwg.mxu0
    %v5235 = vmax.f32 %v5233, 0.0
    %v5236 = vld [vmem:[#allocation2 + $0x1b0] sm:$0xff]
    %v5237 = vld [vmem:[%s3 + $0x1a] sm:$0x1]
    %v5239 = vsel %vm174, %v5235, 0
    %5241 = vmatpush.msra.mxu0 0.0
    %5242 = vmatpush.msra.mxu0 0.0
    %5243 = vmatpush.msra.mxu0 0.0
    %5244 = vmatpush.msra.mxu0 0.0
    %5245 = vmatpush.msra.mxu0 0.0
    %5246 = vmatpush.msra.mxu0 0.0
    %5247 = vmatpush.msra.mxu0 0.0
    %5248 = vmatpush.msra.mxu0 0.0
    %5249 = vmatpush.msra.mxu0 0.0
    %5250 = vmatpush.msra.mxu0 0.0
    %5251 = vmatpush.msra.mxu0 0.0
    %5252 = vmatpush.msra.mxu0 0.0
    %5253 = vmatpush.msra.mxu0 0.0
    %5254 = vmatpush.msra.mxu0 0.0
    %5255 = vmatpush.msra.mxu0 0.0
    %5256 = vmatpush.msra.mxu0 %v5236
    %5257 = vmatmul.f32.gmra.mxu0 %v5239
    %v5258 = vpop.f32.mrf.mxu0
    %v5259 = vadd.f32 %v5237, %v5258
    %5260 = vdwg.mxu0
    %vm5261 = vcmask 73728
    %5262 = vst.msk [vmem:[#allocation5] sm:$0x1] %vm5261, %v5259
    // Predicated region
    $region22: #{sa_graph_transformer_forward.1} parent=1 // pred_check
      _
    $region23: #{sa_graph_transformer_forward.1} parent=1 // pred_check_branch
      %5264 = sbr.rel (0) target = $region25
    $region24: #{sa_graph_transformer_forward.1} parent=1 // pred_region
      %5266 = vsyncadd [#allocation4], 0
      %s5268 = sshll.u32 [#allocation5], 4
      %s5269 = int_to_ptr.vmem [resolvable:$true] %s5268
      %s5270 = sshll.u32 %s4, 4
      %s5271 = int_to_ptr.hbm [resolvable:$true] %s5270
      %5273 = dma.vmem_to_hbm [thread:$0]  %s5269, 16, %s5271, [#allocation4]
    $region25: #{sa_graph_transformer_forward.1} parent=1 // pred_fallthru
      _
    // Predicated region
    $region26: #{sa_graph_transformer_forward.1} parent=1 // pred_check
      _
    $region27: #{sa_graph_transformer_forward.1} parent=1 // pred_check_branch
      %5275 = sbr.rel (0) target = $region29
    $region28: #{sa_graph_transformer_forward.1} parent=1 // pred_region
      %5277 = dma.done [#allocation4], 16
    $region29: #{sa_graph_transformer_forward.1} parent=1 // pred_fallthru
      _
    %5278 = vsyncpa [#allocation3], 1
    %5279 = vsyncpa [#allocation4], 1

</llo_original>
